<compile_context>
chip_gen: v7x
topology: tpu7x:2x2x1
jax: 0.10.0
libtpu: 0.0.40
codegen_flags: <defaults>
</compile_context>

<pallas_src>
import numpy as np
import jax
import jax.numpy as jnp
from jax import lax
from jax.experimental import pallas as pl
from jax.experimental.pallas import tpu as pltpu

POOL_K = 5
POOL_S = 3
CONV_OUT = 128
FC1_OUT = 1024
W1_CHUNKS = 4            # fc1 weight streamed in 4 chunks of 4 pixels (1 MiB bf16 each)


def _injection_aux_kernel(x_ref, ptb_ref, cw_ref, cb_ref, b1_ref, b2_ref,
                          w1_hbm, w2_hbm, out_ref, w1_vmem, w2_vmem, sem):
    B = out_ref.shape[0]
    n_pix = w1_vmem.shape[0]                       # 16 pooled pixels (4 x 4)
    ppc = n_pix // W1_CHUNKS                       # pixels per fc1-weight chunk

    # ---- kick off the big weight DMAs first so they overlap pool/conv compute ----
    w1_copies = []
    for ci in range(W1_CHUNKS):
        cp = pltpu.make_async_copy(w1_hbm.at[pl.ds(ci * ppc, ppc)],
                                   w1_vmem.at[pl.ds(ci * ppc, ppc)],
                                   sem.at[ci])
        cp.start()
        w1_copies.append(cp)
    w2_copy = pltpu.make_async_copy(w2_hbm, w2_vmem, sem.at[W1_CHUNKS])
    w2_copy.start()

    # ---- AvgPool2d(5, stride=3): one matmul against the pixel-major block-diagonal
    #      pooling matrix (row = p*B + b).  Pool-first keeps the intermediate at
    #      (n_pix*B, C) instead of (B*H*W, 128). ----
    pooled = jnp.dot(ptb_ref[...], x_ref[...], preferred_element_type=jnp.float32)

    # ---- 1x1 conv + bias + ReLU ----
    feat = jnp.dot(pooled, cw_ref[...], preferred_element_type=jnp.float32)
    feat = jnp.maximum(feat + cb_ref[...], 0.0)     # (n_pix*B, 128), rows p*B + b
    feat = feat.astype(w1_vmem.dtype)               # bf16 operand for the MXU

    # ---- fc1 as n_pix accumulated (B,128)@(128,1024) dots: no sublane->lane
    #      flatten, and each w1 chunk is consumed right after its DMA completes. ----
    h1 = jnp.zeros((B, b1_ref.shape[1]), jnp.float32)
    for ci in range(W1_CHUNKS):
        w1_copies[ci].wait()
        for q in range(ppc):
            p = ci * ppc + q
            h1 = h1 + jnp.dot(feat[p * B:(p + 1) * B, :], w1_vmem[p],
                              preferred_element_type=jnp.float32)
    h1 = jnp.maximum(h1 + b1_ref[...], 0.0)

    # TODO(synk): nn.Dropout(0.7) is identity here (eval/inference semantics);
    # training-mode dropout would need pltpu.prng_seed + pltpu.prng_random_bits.

    # ---- fc2: one lane-dense full-block store (columns padded to 128 multiple) ----
    w2_copy.wait()
    out_ref[...] = (jnp.dot(h1.astype(w2_vmem.dtype), w2_vmem[...],
                            preferred_element_type=jnp.float32)
                    + b2_ref[...]).astype(out_ref.dtype)


def _pool_matrix(H, W):
    """Rows = output pixels (oh*ow_n + ow), cols = flattened spatial (h*W + w)."""
    oh_n = (H - POOL_K) // POOL_S + 1
    ow_n = (W - POOL_K) // POOL_S + 1
    pt = np.zeros((oh_n * ow_n, H * W), np.float32)
    inv = 1.0 / float(POOL_K * POOL_K)
    for oh in range(oh_n):
        for ow in range(ow_n):
            p = oh * ow_n + ow
            for dh in range(POOL_K):
                for dw in range(POOL_K):
                    pt[p, (oh * POOL_S + dh) * W + (ow * POOL_S + dw)] = inv
    return pt, oh_n, ow_n


def pack_params(conv_w, conv_b, fc1_w, fc1_b, fc2_w, fc2_b, *, batch, height, width):
    """One-time weight / constant packing.  Keep OUT of the per-call jitted path."""
    C = conv_w.shape[1]
    pt, oh_n, ow_n = _pool_matrix(height, width)
    n_pix = oh_n * ow_n
    assert n_pix * CONV_OUT == fc1_w.shape[1], "spatial size must flatten to 4*4*128"

    # Pixel-major block-diagonal pooling matrix (row = p*B + b).
    # TODO(synk): O(batch^2) footprint — restructure (per-batch pool matrix + batch
    # loop/grid) before scaling batch, especially under v7x's 64 MiB VMEM.
    hw = height * width
    ptb = np.zeros((n_pix * batch, batch * hw), np.float32)
    for b in range(batch):
        ptb[np.arange(n_pix) * batch + b, b * hw:(b + 1) * hw] = pt

    cw = jnp.asarray(np.asarray(conv_w).reshape(CONV_OUT, C).T)          # (C, 128)
    cb = jnp.asarray(np.asarray(conv_b).reshape(1, CONV_OUT))            # (1, 128)

    # fc1_w[o, c*n_pix + p] -> w1p[p, c, o] (matches the per-pixel fc1 dots exactly).
    # bf16 halves the dominant HBM->VMEM transfer; accumulation stays f32.
    # TODO(synk): int8 (v5e/v6e) / fp8 (v7x) weight storage would halve it again.
    w1p = jnp.transpose(jnp.asarray(fc1_w).reshape(FC1_OUT, CONV_OUT, n_pix),
                        (2, 1, 0)).astype(jnp.bfloat16)                  # (16, 128, 1024)
    b1 = jnp.asarray(fc1_b).reshape(1, FC1_OUT).astype(jnp.float32)

    num_classes = fc2_w.shape[0]
    npad = ((num_classes + 127) // 128) * 128                            # lane-dense out
    w2 = jnp.pad(jnp.asarray(fc2_w).T.astype(jnp.bfloat16),
                 ((0, 0), (0, npad - num_classes)))                      # (1024, npad)
    b2 = jnp.pad(jnp.asarray(fc2_b).astype(jnp.float32),
                 (0, npad - num_classes)).reshape(1, npad)

    params = dict(ptb=jnp.asarray(ptb), cw=cw, cb=cb, w1p=w1p, b1=b1, w2=w2, b2=b2)
    return params, num_classes


def injection_aux(x, params, num_classes):
    """x: (B, C, H, W) float32 (PyTorch NCHW).  `params` from pack_params."""
    B, C, H, W = x.shape
    # Only the tiny per-call activation reshape stays in the hot path.
    x_flat = jnp.transpose(x, (0, 2, 3, 1)).reshape(B * H * W, C)        # (B*HW, C)
    npad = params["w2"].shape[1]

    vmem = pl.BlockSpec(memory_space=pltpu.MemorySpace.VMEM)
    hbm = pl.BlockSpec(memory_space=pl.ANY)                              # manual DMA
    out = pl.pallas_call(
        _injection_aux_kernel,
        out_shape=jax.ShapeDtypeStruct((B, npad), jnp.float32),
        in_specs=[vmem, vmem, vmem, vmem, vmem, vmem, hbm, hbm],
        out_specs=vmem,
        scratch_shapes=[
            pltpu.VMEM(params["w1p"].shape, jnp.bfloat16),               # fc1 weight buf
            pltpu.VMEM(params["w2"].shape, jnp.bfloat16),                # fc2 weight buf
            pltpu.SemaphoreType.DMA((W1_CHUNKS + 1,)),
        ],
    )(x_flat, params["ptb"], params["cw"], params["cb"], params["b1"],
      params["b2"], params["w1p"], params["w2"])
    return out[:, :num_classes]


def _reference(x, conv_w, conv_b, fc1_w, fc1_b, fc2_w, fc2_b):
    pooled = lax.reduce_window(x, 0.0, lax.add,
                               (1, 1, POOL_K, POOL_K),
                               (1, 1, POOL_S, POOL_S), 'VALID') / float(POOL_K * POOL_K)
    conv = jnp.einsum('bchw,oc->bohw', pooled, conv_w.reshape(CONV_OUT, -1),
                      precision=lax.Precision.HIGHEST) + conv_b[None, :, None, None]
    conv = jnp.maximum(conv, 0.0)
    flat = conv.reshape(x.shape[0], -1)                                  # channel-major flatten
    h1 = jnp.maximum(
        jnp.dot(flat, fc1_w.T, precision=lax.Precision.HIGHEST) + fc1_b, 0.0)
    return jnp.dot(h1, fc2_w.T, precision=lax.Precision.HIGHEST) + fc2_b


if __name__ == "__main__":
    key = jax.random.PRNGKey(0)
    B, C, H, W = 2, 4, 16, 16        # AvgPool(5,3): 16 -> 4, so flatten = 4*4*128
    num_classes = 100                # non-128-aligned: exercises the lane-pad path

    ks = jax.random.split(key, 7)
    x = jax.random.normal(ks[0], (B, C, H, W), jnp.float32)
    conv_w = jax.random.normal(ks[1], (CONV_OUT, C, 1, 1), jnp.float32) * 0.1
    conv_b = jax.random.normal(ks[2], (CONV_OUT,), jnp.float32) * 0.1
    fc1_w = jax.random.normal(ks[3], (FC1_OUT, 16 * CONV_OUT), jnp.float32) * 0.02
    fc1_b = jax.random.normal(ks[4], (FC1_OUT,), jnp.float32) * 0.02
    fc2_w = jax.random.normal(ks[5], (num_classes, FC1_OUT), jnp.float32) * 0.02
    fc2_b = jax.random.normal(ks[6], (num_classes,), jnp.float32) * 0.02

    # One-time packing (outside the per-call jit).
    params, n_cls = pack_params(conv_w, conv_b, fc1_w, fc1_b, fc2_w, fc2_b,
                                batch=B, height=H, width=W)
    fwd = jax.jit(lambda xx, pp: injection_aux(xx, pp, n_cls))

    out = jax.block_until_ready(fwd(x, params))

    ref = _reference(x, conv_w, conv_b, fc1_w, fc1_b, fc2_w, fc2_b)
    assert out.shape == (B, num_classes)
    assert jnp.allclose(out, ref, atol=2e-2, rtol=2e-2), float(jnp.max(jnp.abs(out - ref)))
    print("KERNEL_OK")
</pallas_src>

<mosaic_0001>
module attributes {stable_mosaic.version = 11 : i64} {
  func.func @_injection_aux_kernel(%arg0: memref<512x4xf32, #tpu.memory_space<vmem>>, %arg1: memref<32x512xf32, #tpu.memory_space<vmem>>, %arg2: memref<4x128xf32, #tpu.memory_space<vmem>>, %arg3: memref<1x128xf32, #tpu.memory_space<vmem>>, %arg4: memref<1x1024xf32, #tpu.memory_space<vmem>>, %arg5: memref<1x128xf32, #tpu.memory_space<vmem>>, %arg6: memref<16x128x1024xbf16, #tpu.memory_space<any>>, %arg7: memref<1024x128xbf16, #tpu.memory_space<any>>, %arg8: memref<2x128xf32, #tpu.memory_space<vmem>>, %arg9: memref<16x128x1024xbf16, #tpu.memory_space<vmem>>, %arg10: memref<1024x128xbf16, #tpu.memory_space<vmem>>, %arg11: memref<5x!tpu.dma_semaphore, #tpu.memory_space<semaphore_mem>>) attributes {dimension_semantics = [], scalar_prefetch = 0 : i64, scratch_operands = 3 : i64, tpu.core_type = #tpu.core_type<tc>} {
    %c0_i32 = arith.constant 0 : i32
    %c0_i32_0 = arith.constant 0 : i32
    %c0_i32_1 = arith.constant 0 : i32
    %c0_i32_2 = arith.constant 0 : i32
    %0 = tpu.memref_slice %arg6[%c0_i32_0, %c0_i32_1, %c0_i32_2] : memref<16x128x1024xbf16, #tpu.memory_space<any>> -> memref<4x128x1024xbf16, #tpu.memory_space<any>>
    %c0_i32_3 = arith.constant 0 : i32
    %c0_i32_4 = arith.constant 0 : i32
    %c0_i32_5 = arith.constant 0 : i32
    %1 = tpu.memref_slice %arg9[%c0_i32_3, %c0_i32_4, %c0_i32_5] : memref<16x128x1024xbf16, #tpu.memory_space<vmem>> -> memref<4x128x1024xbf16, #tpu.memory_space<vmem>>
    %2 = tpu.memref_slice %arg11[%c0_i32] : memref<5x!tpu.dma_semaphore, #tpu.memory_space<semaphore_mem>> -> memref<1x!tpu.dma_semaphore, #tpu.memory_space<semaphore_mem>>
    %3 = tpu.memref_squeeze %2 : memref<1x!tpu.dma_semaphore, #tpu.memory_space<semaphore_mem>> -> memref<!tpu.dma_semaphore, #tpu.memory_space<semaphore_mem>>
    tpu.enqueue_dma source(%0 : memref<4x128x1024xbf16, #tpu.memory_space<any>>) target(%1 : memref<4x128x1024xbf16, #tpu.memory_space<vmem>>) target_semaphore(%3 : memref<!tpu.dma_semaphore, #tpu.memory_space<semaphore_mem>>)
    %c1_i32 = arith.constant 1 : i32
    %c4_i32 = arith.constant 4 : i32
    %c0_i32_6 = arith.constant 0 : i32
    %c0_i32_7 = arith.constant 0 : i32
    %4 = tpu.memref_slice %arg6[%c4_i32, %c0_i32_6, %c0_i32_7] : memref<16x128x1024xbf16, #tpu.memory_space<any>> -> memref<4x128x1024xbf16, #tpu.memory_space<any>>
    %c4_i32_8 = arith.constant 4 : i32
    %c0_i32_9 = arith.constant 0 : i32
    %c0_i32_10 = arith.constant 0 : i32
    %5 = tpu.memref_slice %arg9[%c4_i32_8, %c0_i32_9, %c0_i32_10] : memref<16x128x1024xbf16, #tpu.memory_space<vmem>> -> memref<4x128x1024xbf16, #tpu.memory_space<vmem>>
    %6 = tpu.memref_slice %arg11[%c1_i32] : memref<5x!tpu.dma_semaphore, #tpu.memory_space<semaphore_mem>> -> memref<1x!tpu.dma_semaphore, #tpu.memory_space<semaphore_mem>>
    %7 = tpu.memref_squeeze %6 : memref<1x!tpu.dma_semaphore, #tpu.memory_space<semaphore_mem>> -> memref<!tpu.dma_semaphore, #tpu.memory_space<semaphore_mem>>
    tpu.enqueue_dma source(%4 : memref<4x128x1024xbf16, #tpu.memory_space<any>>) target(%5 : memref<4x128x1024xbf16, #tpu.memory_space<vmem>>) target_semaphore(%7 : memref<!tpu.dma_semaphore, #tpu.memory_space<semaphore_mem>>)
    %c2_i32 = arith.constant 2 : i32
    %c8_i32 = arith.constant 8 : i32
    %c0_i32_11 = arith.constant 0 : i32
    %c0_i32_12 = arith.constant 0 : i32
    %8 = tpu.memref_slice %arg6[%c8_i32, %c0_i32_11, %c0_i32_12] : memref<16x128x1024xbf16, #tpu.memory_space<any>> -> memref<4x128x1024xbf16, #tpu.memory_space<any>>
    %c8_i32_13 = arith.constant 8 : i32
    %c0_i32_14 = arith.constant 0 : i32
    %c0_i32_15 = arith.constant 0 : i32
    %9 = tpu.memref_slice %arg9[%c8_i32_13, %c0_i32_14, %c0_i32_15] : memref<16x128x1024xbf16, #tpu.memory_space<vmem>> -> memref<4x128x1024xbf16, #tpu.memory_space<vmem>>
    %10 = tpu.memref_slice %arg11[%c2_i32] : memref<5x!tpu.dma_semaphore, #tpu.memory_space<semaphore_mem>> -> memref<1x!tpu.dma_semaphore, #tpu.memory_space<semaphore_mem>>
    %11 = tpu.memref_squeeze %10 : memref<1x!tpu.dma_semaphore, #tpu.memory_space<semaphore_mem>> -> memref<!tpu.dma_semaphore, #tpu.memory_space<semaphore_mem>>
    tpu.enqueue_dma source(%8 : memref<4x128x1024xbf16, #tpu.memory_space<any>>) target(%9 : memref<4x128x1024xbf16, #tpu.memory_space<vmem>>) target_semaphore(%11 : memref<!tpu.dma_semaphore, #tpu.memory_space<semaphore_mem>>)
    %c3_i32 = arith.constant 3 : i32
    %c12_i32 = arith.constant 12 : i32
    %c0_i32_16 = arith.constant 0 : i32
    %c0_i32_17 = arith.constant 0 : i32
    %12 = tpu.memref_slice %arg6[%c12_i32, %c0_i32_16, %c0_i32_17] : memref<16x128x1024xbf16, #tpu.memory_space<any>> -> memref<4x128x1024xbf16, #tpu.memory_space<any>>
    %c12_i32_18 = arith.constant 12 : i32
    %c0_i32_19 = arith.constant 0 : i32
    %c0_i32_20 = arith.constant 0 : i32
    %13 = tpu.memref_slice %arg9[%c12_i32_18, %c0_i32_19, %c0_i32_20] : memref<16x128x1024xbf16, #tpu.memory_space<vmem>> -> memref<4x128x1024xbf16, #tpu.memory_space<vmem>>
    %14 = tpu.memref_slice %arg11[%c3_i32] : memref<5x!tpu.dma_semaphore, #tpu.memory_space<semaphore_mem>> -> memref<1x!tpu.dma_semaphore, #tpu.memory_space<semaphore_mem>>
    %15 = tpu.memref_squeeze %14 : memref<1x!tpu.dma_semaphore, #tpu.memory_space<semaphore_mem>> -> memref<!tpu.dma_semaphore, #tpu.memory_space<semaphore_mem>>
    tpu.enqueue_dma source(%12 : memref<4x128x1024xbf16, #tpu.memory_space<any>>) target(%13 : memref<4x128x1024xbf16, #tpu.memory_space<vmem>>) target_semaphore(%15 : memref<!tpu.dma_semaphore, #tpu.memory_space<semaphore_mem>>)
    %c4_i32_21 = arith.constant 4 : i32
    %16 = tpu.memref_slice %arg11[%c4_i32_21] : memref<5x!tpu.dma_semaphore, #tpu.memory_space<semaphore_mem>> -> memref<1x!tpu.dma_semaphore, #tpu.memory_space<semaphore_mem>>
    %17 = tpu.memref_squeeze %16 : memref<1x!tpu.dma_semaphore, #tpu.memory_space<semaphore_mem>> -> memref<!tpu.dma_semaphore, #tpu.memory_space<semaphore_mem>>
    tpu.enqueue_dma source(%arg7 : memref<1024x128xbf16, #tpu.memory_space<any>>) target(%arg10 : memref<1024x128xbf16, #tpu.memory_space<vmem>>) target_semaphore(%17 : memref<!tpu.dma_semaphore, #tpu.memory_space<semaphore_mem>>)
    %c0 = arith.constant 0 : index
    %c0_22 = arith.constant 0 : index
    %18 = vector.load %arg1[%c0, %c0_22] : memref<32x512xf32, #tpu.memory_space<vmem>>, vector<32x512xf32>
    %c0_23 = arith.constant 0 : index
    %c0_24 = arith.constant 0 : index
    %19 = vector.load %arg0[%c0_23, %c0_24] : memref<512x4xf32, #tpu.memory_space<vmem>>, vector<512x4xf32>
    %cst = arith.constant dense<0.000000e+00> : vector<32x4xf32>
    %20 = tpu.matmul %18, %19, %cst {dimension_numbers = #tpu.dot_dimension_numbers<[1], [0], [0], [1], [0, 0, 1, 1], [], []>} : vector<32x512xf32>, vector<512x4xf32>, vector<32x4xf32> -> vector<32x4xf32>
    %c0_25 = arith.constant 0 : index
    %c0_26 = arith.constant 0 : index
    %21 = vector.load %arg2[%c0_25, %c0_26] : memref<4x128xf32, #tpu.memory_space<vmem>>, vector<4x128xf32>
    %cst_27 = arith.constant dense<0.000000e+00> : vector<32x128xf32>
    %22 = tpu.matmul %20, %21, %cst_27 {dimension_numbers = #tpu.dot_dimension_numbers<[1], [0], [0], [1], [0, 0, 1, 1], [], []>} : vector<32x4xf32>, vector<4x128xf32>, vector<32x128xf32> -> vector<32x128xf32>
    %c0_28 = arith.constant 0 : index
    %c0_29 = arith.constant 0 : index
    %23 = vector.load %arg3[%c0_28, %c0_29] : memref<1x128xf32, #tpu.memory_space<vmem>>, vector<1x128xf32>
    %24 = vector.broadcast %23 : vector<1x128xf32> to vector<32x128xf32>
    %25 = arith.addf %22, %24 : vector<32x128xf32>
    %cst_30 = arith.constant 0.000000e+00 : f32
    %26 = vector.broadcast %cst_30 : f32 to vector<32x128xf32>
    %27 = arith.maximumf %25, %26 : vector<32x128xf32>
    %28 = arith.truncf %27 : vector<32x128xf32> to vector<32x128xbf16>
    %cst_31 = arith.constant 0.000000e+00 : f32
    %29 = vector.broadcast %cst_31 : f32 to vector<2x1024xf32>
    %c0_i32_32 = arith.constant 0 : i32
    %c0_i32_33 = arith.constant 0 : i32
    %c0_i32_34 = arith.constant 0 : i32
    %c0_i32_35 = arith.constant 0 : i32
    %30 = tpu.memref_slice %arg6[%c0_i32_33, %c0_i32_34, %c0_i32_35] : memref<16x128x1024xbf16, #tpu.memory_space<any>> -> memref<4x128x1024xbf16, #tpu.memory_space<any>>
    %c0_i32_36 = arith.constant 0 : i32
    %c0_i32_37 = arith.constant 0 : i32
    %c0_i32_38 = arith.constant 0 : i32
    %31 = tpu.memref_slice %arg9[%c0_i32_36, %c0_i32_37, %c0_i32_38] : memref<16x128x1024xbf16, #tpu.memory_space<vmem>> -> memref<4x128x1024xbf16, #tpu.memory_space<vmem>>
    %32 = tpu.memref_slice %arg11[%c0_i32_32] : memref<5x!tpu.dma_semaphore, #tpu.memory_space<semaphore_mem>> -> memref<1x!tpu.dma_semaphore, #tpu.memory_space<semaphore_mem>>
    %33 = tpu.memref_squeeze %32 : memref<1x!tpu.dma_semaphore, #tpu.memory_space<semaphore_mem>> -> memref<!tpu.dma_semaphore, #tpu.memory_space<semaphore_mem>>
    tpu.wait_dma2 semaphore(%33 : memref<!tpu.dma_semaphore, #tpu.memory_space<semaphore_mem>>) src(%30 : memref<4x128x1024xbf16, #tpu.memory_space<any>>) dst(%31 : memref<4x128x1024xbf16, #tpu.memory_space<vmem>>)
    %34 = vector.extract_strided_slice %28 {offsets = [0, 0], sizes = [2, 128], strides = [1, 1]} : vector<32x128xbf16> to vector<2x128xbf16>
    %c0_39 = arith.constant 0 : index
    %c0_40 = arith.constant 0 : index
    %c0_41 = arith.constant 0 : index
    %35 = vector.load %arg9[%c0_39, %c0_40, %c0_41] : memref<16x128x1024xbf16, #tpu.memory_space<vmem>>, vector<1x128x1024xbf16>
    %36 = vector.shape_cast %35 : vector<1x128x1024xbf16> to vector<128x1024xbf16>
    %cst_42 = arith.constant dense<0.000000e+00> : vector<2x1024xf32>
    %37 = tpu.matmul %34, %36, %cst_42 {dimension_numbers = #tpu.dot_dimension_numbers<[1], [0], [0], [1], [0, 0, 1, 1], [], []>} : vector<2x128xbf16>, vector<128x1024xbf16>, vector<2x1024xf32> -> vector<2x1024xf32>
    %38 = arith.addf %29, %37 : vector<2x1024xf32>
    %39 = vector.extract_strided_slice %28 {offsets = [2, 0], sizes = [2, 128], strides = [1, 1]} : vector<32x128xbf16> to vector<2x128xbf16>
    %c1 = arith.constant 1 : index
    %c0_43 = arith.constant 0 : index
    %c0_44 = arith.constant 0 : index
    %40 = vector.load %arg9[%c1, %c0_43, %c0_44] : memref<16x128x1024xbf16, #tpu.memory_space<vmem>>, vector<1x128x1024xbf16>
    %41 = vector.shape_cast %40 : vector<1x128x1024xbf16> to vector<128x1024xbf16>
    %cst_45 = arith.constant dense<0.000000e+00> : vector<2x1024xf32>
    %42 = tpu.matmul %39, %41, %cst_45 {dimension_numbers = #tpu.dot_dimension_numbers<[1], [0], [0], [1], [0, 0, 1, 1], [], []>} : vector<2x128xbf16>, vector<128x1024xbf16>, vector<2x1024xf32> -> vector<2x1024xf32>
    %43 = arith.addf %38, %42 : vector<2x1024xf32>
    %44 = vector.extract_strided_slice %28 {offsets = [4, 0], sizes = [2, 128], strides = [1, 1]} : vector<32x128xbf16> to vector<2x128xbf16>
    %c2 = arith.constant 2 : index
    %c0_46 = arith.constant 0 : index
    %c0_47 = arith.constant 0 : index
    %45 = vector.load %arg9[%c2, %c0_46, %c0_47] : memref<16x128x1024xbf16, #tpu.memory_space<vmem>>, vector<1x128x1024xbf16>
    %46 = vector.shape_cast %45 : vector<1x128x1024xbf16> to vector<128x1024xbf16>
    %cst_48 = arith.constant dense<0.000000e+00> : vector<2x1024xf32>
    %47 = tpu.matmul %44, %46, %cst_48 {dimension_numbers = #tpu.dot_dimension_numbers<[1], [0], [0], [1], [0, 0, 1, 1], [], []>} : vector<2x128xbf16>, vector<128x1024xbf16>, vector<2x1024xf32> -> vector<2x1024xf32>
    %48 = arith.addf %43, %47 : vector<2x1024xf32>
    %49 = vector.extract_strided_slice %28 {offsets = [6, 0], sizes = [2, 128], strides = [1, 1]} : vector<32x128xbf16> to vector<2x128xbf16>
    %c3 = arith.constant 3 : index
    %c0_49 = arith.constant 0 : index
    %c0_50 = arith.constant 0 : index
    %50 = vector.load %arg9[%c3, %c0_49, %c0_50] : memref<16x128x1024xbf16, #tpu.memory_space<vmem>>, vector<1x128x1024xbf16>
    %51 = vector.shape_cast %50 : vector<1x128x1024xbf16> to vector<128x1024xbf16>
    %cst_51 = arith.constant dense<0.000000e+00> : vector<2x1024xf32>
    %52 = tpu.matmul %49, %51, %cst_51 {dimension_numbers = #tpu.dot_dimension_numbers<[1], [0], [0], [1], [0, 0, 1, 1], [], []>} : vector<2x128xbf16>, vector<128x1024xbf16>, vector<2x1024xf32> -> vector<2x1024xf32>
    %53 = arith.addf %48, %52 : vector<2x1024xf32>
    %c1_i32_52 = arith.constant 1 : i32
    %c4_i32_53 = arith.constant 4 : i32
    %c0_i32_54 = arith.constant 0 : i32
    %c0_i32_55 = arith.constant 0 : i32
    %54 = tpu.memref_slice %arg6[%c4_i32_53, %c0_i32_54, %c0_i32_55] : memref<16x128x1024xbf16, #tpu.memory_space<any>> -> memref<4x128x1024xbf16, #tpu.memory_space<any>>
    %c4_i32_56 = arith.constant 4 : i32
    %c0_i32_57 = arith.constant 0 : i32
    %c0_i32_58 = arith.constant 0 : i32
    %55 = tpu.memref_slice %arg9[%c4_i32_56, %c0_i32_57, %c0_i32_58] : memref<16x128x1024xbf16, #tpu.memory_space<vmem>> -> memref<4x128x1024xbf16, #tpu.memory_space<vmem>>
    %56 = tpu.memref_slice %arg11[%c1_i32_52] : memref<5x!tpu.dma_semaphore, #tpu.memory_space<semaphore_mem>> -> memref<1x!tpu.dma_semaphore, #tpu.memory_space<semaphore_mem>>
    %57 = tpu.memref_squeeze %56 : memref<1x!tpu.dma_semaphore, #tpu.memory_space<semaphore_mem>> -> memref<!tpu.dma_semaphore, #tpu.memory_space<semaphore_mem>>
    tpu.wait_dma2 semaphore(%57 : memref<!tpu.dma_semaphore, #tpu.memory_space<semaphore_mem>>) src(%54 : memref<4x128x1024xbf16, #tpu.memory_space<any>>) dst(%55 : memref<4x128x1024xbf16, #tpu.memory_space<vmem>>)
    %58 = vector.extract_strided_slice %28 {offsets = [8, 0], sizes = [2, 128], strides = [1, 1]} : vector<32x128xbf16> to vector<2x128xbf16>
    %c4 = arith.constant 4 : index
    %c0_59 = arith.constant 0 : index
    %c0_60 = arith.constant 0 : index
    %59 = vector.load %arg9[%c4, %c0_59, %c0_60] : memref<16x128x1024xbf16, #tpu.memory_space<vmem>>, vector<1x128x1024xbf16>
    %60 = vector.shape_cast %59 : vector<1x128x1024xbf16> to vector<128x1024xbf16>
    %cst_61 = arith.constant dense<0.000000e+00> : vector<2x1024xf32>
    %61 = tpu.matmul %58, %60, %cst_61 {dimension_numbers = #tpu.dot_dimension_numbers<[1], [0], [0], [1], [0, 0, 1, 1], [], []>} : vector<2x128xbf16>, vector<128x1024xbf16>, vector<2x1024xf32> -> vector<2x1024xf32>
    %62 = arith.addf %53, %61 : vector<2x1024xf32>
    %63 = vector.extract_strided_slice %28 {offsets = [10, 0], sizes = [2, 128], strides = [1, 1]} : vector<32x128xbf16> to vector<2x128xbf16>
    %c5 = arith.constant 5 : index
    %c0_62 = arith.constant 0 : index
    %c0_63 = arith.constant 0 : index
    %64 = vector.load %arg9[%c5, %c0_62, %c0_63] : memref<16x128x1024xbf16, #tpu.memory_space<vmem>>, vector<1x128x1024xbf16>
    %65 = vector.shape_cast %64 : vector<1x128x1024xbf16> to vector<128x1024xbf16>
    %cst_64 = arith.constant dense<0.000000e+00> : vector<2x1024xf32>
    %66 = tpu.matmul %63, %65, %cst_64 {dimension_numbers = #tpu.dot_dimension_numbers<[1], [0], [0], [1], [0, 0, 1, 1], [], []>} : vector<2x128xbf16>, vector<128x1024xbf16>, vector<2x1024xf32> -> vector<2x1024xf32>
    %67 = arith.addf %62, %66 : vector<2x1024xf32>
    %68 = vector.extract_strided_slice %28 {offsets = [12, 0], sizes = [2, 128], strides = [1, 1]} : vector<32x128xbf16> to vector<2x128xbf16>
    %c6 = arith.constant 6 : index
    %c0_65 = arith.constant 0 : index
    %c0_66 = arith.constant 0 : index
    %69 = vector.load %arg9[%c6, %c0_65, %c0_66] : memref<16x128x1024xbf16, #tpu.memory_space<vmem>>, vector<1x128x1024xbf16>
    %70 = vector.shape_cast %69 : vector<1x128x1024xbf16> to vector<128x1024xbf16>
    %cst_67 = arith.constant dense<0.000000e+00> : vector<2x1024xf32>
    %71 = tpu.matmul %68, %70, %cst_67 {dimension_numbers = #tpu.dot_dimension_numbers<[1], [0], [0], [1], [0, 0, 1, 1], [], []>} : vector<2x128xbf16>, vector<128x1024xbf16>, vector<2x1024xf32> -> vector<2x1024xf32>
    %72 = arith.addf %67, %71 : vector<2x1024xf32>
    %73 = vector.extract_strided_slice %28 {offsets = [14, 0], sizes = [2, 128], strides = [1, 1]} : vector<32x128xbf16> to vector<2x128xbf16>
    %c7 = arith.constant 7 : index
    %c0_68 = arith.constant 0 : index
    %c0_69 = arith.constant 0 : index
    %74 = vector.load %arg9[%c7, %c0_68, %c0_69] : memref<16x128x1024xbf16, #tpu.memory_space<vmem>>, vector<1x128x1024xbf16>
    %75 = vector.shape_cast %74 : vector<1x128x1024xbf16> to vector<128x1024xbf16>
    %cst_70 = arith.constant dense<0.000000e+00> : vector<2x1024xf32>
    %76 = tpu.matmul %73, %75, %cst_70 {dimension_numbers = #tpu.dot_dimension_numbers<[1], [0], [0], [1], [0, 0, 1, 1], [], []>} : vector<2x128xbf16>, vector<128x1024xbf16>, vector<2x1024xf32> -> vector<2x1024xf32>
    %77 = arith.addf %72, %76 : vector<2x1024xf32>
    %c2_i32_71 = arith.constant 2 : i32
    %c8_i32_72 = arith.constant 8 : i32
    %c0_i32_73 = arith.constant 0 : i32
    %c0_i32_74 = arith.constant 0 : i32
    %78 = tpu.memref_slice %arg6[%c8_i32_72, %c0_i32_73, %c0_i32_74] : memref<16x128x1024xbf16, #tpu.memory_space<any>> -> memref<4x128x1024xbf16, #tpu.memory_space<any>>
    %c8_i32_75 = arith.constant 8 : i32
    %c0_i32_76 = arith.constant 0 : i32
    %c0_i32_77 = arith.constant 0 : i32
    %79 = tpu.memref_slice %arg9[%c8_i32_75, %c0_i32_76, %c0_i32_77] : memref<16x128x1024xbf16, #tpu.memory_space<vmem>> -> memref<4x128x1024xbf16, #tpu.memory_space<vmem>>
    %80 = tpu.memref_slice %arg11[%c2_i32_71] : memref<5x!tpu.dma_semaphore, #tpu.memory_space<semaphore_mem>> -> memref<1x!tpu.dma_semaphore, #tpu.memory_space<semaphore_mem>>
    %81 = tpu.memref_squeeze %80 : memref<1x!tpu.dma_semaphore, #tpu.memory_space<semaphore_mem>> -> memref<!tpu.dma_semaphore, #tpu.memory_space<semaphore_mem>>
    tpu.wait_dma2 semaphore(%81 : memref<!tpu.dma_semaphore, #tpu.memory_space<semaphore_mem>>) src(%78 : memref<4x128x1024xbf16, #tpu.memory_space<any>>) dst(%79 : memref<4x128x1024xbf16, #tpu.memory_space<vmem>>)
    %82 = vector.extract_strided_slice %28 {offsets = [16, 0], sizes = [2, 128], strides = [1, 1]} : vector<32x128xbf16> to vector<2x128xbf16>
    %c8 = arith.constant 8 : index
    %c0_78 = arith.constant 0 : index
    %c0_79 = arith.constant 0 : index
    %83 = vector.load %arg9[%c8, %c0_78, %c0_79] : memref<16x128x1024xbf16, #tpu.memory_space<vmem>>, vector<1x128x1024xbf16>
    %84 = vector.shape_cast %83 : vector<1x128x1024xbf16> to vector<128x1024xbf16>
    %cst_80 = arith.constant dense<0.000000e+00> : vector<2x1024xf32>
    %85 = tpu.matmul %82, %84, %cst_80 {dimension_numbers = #tpu.dot_dimension_numbers<[1], [0], [0], [1], [0, 0, 1, 1], [], []>} : vector<2x128xbf16>, vector<128x1024xbf16>, vector<2x1024xf32> -> vector<2x1024xf32>
    %86 = arith.addf %77, %85 : vector<2x1024xf32>
    %87 = vector.extract_strided_slice %28 {offsets = [18, 0], sizes = [2, 128], strides = [1, 1]} : vector<32x128xbf16> to vector<2x128xbf16>
    %c9 = arith.constant 9 : index
    %c0_81 = arith.constant 0 : index
    %c0_82 = arith.constant 0 : index
    %88 = vector.load %arg9[%c9, %c0_81, %c0_82] : memref<16x128x1024xbf16, #tpu.memory_space<vmem>>, vector<1x128x1024xbf16>
    %89 = vector.shape_cast %88 : vector<1x128x1024xbf16> to vector<128x1024xbf16>
    %cst_83 = arith.constant dense<0.000000e+00> : vector<2x1024xf32>
    %90 = tpu.matmul %87, %89, %cst_83 {dimension_numbers = #tpu.dot_dimension_numbers<[1], [0], [0], [1], [0, 0, 1, 1], [], []>} : vector<2x128xbf16>, vector<128x1024xbf16>, vector<2x1024xf32> -> vector<2x1024xf32>
    %91 = arith.addf %86, %90 : vector<2x1024xf32>
    %92 = vector.extract_strided_slice %28 {offsets = [20, 0], sizes = [2, 128], strides = [1, 1]} : vector<32x128xbf16> to vector<2x128xbf16>
    %c10 = arith.constant 10 : index
    %c0_84 = arith.constant 0 : index
    %c0_85 = arith.constant 0 : index
    %93 = vector.load %arg9[%c10, %c0_84, %c0_85] : memref<16x128x1024xbf16, #tpu.memory_space<vmem>>, vector<1x128x1024xbf16>
    %94 = vector.shape_cast %93 : vector<1x128x1024xbf16> to vector<128x1024xbf16>
    %cst_86 = arith.constant dense<0.000000e+00> : vector<2x1024xf32>
    %95 = tpu.matmul %92, %94, %cst_86 {dimension_numbers = #tpu.dot_dimension_numbers<[1], [0], [0], [1], [0, 0, 1, 1], [], []>} : vector<2x128xbf16>, vector<128x1024xbf16>, vector<2x1024xf32> -> vector<2x1024xf32>
    %96 = arith.addf %91, %95 : vector<2x1024xf32>
    %97 = vector.extract_strided_slice %28 {offsets = [22, 0], sizes = [2, 128], strides = [1, 1]} : vector<32x128xbf16> to vector<2x128xbf16>
    %c11 = arith.constant 11 : index
    %c0_87 = arith.constant 0 : index
    %c0_88 = arith.constant 0 : index
    %98 = vector.load %arg9[%c11, %c0_87, %c0_88] : memref<16x128x1024xbf16, #tpu.memory_space<vmem>>, vector<1x128x1024xbf16>
    %99 = vector.shape_cast %98 : vector<1x128x1024xbf16> to vector<128x1024xbf16>
    %cst_89 = arith.constant dense<0.000000e+00> : vector<2x1024xf32>
    %100 = tpu.matmul %97, %99, %cst_89 {dimension_numbers = #tpu.dot_dimension_numbers<[1], [0], [0], [1], [0, 0, 1, 1], [], []>} : vector<2x128xbf16>, vector<128x1024xbf16>, vector<2x1024xf32> -> vector<2x1024xf32>
    %101 = arith.addf %96, %100 : vector<2x1024xf32>
    %c3_i32_90 = arith.constant 3 : i32
    %c12_i32_91 = arith.constant 12 : i32
    %c0_i32_92 = arith.constant 0 : i32
    %c0_i32_93 = arith.constant 0 : i32
    %102 = tpu.memref_slice %arg6[%c12_i32_91, %c0_i32_92, %c0_i32_93] : memref<16x128x1024xbf16, #tpu.memory_space<any>> -> memref<4x128x1024xbf16, #tpu.memory_space<any>>
    %c12_i32_94 = arith.constant 12 : i32
    %c0_i32_95 = arith.constant 0 : i32
    %c0_i32_96 = arith.constant 0 : i32
    %103 = tpu.memref_slice %arg9[%c12_i32_94, %c0_i32_95, %c0_i32_96] : memref<16x128x1024xbf16, #tpu.memory_space<vmem>> -> memref<4x128x1024xbf16, #tpu.memory_space<vmem>>
    %104 = tpu.memref_slice %arg11[%c3_i32_90] : memref<5x!tpu.dma_semaphore, #tpu.memory_space<semaphore_mem>> -> memref<1x!tpu.dma_semaphore, #tpu.memory_space<semaphore_mem>>
    %105 = tpu.memref_squeeze %104 : memref<1x!tpu.dma_semaphore, #tpu.memory_space<semaphore_mem>> -> memref<!tpu.dma_semaphore, #tpu.memory_space<semaphore_mem>>
    tpu.wait_dma2 semaphore(%105 : memref<!tpu.dma_semaphore, #tpu.memory_space<semaphore_mem>>) src(%102 : memref<4x128x1024xbf16, #tpu.memory_space<any>>) dst(%103 : memref<4x128x1024xbf16, #tpu.memory_space<vmem>>)
    %106 = vector.extract_strided_slice %28 {offsets = [24, 0], sizes = [2, 128], strides = [1, 1]} : vector<32x128xbf16> to vector<2x128xbf16>
    %c12 = arith.constant 12 : index
    %c0_97 = arith.constant 0 : index
    %c0_98 = arith.constant 0 : index
    %107 = vector.load %arg9[%c12, %c0_97, %c0_98] : memref<16x128x1024xbf16, #tpu.memory_space<vmem>>, vector<1x128x1024xbf16>
    %108 = vector.shape_cast %107 : vector<1x128x1024xbf16> to vector<128x1024xbf16>
    %cst_99 = arith.constant dense<0.000000e+00> : vector<2x1024xf32>
    %109 = tpu.matmul %106, %108, %cst_99 {dimension_numbers = #tpu.dot_dimension_numbers<[1], [0], [0], [1], [0, 0, 1, 1], [], []>} : vector<2x128xbf16>, vector<128x1024xbf16>, vector<2x1024xf32> -> vector<2x1024xf32>
    %110 = arith.addf %101, %109 : vector<2x1024xf32>
    %111 = vector.extract_strided_slice %28 {offsets = [26, 0], sizes = [2, 128], strides = [1, 1]} : vector<32x128xbf16> to vector<2x128xbf16>
    %c13 = arith.constant 13 : index
    %c0_100 = arith.constant 0 : index
    %c0_101 = arith.constant 0 : index
    %112 = vector.load %arg9[%c13, %c0_100, %c0_101] : memref<16x128x1024xbf16, #tpu.memory_space<vmem>>, vector<1x128x1024xbf16>
    %113 = vector.shape_cast %112 : vector<1x128x1024xbf16> to vector<128x1024xbf16>
    %cst_102 = arith.constant dense<0.000000e+00> : vector<2x1024xf32>
    %114 = tpu.matmul %111, %113, %cst_102 {dimension_numbers = #tpu.dot_dimension_numbers<[1], [0], [0], [1], [0, 0, 1, 1], [], []>} : vector<2x128xbf16>, vector<128x1024xbf16>, vector<2x1024xf32> -> vector<2x1024xf32>
    %115 = arith.addf %110, %114 : vector<2x1024xf32>
    %116 = vector.extract_strided_slice %28 {offsets = [28, 0], sizes = [2, 128], strides = [1, 1]} : vector<32x128xbf16> to vector<2x128xbf16>
    %c14 = arith.constant 14 : index
    %c0_103 = arith.constant 0 : index
    %c0_104 = arith.constant 0 : index
    %117 = vector.load %arg9[%c14, %c0_103, %c0_104] : memref<16x128x1024xbf16, #tpu.memory_space<vmem>>, vector<1x128x1024xbf16>
    %118 = vector.shape_cast %117 : vector<1x128x1024xbf16> to vector<128x1024xbf16>
    %cst_105 = arith.constant dense<0.000000e+00> : vector<2x1024xf32>
    %119 = tpu.matmul %116, %118, %cst_105 {dimension_numbers = #tpu.dot_dimension_numbers<[1], [0], [0], [1], [0, 0, 1, 1], [], []>} : vector<2x128xbf16>, vector<128x1024xbf16>, vector<2x1024xf32> -> vector<2x1024xf32>
    %120 = arith.addf %115, %119 : vector<2x1024xf32>
    %121 = vector.extract_strided_slice %28 {offsets = [30, 0], sizes = [2, 128], strides = [1, 1]} : vector<32x128xbf16> to vector<2x128xbf16>
    %c15 = arith.constant 15 : index
    %c0_106 = arith.constant 0 : index
    %c0_107 = arith.constant 0 : index
    %122 = vector.load %arg9[%c15, %c0_106, %c0_107] : memref<16x128x1024xbf16, #tpu.memory_space<vmem>>, vector<1x128x1024xbf16>
    %123 = vector.shape_cast %122 : vector<1x128x1024xbf16> to vector<128x1024xbf16>
    %cst_108 = arith.constant dense<0.000000e+00> : vector<2x1024xf32>
    %124 = tpu.matmul %121, %123, %cst_108 {dimension_numbers = #tpu.dot_dimension_numbers<[1], [0], [0], [1], [0, 0, 1, 1], [], []>} : vector<2x128xbf16>, vector<128x1024xbf16>, vector<2x1024xf32> -> vector<2x1024xf32>
    %125 = arith.addf %120, %124 : vector<2x1024xf32>
    %c0_109 = arith.constant 0 : index
    %c0_110 = arith.constant 0 : index
    %126 = vector.load %arg4[%c0_109, %c0_110] : memref<1x1024xf32, #tpu.memory_space<vmem>>, vector<1x1024xf32>
    %127 = vector.broadcast %126 : vector<1x1024xf32> to vector<2x1024xf32>
    %128 = arith.addf %125, %127 : vector<2x1024xf32>
    %cst_111 = arith.constant 0.000000e+00 : f32
    %129 = vector.broadcast %cst_111 : f32 to vector<2x1024xf32>
    %130 = arith.maximumf %128, %129 : vector<2x1024xf32>
    %c4_i32_112 = arith.constant 4 : i32
    %131 = tpu.memref_slice %arg11[%c4_i32_112] : memref<5x!tpu.dma_semaphore, #tpu.memory_space<semaphore_mem>> -> memref<1x!tpu.dma_semaphore, #tpu.memory_space<semaphore_mem>>
    %132 = tpu.memref_squeeze %131 : memref<1x!tpu.dma_semaphore, #tpu.memory_space<semaphore_mem>> -> memref<!tpu.dma_semaphore, #tpu.memory_space<semaphore_mem>>
    tpu.wait_dma2 semaphore(%132 : memref<!tpu.dma_semaphore, #tpu.memory_space<semaphore_mem>>) src(%arg7 : memref<1024x128xbf16, #tpu.memory_space<any>>) dst(%arg10 : memref<1024x128xbf16, #tpu.memory_space<vmem>>)
    %133 = arith.truncf %130 : vector<2x1024xf32> to vector<2x1024xbf16>
    %c0_113 = arith.constant 0 : index
    %c0_114 = arith.constant 0 : index
    %134 = vector.load %arg10[%c0_113, %c0_114] : memref<1024x128xbf16, #tpu.memory_space<vmem>>, vector<1024x128xbf16>
    %cst_115 = arith.constant dense<0.000000e+00> : vector<2x128xf32>
    %135 = tpu.matmul %133, %134, %cst_115 {dimension_numbers = #tpu.dot_dimension_numbers<[1], [0], [0], [1], [0, 0, 1, 1], [], []>} : vector<2x1024xbf16>, vector<1024x128xbf16>, vector<2x128xf32> -> vector<2x128xf32>
    %c0_116 = arith.constant 0 : index
    %c0_117 = arith.constant 0 : index
    %136 = vector.load %arg5[%c0_116, %c0_117] : memref<1x128xf32, #tpu.memory_space<vmem>>, vector<1x128xf32>
    %137 = vector.broadcast %136 : vector<1x128xf32> to vector<2x128xf32>
    %138 = arith.addf %135, %137 : vector<2x128xf32>
    %c0_118 = arith.constant 0 : index
    %c0_119 = arith.constant 0 : index
    %139 = vector.load %arg8[%c0_118, %c0_119] : memref<2x128xf32, #tpu.memory_space<vmem>>, vector<2x128xf32>
    tpu.vector_store %arg8[%c0_118, %c0_119], %138 {strides = array<i32>} : memref<2x128xf32, #tpu.memory_space<vmem>>, vector<2x128xf32>,
    return
  }
}

</mosaic_0001>

<llo_original>
// kernel: _lambda_.1
$region0: #{_lambda_.1}
  #allocation0 [shape = 'u32[]', space=smem, size = 0x4, offset = 0x4, fixed_abs, tag = 'smem constant byte address 0x4 - core index']
  #allocation1 [shape = 'u32[144,128]{1,0:T(1,128)}', space=vmem, size = 0x12000, scoped, tag = 'internal scratch']
  #allocation2 [shape = 'bf16[16,128,1024]{2,1,0:T(16,128)(2,1)}', space=vmem, size = 0x400000, scoped, tag = 'scratch operand']
  #allocation3 [shape = 'bf16[1024,128]{1,0:T(16,128)(2,1)}', space=vmem, size = 0x40000, scoped, tag = 'scratch operand']
  #allocation4 [shape = 's32[5]{0}', space=sflag, size = 0x14, scoped, tag = 'scratch operand']
  #allocation15 [shape = 's32[]', space=sflag, size = 0x4, offset = 0, fixed_abs, tag = 'sflag constant byte address 0x0 - dummy sync flag']
  #allocation17 [shape = 's32[]', space=sflag, size = 0x4, offset = 0, fixed_abs, tag = 'sflag constant byte address 0x0 - dummy sync flag']
  #allocation19 [shape = 's32[]', space=sflag, size = 0x4, offset = 0, fixed_abs, tag = 'sflag constant byte address 0x0 - dummy sync flag']
  #allocation21 [shape = 's32[]', space=sflag, size = 0x4, offset = 0, fixed_abs, tag = 'sflag constant byte address 0x0 - dummy sync flag']
  #allocation23 [shape = 's32[]', space=sflag, size = 0x4, offset = 0, fixed_abs, tag = 'sflag constant byte address 0x0 - dummy sync flag']
  #allocation24 [shape = 's32[]', space=sflag, size = 0x4, offset = 0, fixed_abs, tag = 'sflag constant byte address 0x0 - dummy sync flag']
  #allocation25 [shape = 'u32[]', space=smem, size = 0x4, offset = 0x44, fixed_abs, tag = 'smem constant byte address 0x44 - assertion arg 0']
  #allocation26 [shape = 'u32[]', space=smem, size = 0x4, offset = 0x48, fixed_abs, tag = 'smem constant byte address 0x48 - assertion arg 1']
  %s0 = inlined_call_operand.vmem [shape: f32[512,4], index: 0, kind: input, shape index: {}]
  %s1 = inlined_call_operand.hbm [shape: f32[32,512], index: 1, kind: input, shape index: {}]
  %s2 = inlined_call_operand.hbm [shape: f32[4,128], index: 2, kind: input, shape index: {}]
  %s3 = inlined_call_operand.hbm [shape: f32[1,128], index: 3, kind: input, shape index: {}]
  %s4 = inlined_call_operand.hbm [shape: f32[1,1024], index: 4, kind: input, shape index: {}]
  %s5 = inlined_call_operand.hbm [shape: f32[1,128], index: 5, kind: input, shape index: {}]
  %s6 = inlined_call_operand.hbm [shape: bf16[16,128,1024], index: 6, kind: input, shape index: {}]
  %s7 = inlined_call_operand.hbm [shape: bf16[1024,128], index: 7, kind: input, shape index: {}]
  %s8 = inlined_call_operand.hbm [shape: f32[2,128], index: 8, kind: output, shape index: {}]
  %s9 = sld [smem:[#allocation0]]
  $region58: #{_lambda_.1} parent=0
    _
  %s11 = ssub.s32 1, %s9
  %s12 = scalar_select 0, %s11, %s9
  $region1: #{_lambda_.1} parent=0
    #allocation5 [shape = 'u8[65536]{0}', space=vmem, size = 0x10000, scoped, tag = 'input window, operand 1, single buffered']
    #allocation6 [shape = 's32[1]{0}', space=sflag, size = 0x4, scoped, tag = 'scoped memory for _lambda_.1']
    #allocation7 [shape = 's32[1]{0}', space=sflag, size = 0x4, scoped, tag = 'scoped memory for _lambda_.1']
    #allocation8 [shape = 'u8[2048]{0}', space=vmem, size = 0x800, scoped, tag = 'input window, operand 2, single buffered']
    #allocation9 [shape = 's32[1]{0}', space=sflag, size = 0x4, scoped, tag = 'scoped memory for _lambda_.1']
    #allocation10 [shape = 'u8[512]{0}', space=vmem, size = 0x400, scoped, tag = 'input window, operand 3, single buffered']
    #allocation11 [shape = 'u8[4096]{0}', space=vmem, size = 0x1000, scoped, tag = 'input window, operand 4, single buffered']
    #allocation12 [shape = 's32[1]{0}', space=sflag, size = 0x4, scoped, tag = 'scoped memory for _lambda_.1']
    #allocation13 [shape = 'u8[512]{0}', space=vmem, size = 0x400, scoped, tag = 'input window, operand 5, single buffered']
    #allocation14 [shape = 'u8[1024]{0}', space=vmem, size = 0x400, scoped, tag = 'output window, operand 0, single buffered']
    #allocation16 [shape = 'u32[9]{0}', space=smem, size = 0x24, scoped, tag = 'DMA stride descriptor']
    #allocation18 [shape = 'u32[9]{0}', space=smem, size = 0x24, scoped, tag = 'DMA stride descriptor']
    #allocation20 [shape = 'u32[9]{0}', space=smem, size = 0x24, scoped, tag = 'DMA stride descriptor']
    #allocation22 [shape = 'u32[9]{0}', space=smem, size = 0x24, scoped, tag = 'DMA stride descriptor']
    %13 = vsyncpa [#allocation6], 0
    %14 = vsyncpa [#allocation9], 0
    %15 = vsyncpa [#allocation12], 0
    %16 = vsyncpa [#allocation7], 0
    // Predicated region
    $region2: #{_lambda_.1} parent=1 // pred_check
      _
    $region3: #{_lambda_.1} parent=1 // pred_check_branch
      %18 = sbr.rel (0) target = $region5
    $region4: #{_lambda_.1} parent=1 // pred_region
      _
    $region5: #{_lambda_.1} parent=1 // pred_fallthru
      _
    // Predicated region
    $region6: #{_lambda_.1} parent=1 // pred_check
      _
    $region7: #{_lambda_.1} parent=1 // pred_check_branch
      %20 = sbr.rel (0) target = $region9
    $region8: #{_lambda_.1} parent=1 // pred_region
      %s22 = ssub.s32 2048, 2048
      %23 = vsyncadd [#allocation6], %s22
      %s24 = sshll.u32 [#allocation5], 4
      %s25 = int_to_ptr.vmem [resolvable:$true] %s24
      %30 = dma.hbm_to_vmem [thread:$0]  %s1, 2048, %s25, [#allocation6], 512, 512, 32
    $region9: #{_lambda_.1} parent=1 // pred_fallthru
      _
    // Predicated region
    $region10: #{_lambda_.1} parent=1 // pred_check
      _
    $region11: #{_lambda_.1} parent=1 // pred_check_branch
      %32 = sbr.rel (0) target = $region13
    $region12: #{_lambda_.1} parent=1 // pred_region
      %s34 = ssub.s32 64, 64
      %35 = vsyncadd [#allocation9], %s34
      %s37 = sshll.u32 [#allocation8], 4
      %s38 = int_to_ptr.vmem [resolvable:$true] %s37
      %40 = dma.hbm_to_vmem [thread:$0]  %s2, 64, %s38, [#allocation9]
    $region13: #{_lambda_.1} parent=1 // pred_fallthru
      _
    // Predicated region
    $region14: #{_lambda_.1} parent=1 // pred_check
      _
    $region15: #{_lambda_.1} parent=1 // pred_check_branch
      %42 = sbr.rel (0) target = $region17
    $region16: #{_lambda_.1} parent=1 // pred_region
      %s44 = ssub.s32 16, 16
      %45 = vsyncadd [#allocation9], %s44
      %s47 = sshll.u32 [#allocation10], 4
      %s48 = int_to_ptr.vmem [resolvable:$true] %s47
      %50 = dma.hbm_to_vmem [thread:$0]  %s3, 16, %s48, [#allocation9]
    $region17: #{_lambda_.1} parent=1 // pred_fallthru
      _
    // Predicated region
    $region18: #{_lambda_.1} parent=1 // pred_check
      _
    $region19: #{_lambda_.1} parent=1 // pred_check_branch
      %52 = sbr.rel (0) target = $region21
    $region20: #{_lambda_.1} parent=1 // pred_region
      %s54 = ssub.s32 128, 128
      %55 = vsyncadd [#allocation12], %s54
      %s57 = sshll.u32 [#allocation11], 4
      %s58 = int_to_ptr.vmem [resolvable:$true] %s57
      %60 = dma.hbm_to_vmem [thread:$0]  %s4, 128, %s58, [#allocation12]
    $region21: #{_lambda_.1} parent=1 // pred_fallthru
      _
    // Predicated region
    $region22: #{_lambda_.1} parent=1 // pred_check
      _
    $region23: #{_lambda_.1} parent=1 // pred_check_branch
      %62 = sbr.rel (0) target = $region25
    $region24: #{_lambda_.1} parent=1 // pred_region
      %s64 = ssub.s32 16, 16
      %65 = vsyncadd [#allocation12], %s64
      %s67 = sshll.u32 [#allocation13], 4
      %s68 = int_to_ptr.vmem [resolvable:$true] %s67
      %70 = dma.hbm_to_vmem [thread:$0]  %s5, 16, %s68, [#allocation12]
    $region25: #{_lambda_.1} parent=1 // pred_fallthru
      _
    // Predicated region
    $region26: #{_lambda_.1} parent=1 // pred_check
      _
    $region27: #{_lambda_.1} parent=1 // pred_check_branch
      %72 = sbr.rel (0) target = $region29
    $region28: #{_lambda_.1} parent=1 // pred_region
      %73 = dma.done [#allocation6], 2048
    $region29: #{_lambda_.1} parent=1 // pred_fallthru
      _
    // Predicated region
    $region30: #{_lambda_.1} parent=1 // pred_check
      _
    $region31: #{_lambda_.1} parent=1 // pred_check_branch
      %75 = sbr.rel (0) target = $region33
    $region32: #{_lambda_.1} parent=1 // pred_region
      %76 = dma.done [#allocation9], 64
    $region33: #{_lambda_.1} parent=1 // pred_fallthru
      _
    // Predicated region
    $region34: #{_lambda_.1} parent=1 // pred_check
      _
    $region35: #{_lambda_.1} parent=1 // pred_check_branch
      %78 = sbr.rel (0) target = $region37
    $region36: #{_lambda_.1} parent=1 // pred_region
      %79 = dma.done [#allocation9], 16
    $region37: #{_lambda_.1} parent=1 // pred_fallthru
      _
    // Predicated region
    $region38: #{_lambda_.1} parent=1 // pred_check
      _
    $region39: #{_lambda_.1} parent=1 // pred_check_branch
      %81 = sbr.rel (0) target = $region41
    $region40: #{_lambda_.1} parent=1 // pred_region
      %82 = dma.done [#allocation12], 128
    $region41: #{_lambda_.1} parent=1 // pred_fallthru
      _
    // Predicated region
    $region42: #{_lambda_.1} parent=1 // pred_check
      _
    $region43: #{_lambda_.1} parent=1 // pred_check_branch
      %84 = sbr.rel (0) target = $region45
    $region44: #{_lambda_.1} parent=1 // pred_region
      %85 = dma.done [#allocation12], 16
    $region45: #{_lambda_.1} parent=1 // pred_fallthru
      _
    %s88 = sshll.u32 1, 14
    %s89 = sxor.u32 4294967295, %s88
    %s91 = sld [smem:[#allocation0]]
    %s92 = sadd.s32 2, %s91
    %s94 = sshll.u32 7, 26
    %s95 = sxor.u32 4294967295, %s94
    %s96 = sand.u32 0, %s95
    %s97 = sshll.u32 %s92, 26
    %s98 = sor.u32 %s96, %s97
    %s99 = sshll.u32 [#allocation2], 4
    %s100 = int_to_ptr.vmem [resolvable:$true] %s99
    %103 = sst [smem:[#allocation16]] 1024
    %s104 = scalar_lea.smem [#allocation16], 1
    %105 = sst [smem:[%s104]] 1024
    %s106 = scalar_lea.smem [#allocation16], 2
    %107 = sst [smem:[%s106]] 8
    %s108 = scalar_lea.smem [#allocation16], 3
    %109 = sst [smem:[%s108]] 64
    %s110 = scalar_lea.smem [#allocation16], 4
    %111 = sst [smem:[%s110]] 128
    %s112 = scalar_lea.smem [#allocation16], 5
    %113 = sst [smem:[%s112]] 2
    %s114 = scalar_lea.smem [#allocation16], 6
    %115 = sst [smem:[%s114]] 512
    %s116 = scalar_lea.smem [#allocation16], 7
    %117 = sst [smem:[%s116]] 64
    %s118 = scalar_lea.smem [#allocation16], 8
    %119 = sst [smem:[%s118]] 4
    %121 = dma.general %s6, 32768, %s100, [#allocation4], [#allocation15], [#allocation16], %s98, 0
    %s122 = scalar_lea.hbm %s6, 32768
    %s123 = scalar_lea.vmem [#allocation2], 2048
    %s124 = scalar_lea.sflag [#allocation4], 1
    %s126 = sshll.u32 1, 14
    %s127 = sxor.u32 4294967295, %s126
    %s129 = sadd.s32 2, %s91
    %s131 = sshll.u32 7, 26
    %s132 = sxor.u32 4294967295, %s131
    %s133 = sand.u32 0, %s132
    %s134 = sshll.u32 %s129, 26
    %s135 = sor.u32 %s133, %s134
    %s136 = sshll.u32 %s123, 4
    %s137 = int_to_ptr.vmem [resolvable:$true] %s136
    %140 = sst [smem:[#allocation18]] 1024
    %s141 = scalar_lea.smem [#allocation18], 1
    %142 = sst [smem:[%s141]] 1024
    %s143 = scalar_lea.smem [#allocation18], 2
    %144 = sst [smem:[%s143]] 8
    %s145 = scalar_lea.smem [#allocation18], 3
    %146 = sst [smem:[%s145]] 64
    %s147 = scalar_lea.smem [#allocation18], 4
    %148 = sst [smem:[%s147]] 128
    %s149 = scalar_lea.smem [#allocation18], 5
    %150 = sst [smem:[%s149]] 2
    %s151 = scalar_lea.smem [#allocation18], 6
    %152 = sst [smem:[%s151]] 512
    %s153 = scalar_lea.smem [#allocation18], 7
    %154 = sst [smem:[%s153]] 64
    %s155 = scalar_lea.smem [#allocation18], 8
    %156 = sst [smem:[%s155]] 4
    %158 = dma.general %s122, 32768, %s137, %s124, [#allocation17], [#allocation18], %s135, 0
    %s159 = scalar_lea.hbm %s6, 65536
    %s160 = scalar_lea.vmem [#allocation2], 4096
    %s161 = scalar_lea.sflag [#allocation4], 2
    %s163 = sshll.u32 1, 14
    %s164 = sxor.u32 4294967295, %s163
    %s166 = sadd.s32 2, %s91
    %s168 = sshll.u32 7, 26
    %s169 = sxor.u32 4294967295, %s168
    %s170 = sand.u32 0, %s169
    %s171 = sshll.u32 %s166, 26
    %s172 = sor.u32 %s170, %s171
    %s173 = sshll.u32 %s160, 4
    %s174 = int_to_ptr.vmem [resolvable:$true] %s173
    %177 = sst [smem:[#allocation20]] 1024
    %s178 = scalar_lea.smem [#allocation20], 1
    %179 = sst [smem:[%s178]] 1024
    %s180 = scalar_lea.smem [#allocation20], 2
    %181 = sst [smem:[%s180]] 8
    %s182 = scalar_lea.smem [#allocation20], 3
    %183 = sst [smem:[%s182]] 64
    %s184 = scalar_lea.smem [#allocation20], 4
    %185 = sst [smem:[%s184]] 128
    %s186 = scalar_lea.smem [#allocation20], 5
    %187 = sst [smem:[%s186]] 2
    %s188 = scalar_lea.smem [#allocation20], 6
    %189 = sst [smem:[%s188]] 512
    %s190 = scalar_lea.smem [#allocation20], 7
    %191 = sst [smem:[%s190]] 64
    %s192 = scalar_lea.smem [#allocation20], 8
    %193 = sst [smem:[%s192]] 4
    %195 = dma.general %s159, 32768, %s174, %s161, [#allocation19], [#allocation20], %s172, 0
    %s196 = scalar_lea.hbm %s6, 98304
    %s197 = scalar_lea.vmem [#allocation2], 6144
    %s198 = scalar_lea.sflag [#allocation4], 3
    %s200 = sshll.u32 1, 14
    %s201 = sxor.u32 4294967295, %s200
    %s203 = sadd.s32 2, %s91
    %s205 = sshll.u32 7, 26
    %s206 = sxor.u32 4294967295, %s205
    %s207 = sand.u32 0, %s206
    %s208 = sshll.u32 %s203, 26
    %s209 = sor.u32 %s207, %s208
    %s210 = sshll.u32 %s197, 4
    %s211 = int_to_ptr.vmem [resolvable:$true] %s210
    %214 = sst [smem:[#allocation22]] 1024
    %s215 = scalar_lea.smem [#allocation22], 1
    %216 = sst [smem:[%s215]] 1024
    %s217 = scalar_lea.smem [#allocation22], 2
    %218 = sst [smem:[%s217]] 8
    %s219 = scalar_lea.smem [#allocation22], 3
    %220 = sst [smem:[%s219]] 64
    %s221 = scalar_lea.smem [#allocation22], 4
    %222 = sst [smem:[%s221]] 128
    %s223 = scalar_lea.smem [#allocation22], 5
    %224 = sst [smem:[%s223]] 2
    %s225 = scalar_lea.smem [#allocation22], 6
    %226 = sst [smem:[%s225]] 512
    %s227 = scalar_lea.smem [#allocation22], 7
    %228 = sst [smem:[%s227]] 64
    %s229 = scalar_lea.smem [#allocation22], 8
    %230 = sst [smem:[%s229]] 4
    %232 = dma.general %s196, 32768, %s211, %s198, [#allocation21], [#allocation22], %s209, 0
    %s233 = scalar_lea.sflag [#allocation4], 4
    // Predicated region
    $region46: #{_lambda_.1} parent=1 // pred_check
      _
    $region47: #{_lambda_.1} parent=1 // pred_check_branch
      %235 = sbr.rel target = $region49
    $region48: #{_lambda_.1} parent=1 // pred_region
      %236 = sst [smem:[#allocation25]] [#allocation24]
      %237 = sst [smem:[#allocation26]] [#allocation23]
    $region49: #{_lambda_.1} parent=1 // pred_fallthru
      _
    %239 = shalt.err (0)
    %s241 = sshll.u32 [#allocation3], 4
    %s242 = int_to_ptr.vmem [resolvable:$true] %s241
    %244 = dma.hbm_to_vmem [thread:$0]  %s7, 8192, %s242, %s233
    %v245 = vld [vmem:[#allocation5] sm:$0xff]
    %v246 = vld [vmem:[#allocation5 + $0x8] sm:$0xff]
    %v247 = vld [vmem:[#allocation5 + $0x10] sm:$0xff]
    %v248 = vld [vmem:[#allocation5 + $0x18] sm:$0xff]
    %v249 = vld [vmem:[#allocation5 + $0x20] sm:$0xff]
    %v250 = vld [vmem:[#allocation5 + $0x28] sm:$0xff]
    %v251 = vld [vmem:[#allocation5 + $0x30] sm:$0xff]
    %v252 = vld [vmem:[#allocation5 + $0x38] sm:$0xff]
    %v253 = vld [vmem:[#allocation5 + $0x40] sm:$0xff]
    %v254 = vld [vmem:[#allocation5 + $0x48] sm:$0xff]
    %v255 = vld [vmem:[#allocation5 + $0x50] sm:$0xff]
    %v256 = vld [vmem:[#allocation5 + $0x58] sm:$0xff]
    %v257 = vld [vmem:[#allocation5 + $0x60] sm:$0xff]
    %v258 = vld [vmem:[#allocation5 + $0x68] sm:$0xff]
    %v259 = vld [vmem:[#allocation5 + $0x70] sm:$0xff]
    %v260 = vld [vmem:[#allocation5 + $0x78] sm:$0xff]
    %v261 = vld [vmem:[%s0] sm:$0xff]
    %v262 = vld [vmem:[%s0 + $0x8] sm:$0xff]
    %v263 = vld [vmem:[%s0 + $0x10] sm:$0xff]
    %v264 = vld [vmem:[%s0 + $0x18] sm:$0xff]
    %v265 = vld [vmem:[%s0 + $0x20] sm:$0xff]
    %v266 = vld [vmem:[%s0 + $0x28] sm:$0xff]
    %v267 = vld [vmem:[%s0 + $0x30] sm:$0xff]
    %v268 = vld [vmem:[%s0 + $0x38] sm:$0xff]
    %v269 = vld [vmem:[%s0 + $0x40] sm:$0xff]
    %v270 = vld [vmem:[%s0 + $0x48] sm:$0xff]
    %v271 = vld [vmem:[%s0 + $0x50] sm:$0xff]
    %v272 = vld [vmem:[%s0 + $0x58] sm:$0xff]
    %v273 = vld [vmem:[%s0 + $0x60] sm:$0xff]
    %v274 = vld [vmem:[%s0 + $0x68] sm:$0xff]
    %v275 = vld [vmem:[%s0 + $0x70] sm:$0xff]
    %v276 = vld [vmem:[%s0 + $0x78] sm:$0xff]
    %v277 = vld [vmem:[%s0 + $0x80] sm:$0xff]
    %v278 = vld [vmem:[%s0 + $0x88] sm:$0xff]
    %v279 = vld [vmem:[%s0 + $0x90] sm:$0xff]
    %v280 = vld [vmem:[%s0 + $0x98] sm:$0xff]
    %v281 = vld [vmem:[%s0 + $0xa0] sm:$0xff]
    %v282 = vld [vmem:[%s0 + $0xa8] sm:$0xff]
    %v283 = vld [vmem:[%s0 + $0xb0] sm:$0xff]
    %v284 = vld [vmem:[%s0 + $0xb8] sm:$0xff]
    %v285 = vld [vmem:[%s0 + $0xc0] sm:$0xff]
    %v286 = vld [vmem:[%s0 + $0xc8] sm:$0xff]
    %v287 = vld [vmem:[%s0 + $0xd0] sm:$0xff]
    %v288 = vld [vmem:[%s0 + $0xd8] sm:$0xff]
    %v289 = vld [vmem:[%s0 + $0xe0] sm:$0xff]
    %v290 = vld [vmem:[%s0 + $0xe8] sm:$0xff]
    %v291 = vld [vmem:[%s0 + $0xf0] sm:$0xff]
    %v292 = vld [vmem:[%s0 + $0xf8] sm:$0xff]
    %v293 = vld [vmem:[%s0 + $0x100] sm:$0xff]
    %v294 = vld [vmem:[%s0 + $0x108] sm:$0xff]
    %v295 = vld [vmem:[%s0 + $0x110] sm:$0xff]
    %v296 = vld [vmem:[%s0 + $0x118] sm:$0xff]
    %v297 = vld [vmem:[%s0 + $0x120] sm:$0xff]
    %v298 = vld [vmem:[%s0 + $0x128] sm:$0xff]
    %v299 = vld [vmem:[%s0 + $0x130] sm:$0xff]
    %v300 = vld [vmem:[%s0 + $0x138] sm:$0xff]
    %v301 = vld [vmem:[%s0 + $0x140] sm:$0xff]
    %v302 = vld [vmem:[%s0 + $0x148] sm:$0xff]
    %v303 = vld [vmem:[%s0 + $0x150] sm:$0xff]
    %v304 = vld [vmem:[%s0 + $0x158] sm:$0xff]
    %v305 = vld [vmem:[%s0 + $0x160] sm:$0xff]
    %v306 = vld [vmem:[%s0 + $0x168] sm:$0xff]
    %v307 = vld [vmem:[%s0 + $0x170] sm:$0xff]
    %v308 = vld [vmem:[%s0 + $0x178] sm:$0xff]
    %v309 = vld [vmem:[%s0 + $0x180] sm:$0xff]
    %v310 = vld [vmem:[%s0 + $0x188] sm:$0xff]
    %v311 = vld [vmem:[%s0 + $0x190] sm:$0xff]
    %v312 = vld [vmem:[%s0 + $0x198] sm:$0xff]
    %v313 = vld [vmem:[%s0 + $0x1a0] sm:$0xff]
    %v314 = vld [vmem:[%s0 + $0x1a8] sm:$0xff]
    %v315 = vld [vmem:[%s0 + $0x1b0] sm:$0xff]
    %v316 = vld [vmem:[%s0 + $0x1b8] sm:$0xff]
    %v317 = vld [vmem:[%s0 + $0x1c0] sm:$0xff]
    %v318 = vld [vmem:[%s0 + $0x1c8] sm:$0xff]
    %v319 = vld [vmem:[%s0 + $0x1d0] sm:$0xff]
    %v320 = vld [vmem:[%s0 + $0x1d8] sm:$0xff]
    %v321 = vld [vmem:[%s0 + $0x1e0] sm:$0xff]
    %v322 = vld [vmem:[%s0 + $0x1e8] sm:$0xff]
    %v323 = vld [vmem:[%s0 + $0x1f0] sm:$0xff]
    %v324 = vld [vmem:[%s0 + $0x1f8] sm:$0xff]
    %325 = vmatprep.subr.mxu0 0.0
    %326 = vmatpush1.msra.mxu0 %v261
    %327 = vmatprep.subr.mxu0 0.0
    %328 = vmatpush1.msra.mxu0 %v262
    %329 = vmatprep.subr.mxu0 0.0
    %330 = vmatpush1.msra.mxu0 %v263
    %331 = vmatprep.subr.mxu0 0.0
    %332 = vmatpush1.msra.mxu0 %v264
    %333 = vmatprep.subr.mxu0 0.0
    %334 = vmatpush1.msra.mxu0 %v265
    %335 = vmatprep.subr.mxu0 0.0
    %336 = vmatpush1.msra.mxu0 %v266
    %337 = vmatprep.subr.mxu0 0.0
    %338 = vmatpush1.msra.mxu0 %v267
    %339 = vmatprep.subr.mxu0 0.0
    %340 = vmatpush1.msra.mxu0 %v268
    %341 = vmatprep.subr.mxu0 0.0
    %342 = vmatpush1.msra.mxu0 %v269
    %343 = vmatprep.subr.mxu0 0.0
    %344 = vmatpush1.msra.mxu0 %v270
    %345 = vmatprep.subr.mxu0 0.0
    %346 = vmatpush1.msra.mxu0 %v271
    %347 = vmatprep.subr.mxu0 0.0
    %348 = vmatpush1.msra.mxu0 %v272
    %349 = vmatprep.subr.mxu0 0.0
    %350 = vmatpush1.msra.mxu0 %v273
    %351 = vmatprep.subr.mxu0 0.0
    %352 = vmatpush1.msra.mxu0 %v274
    %353 = vmatprep.subr.mxu0 0.0
    %354 = vmatpush1.msra.mxu0 %v275
    %355 = vmatprep.subr.mxu0 0.0
    %356 = vmatpush1.msra.mxu0 %v276
    %357 = vmatprep.subr.mxu0 0.0
    %358 = vmatpush1.msra.mxu0 %v277
    %359 = vmatprep.subr.mxu0 0.0
    %360 = vmatpush1.msra.mxu0 %v278
    %361 = vmatprep.subr.mxu0 0.0
    %362 = vmatpush1.msra.mxu0 %v279
    %363 = vmatprep.subr.mxu0 0.0
    %364 = vmatpush1.msra.mxu0 %v280
    %365 = vmatprep.subr.mxu0 0.0
    %366 = vmatpush1.msra.mxu0 %v281
    %367 = vmatprep.subr.mxu0 0.0
    %368 = vmatpush1.msra.mxu0 %v282
    %369 = vmatprep.subr.mxu0 0.0
    %370 = vmatpush1.msra.mxu0 %v283
    %371 = vmatprep.subr.mxu0 0.0
    %372 = vmatpush1.msra.mxu0 %v284
    %373 = vmatprep.subr.mxu0 0.0
    %374 = vmatpush1.msra.mxu0 %v285
    %375 = vmatprep.subr.mxu0 0.0
    %376 = vmatpush1.msra.mxu0 %v286
    %377 = vmatprep.subr.mxu0 0.0
    %378 = vmatpush1.msra.mxu0 %v287
    %379 = vmatprep.subr.mxu0 0.0
    %380 = vmatpush1.msra.mxu0 %v288
    %381 = vmatprep.subr.mxu0 0.0
    %382 = vmatpush1.msra.mxu0 %v289
    %383 = vmatprep.subr.mxu0 0.0
    %384 = vmatpush1.msra.mxu0 %v290
    %385 = vmatprep.subr.mxu0 0.0
    %386 = vmatpush1.msra.mxu0 %v291
    %387 = vmatprep.subr.mxu0 0.0
    %388 = vmatpush1.msra.mxu0 %v292
    %389 = vmatprep.mubr.f32.mxu0 %v246
    %390 = vmatmul.mubr.f32.gmra.mrb[0].mxu0 %v245
    %v391 = vpop.f32.mrb[0].mxu0
    %v392 = vadd.f32 0.0, %v391
    %v393 = vpop.f32.mrb[0].mxu0
    %394 = vmatprep.mubr.f32.mxu0 %v250
    %395 = vmatmul.mubr.f32.gmra.mrb[0].mxu0 %v249
    %v396 = vpop.f32.mrb[0].mxu0
    %v397 = vadd.f32 0.0, %v396
    %v398 = vpop.f32.mrb[0].mxu0
    %399 = vmatprep.mubr.f32.mxu0 %v254
    %400 = vmatmul.mubr.f32.gmra.mrb[0].mxu0 %v253
    %v401 = vpop.f32.mrb[0].mxu0
    %v402 = vadd.f32 0.0, %v401
    %v403 = vpop.f32.mrb[0].mxu0
    %404 = vmatprep.mubr.f32.mxu0 %v258
    %405 = vmatmul.mubr.f32.gmra.mrb[0].mxu0 %v257
    %v406 = vpop.f32.mrb[0].mxu0
    %v407 = vadd.f32 0.0, %v406
    %v408 = vpop.f32.mrb[0].mxu0
    %409 = vdwg.mxu0
    %410 = vmatprep.subr.mxu0 0.0
    %411 = vmatpush1.msra.mxu0 %v293
    %412 = vmatprep.subr.mxu0 0.0
    %413 = vmatpush1.msra.mxu0 %v294
    %414 = vmatprep.subr.mxu0 0.0
    %415 = vmatpush1.msra.mxu0 %v295
    %416 = vmatprep.subr.mxu0 0.0
    %417 = vmatpush1.msra.mxu0 %v296
    %418 = vmatprep.subr.mxu0 0.0
    %419 = vmatpush1.msra.mxu0 %v297
    %420 = vmatprep.subr.mxu0 0.0
    %421 = vmatpush1.msra.mxu0 %v298
    %422 = vmatprep.subr.mxu0 0.0
    %423 = vmatpush1.msra.mxu0 %v299
    %424 = vmatprep.subr.mxu0 0.0
    %425 = vmatpush1.msra.mxu0 %v300
    %426 = vmatprep.subr.mxu0 0.0
    %427 = vmatpush1.msra.mxu0 %v301
    %428 = vmatprep.subr.mxu0 0.0
    %429 = vmatpush1.msra.mxu0 %v302
    %430 = vmatprep.subr.mxu0 0.0
    %431 = vmatpush1.msra.mxu0 %v303
    %432 = vmatprep.subr.mxu0 0.0
    %433 = vmatpush1.msra.mxu0 %v304
    %434 = vmatprep.subr.mxu0 0.0
    %435 = vmatpush1.msra.mxu0 %v305
    %436 = vmatprep.subr.mxu0 0.0
    %437 = vmatpush1.msra.mxu0 %v306
    %438 = vmatprep.subr.mxu0 0.0
    %439 = vmatpush1.msra.mxu0 %v307
    %440 = vmatprep.subr.mxu0 0.0
    %441 = vmatpush1.msra.mxu0 %v308
    %442 = vmatprep.subr.mxu0 0.0
    %443 = vmatpush1.msra.mxu0 %v309
    %444 = vmatprep.subr.mxu0 0.0
    %445 = vmatpush1.msra.mxu0 %v310
    %446 = vmatprep.subr.mxu0 0.0
    %447 = vmatpush1.msra.mxu0 %v311
    %448 = vmatprep.subr.mxu0 0.0
    %449 = vmatpush1.msra.mxu0 %v312
    %450 = vmatprep.subr.mxu0 0.0
    %451 = vmatpush1.msra.mxu0 %v313
    %452 = vmatprep.subr.mxu0 0.0
    %453 = vmatpush1.msra.mxu0 %v314
    %454 = vmatprep.subr.mxu0 0.0
    %455 = vmatpush1.msra.mxu0 %v315
    %456 = vmatprep.subr.mxu0 0.0
    %457 = vmatpush1.msra.mxu0 %v316
    %458 = vmatprep.subr.mxu0 0.0
    %459 = vmatpush1.msra.mxu0 %v317
    %460 = vmatprep.subr.mxu0 0.0
    %461 = vmatpush1.msra.mxu0 %v318
    %462 = vmatprep.subr.mxu0 0.0
    %463 = vmatpush1.msra.mxu0 %v319
    %464 = vmatprep.subr.mxu0 0.0
    %465 = vmatpush1.msra.mxu0 %v320
    %466 = vmatprep.subr.mxu0 0.0
    %467 = vmatpush1.msra.mxu0 %v321
    %468 = vmatprep.subr.mxu0 0.0
    %469 = vmatpush1.msra.mxu0 %v322
    %470 = vmatprep.subr.mxu0 0.0
    %471 = vmatpush1.msra.mxu0 %v323
    %472 = vmatprep.subr.mxu0 0.0
    %473 = vmatpush1.msra.mxu0 %v324
    %474 = vmatprep.mubr.f32.mxu0 %v248
    %475 = vmatmul.mubr.f32.gmra.mrb[0].mxu0 %v247
    %v476 = vpop.f32.mrb[0].mxu0
    %v477 = vadd.f32 %v392, %v476
    %v478 = vpop.f32.mrb[0].mxu0
    %479 = vmatprep.mubr.f32.mxu0 %v252
    %480 = vmatmul.mubr.f32.gmra.mrb[0].mxu0 %v251
    %v481 = vpop.f32.mrb[0].mxu0
    %v482 = vadd.f32 %v397, %v481
    %v483 = vpop.f32.mrb[0].mxu0
    %484 = vmatprep.mubr.f32.mxu0 %v256
    %485 = vmatmul.mubr.f32.gmra.mrb[0].mxu0 %v255
    %v486 = vpop.f32.mrb[0].mxu0
    %v487 = vadd.f32 %v402, %v486
    %v488 = vpop.f32.mrb[0].mxu0
    %489 = vmatprep.mubr.f32.mxu0 %v260
    %490 = vmatmul.mubr.f32.gmra.mrb[0].mxu0 %v259
    %v491 = vpop.f32.mrb[0].mxu0
    %v492 = vadd.f32 %v407, %v491
    %v493 = vpop.f32.mrb[0].mxu0
    %494 = vdwg.mxu0
    %v495 = vld [vmem:[#allocation8] sm:$0xf]
    %v496 = vld [vmem:[#allocation10] sm:$0x1]
    %v498 = vlaneseq
    %v499 = vshrl.u32 %v498, 7
    %v500 = vsub.s32 0, %v499
    %v501 = vrot.slane %v496, %v500
    %vm503 = vcmask 31744
    %v505 = vsel %vm503, %v477, 0
    %v508 = vsel %vm503, %v482, 0
    %v511 = vsel %vm503, %v487, 0
    %v514 = vsel %vm503, %v492, 0
    %vm516 = vcmask 1043456
    %v518 = vsel %vm516, %v495, 0
    %520 = vmatprep.subr.mxu0 0.0
    %521 = vmatpush1.msra.mxu0 %v518
    %522 = vmatprep.subr.mxu0 0.0
    %523 = vmatpush1.msra.mxu0 0.0
    %524 = vmatprep.subr.mxu0 0.0
    %525 = vmatpush1.msra.mxu0 0.0
    %526 = vmatprep.subr.mxu0 0.0
    %527 = vmatpush1.msra.mxu0 0.0
    %528 = vmatprep.subr.mxu0 0.0
    %529 = vmatpush1.msra.mxu0 0.0
    %530 = vmatprep.subr.mxu0 0.0
    %531 = vmatpush1.msra.mxu0 0.0
    %532 = vmatprep.subr.mxu0 0.0
    %533 = vmatpush1.msra.mxu0 0.0
    %534 = vmatprep.subr.mxu0 0.0
    %535 = vmatpush1.msra.mxu0 0.0
    %536 = vmatprep.subr.mxu0 0.0
    %537 = vmatpush1.msra.mxu0 0.0
    %538 = vmatprep.subr.mxu0 0.0
    %539 = vmatpush1.msra.mxu0 0.0
    %540 = vmatprep.subr.mxu0 0.0
    %541 = vmatpush1.msra.mxu0 0.0
    %542 = vmatprep.subr.mxu0 0.0
    %543 = vmatpush1.msra.mxu0 0.0
    %544 = vmatprep.subr.mxu0 0.0
    %545 = vmatpush1.msra.mxu0 0.0
    %546 = vmatprep.subr.mxu0 0.0
    %547 = vmatpush1.msra.mxu0 0.0
    %548 = vmatprep.subr.mxu0 0.0
    %549 = vmatpush1.msra.mxu0 0.0
    %550 = vmatprep.subr.mxu0 0.0
    %551 = vmatpush1.msra.mxu0 0.0
    %552 = vmatprep.subr.mxu0 0.0
    %553 = vmatpush1.msra.mxu0 0.0
    %554 = vmatprep.subr.mxu0 0.0
    %555 = vmatpush1.msra.mxu0 0.0
    %556 = vmatprep.subr.mxu0 0.0
    %557 = vmatpush1.msra.mxu0 0.0
    %558 = vmatprep.subr.mxu0 0.0
    %559 = vmatpush1.msra.mxu0 0.0
    %560 = vmatprep.subr.mxu0 0.0
    %561 = vmatpush1.msra.mxu0 0.0
    %562 = vmatprep.subr.mxu0 0.0
    %563 = vmatpush1.msra.mxu0 0.0
    %564 = vmatprep.subr.mxu0 0.0
    %565 = vmatpush1.msra.mxu0 0.0
    %566 = vmatprep.subr.mxu0 0.0
    %567 = vmatpush1.msra.mxu0 0.0
    %568 = vmatprep.subr.mxu0 0.0
    %569 = vmatpush1.msra.mxu0 0.0
    %570 = vmatprep.subr.mxu0 0.0
    %571 = vmatpush1.msra.mxu0 0.0
    %572 = vmatprep.subr.mxu0 0.0
    %573 = vmatpush1.msra.mxu0 0.0
    %574 = vmatprep.subr.mxu0 0.0
    %575 = vmatpush1.msra.mxu0 0.0
    %576 = vmatprep.subr.mxu0 0.0
    %577 = vmatpush1.msra.mxu0 0.0
    %578 = vmatprep.subr.mxu0 0.0
    %579 = vmatpush1.msra.mxu0 0.0
    %580 = vmatprep.subr.mxu0 0.0
    %581 = vmatpush1.msra.mxu0 0.0
    %582 = vmatprep.subr.mxu0 0.0
    %583 = vmatpush1.msra.mxu0 0.0
    %584 = vmatprep.mubr.f32.mxu0 0.0
    %585 = vmatmul.mubr.f32.gmra.mrb[0].mxu0 %v505
    %v586 = vpop.f32.mrb[0].mxu0
    %v587 = vadd.f32 %v501, %v586
    %v588 = vpop.f32.mrb[0].mxu0
    %589 = vmatprep.mubr.f32.mxu0 0.0
    %590 = vmatmul.mubr.f32.gmra.mrb[0].mxu0 %v508
    %v591 = vpop.f32.mrb[0].mxu0
    %v592 = vadd.f32 %v501, %v591
    %v593 = vpop.f32.mrb[0].mxu0
    %594 = vmatprep.mubr.f32.mxu0 0.0
    %595 = vmatmul.mubr.f32.gmra.mrb[0].mxu0 %v511
    %v596 = vpop.f32.mrb[0].mxu0
    %v597 = vadd.f32 %v501, %v596
    %v598 = vpop.f32.mrb[0].mxu0
    %599 = vmatprep.mubr.f32.mxu0 0.0
    %600 = vmatmul.mubr.f32.gmra.mrb[0].mxu0 %v514
    %v601 = vpop.f32.mrb[0].mxu0
    %v602 = vadd.f32 %v501, %v601
    %v603 = vpop.f32.mrb[0].mxu0
    %604 = vdwg.mxu0
    %v605 = vmax.f32 %v587, 0.0
    %v606 = vmax.f32 %v592, 0.0
    %v607 = vmax.f32 %v597, 0.0
    %v608 = vmax.f32 %v602, 0.0
    %v609 = vpack.c.bf16 %v606, %v605
    %v610 = vpack.c.bf16 %v608, %v607
    %s611 = smul.u32 4, 4
    %s612 = smul.u32 %s611, 16
    %s613 = smul.u32 %s612, 8
    %s614 = sshll.u32 %s613, 4
    %615 = dma.done [#allocation4], %s614
    %v616 = vld [vmem:[#allocation2] sm:$0xff]
    %v617 = vld [vmem:[#allocation2 + $0x8] sm:$0xff]
    %v618 = vld [vmem:[#allocation2 + $0x10] sm:$0xff]
    %v619 = vld [vmem:[#allocation2 + $0x18] sm:$0xff]
    %v620 = vld [vmem:[#allocation2 + $0x20] sm:$0xff]
    %v621 = vld [vmem:[#allocation2 + $0x28] sm:$0xff]
    %v622 = vld [vmem:[#allocation2 + $0x30] sm:$0xff]
    %v623 = vld [vmem:[#allocation2 + $0x38] sm:$0xff]
    %v624 = vld [vmem:[#allocation2 + $0x40] sm:$0xff]
    %v625 = vld [vmem:[#allocation2 + $0x48] sm:$0xff]
    %v626 = vld [vmem:[#allocation2 + $0x50] sm:$0xff]
    %v627 = vld [vmem:[#allocation2 + $0x58] sm:$0xff]
    %v628 = vld [vmem:[#allocation2 + $0x60] sm:$0xff]
    %v629 = vld [vmem:[#allocation2 + $0x68] sm:$0xff]
    %v630 = vld [vmem:[#allocation2 + $0x70] sm:$0xff]
    %v631 = vld [vmem:[#allocation2 + $0x78] sm:$0xff]
    %v632 = vld [vmem:[#allocation2 + $0x80] sm:$0xff]
    %v633 = vld [vmem:[#allocation2 + $0x88] sm:$0xff]
    %v634 = vld [vmem:[#allocation2 + $0x90] sm:$0xff]
    %v635 = vld [vmem:[#allocation2 + $0x98] sm:$0xff]
    %v636 = vld [vmem:[#allocation2 + $0xa0] sm:$0xff]
    %v637 = vld [vmem:[#allocation2 + $0xa8] sm:$0xff]
    %v638 = vld [vmem:[#allocation2 + $0xb0] sm:$0xff]
    %v639 = vld [vmem:[#allocation2 + $0xb8] sm:$0xff]
    %v640 = vld [vmem:[#allocation2 + $0xc0] sm:$0xff]
    %v641 = vld [vmem:[#allocation2 + $0xc8] sm:$0xff]
    %v642 = vld [vmem:[#allocation2 + $0xd0] sm:$0xff]
    %v643 = vld [vmem:[#allocation2 + $0xd8] sm:$0xff]
    %v644 = vld [vmem:[#allocation2 + $0xe0] sm:$0xff]
    %v645 = vld [vmem:[#allocation2 + $0xe8] sm:$0xff]
    %v646 = vld [vmem:[#allocation2 + $0xf0] sm:$0xff]
    %v647 = vld [vmem:[#allocation2 + $0xf8] sm:$0xff]
    %v648 = vld [vmem:[#allocation2 + $0x100] sm:$0xff]
    %v649 = vld [vmem:[#allocation2 + $0x108] sm:$0xff]
    %v650 = vld [vmem:[#allocation2 + $0x110] sm:$0xff]
    %v651 = vld [vmem:[#allocation2 + $0x118] sm:$0xff]
    %v652 = vld [vmem:[#allocation2 + $0x120] sm:$0xff]
    %v653 = vld [vmem:[#allocation2 + $0x128] sm:$0xff]
    %v654 = vld [vmem:[#allocation2 + $0x130] sm:$0xff]
    %v655 = vld [vmem:[#allocation2 + $0x138] sm:$0xff]
    %v656 = vld [vmem:[#allocation2 + $0x140] sm:$0xff]
    %v657 = vld [vmem:[#allocation2 + $0x148] sm:$0xff]
    %v658 = vld [vmem:[#allocation2 + $0x150] sm:$0xff]
    %v659 = vld [vmem:[#allocation2 + $0x158] sm:$0xff]
    %v660 = vld [vmem:[#allocation2 + $0x160] sm:$0xff]
    %v661 = vld [vmem:[#allocation2 + $0x168] sm:$0xff]
    %v662 = vld [vmem:[#allocation2 + $0x170] sm:$0xff]
    %v663 = vld [vmem:[#allocation2 + $0x178] sm:$0xff]
    %v664 = vld [vmem:[#allocation2 + $0x180] sm:$0xff]
    %v665 = vld [vmem:[#allocation2 + $0x188] sm:$0xff]
    %v666 = vld [vmem:[#allocation2 + $0x190] sm:$0xff]
    %v667 = vld [vmem:[#allocation2 + $0x198] sm:$0xff]
    %v668 = vld [vmem:[#allocation2 + $0x1a0] sm:$0xff]
    %v669 = vld [vmem:[#allocation2 + $0x1a8] sm:$0xff]
    %v670 = vld [vmem:[#allocation2 + $0x1b0] sm:$0xff]
    %v671 = vld [vmem:[#allocation2 + $0x1b8] sm:$0xff]
    %v672 = vld [vmem:[#allocation2 + $0x1c0] sm:$0xff]
    %v673 = vld [vmem:[#allocation2 + $0x1c8] sm:$0xff]
    %v674 = vld [vmem:[#allocation2 + $0x1d0] sm:$0xff]
    %v675 = vld [vmem:[#allocation2 + $0x1d8] sm:$0xff]
    %v676 = vld [vmem:[#allocation2 + $0x1e0] sm:$0xff]
    %v677 = vld [vmem:[#allocation2 + $0x1e8] sm:$0xff]
    %v678 = vld [vmem:[#allocation2 + $0x1f0] sm:$0xff]
    %v679 = vld [vmem:[#allocation2 + $0x1f8] sm:$0xff]
    %s680 = scalar_lea.vmem [#allocation2], 512
    %v681 = vld [vmem:[%s680] sm:$0xff]
    %v682 = vld [vmem:[%s680 + $0x8] sm:$0xff]
    %v683 = vld [vmem:[%s680 + $0x10] sm:$0xff]
    %v684 = vld [vmem:[%s680 + $0x18] sm:$0xff]
    %v685 = vld [vmem:[%s680 + $0x20] sm:$0xff]
    %v686 = vld [vmem:[%s680 + $0x28] sm:$0xff]
    %v687 = vld [vmem:[%s680 + $0x30] sm:$0xff]
    %v688 = vld [vmem:[%s680 + $0x38] sm:$0xff]
    %v689 = vld [vmem:[%s680 + $0x40] sm:$0xff]
    %v690 = vld [vmem:[%s680 + $0x48] sm:$0xff]
    %v691 = vld [vmem:[%s680 + $0x50] sm:$0xff]
    %v692 = vld [vmem:[%s680 + $0x58] sm:$0xff]
    %v693 = vld [vmem:[%s680 + $0x60] sm:$0xff]
    %v694 = vld [vmem:[%s680 + $0x68] sm:$0xff]
    %v695 = vld [vmem:[%s680 + $0x70] sm:$0xff]
    %v696 = vld [vmem:[%s680 + $0x78] sm:$0xff]
    %v697 = vld [vmem:[%s680 + $0x80] sm:$0xff]
    %v698 = vld [vmem:[%s680 + $0x88] sm:$0xff]
    %v699 = vld [vmem:[%s680 + $0x90] sm:$0xff]
    %v700 = vld [vmem:[%s680 + $0x98] sm:$0xff]
    %v701 = vld [vmem:[%s680 + $0xa0] sm:$0xff]
    %v702 = vld [vmem:[%s680 + $0xa8] sm:$0xff]
    %v703 = vld [vmem:[%s680 + $0xb0] sm:$0xff]
    %v704 = vld [vmem:[%s680 + $0xb8] sm:$0xff]
    %v705 = vld [vmem:[%s680 + $0xc0] sm:$0xff]
    %v706 = vld [vmem:[%s680 + $0xc8] sm:$0xff]
    %v707 = vld [vmem:[%s680 + $0xd0] sm:$0xff]
    %v708 = vld [vmem:[%s680 + $0xd8] sm:$0xff]
    %v709 = vld [vmem:[%s680 + $0xe0] sm:$0xff]
    %v710 = vld [vmem:[%s680 + $0xe8] sm:$0xff]
    %v711 = vld [vmem:[%s680 + $0xf0] sm:$0xff]
    %v712 = vld [vmem:[%s680 + $0xf8] sm:$0xff]
    %v713 = vld [vmem:[%s680 + $0x100] sm:$0xff]
    %v714 = vld [vmem:[%s680 + $0x108] sm:$0xff]
    %v715 = vld [vmem:[%s680 + $0x110] sm:$0xff]
    %v716 = vld [vmem:[%s680 + $0x118] sm:$0xff]
    %v717 = vld [vmem:[%s680 + $0x120] sm:$0xff]
    %v718 = vld [vmem:[%s680 + $0x128] sm:$0xff]
    %v719 = vld [vmem:[%s680 + $0x130] sm:$0xff]
    %v720 = vld [vmem:[%s680 + $0x138] sm:$0xff]
    %v721 = vld [vmem:[%s680 + $0x140] sm:$0xff]
    %v722 = vld [vmem:[%s680 + $0x148] sm:$0xff]
    %v723 = vld [vmem:[%s680 + $0x150] sm:$0xff]
    %v724 = vld [vmem:[%s680 + $0x158] sm:$0xff]
    %v725 = vld [vmem:[%s680 + $0x160] sm:$0xff]
    %v726 = vld [vmem:[%s680 + $0x168] sm:$0xff]
    %v727 = vld [vmem:[%s680 + $0x170] sm:$0xff]
    %v728 = vld [vmem:[%s680 + $0x178] sm:$0xff]
    %v729 = vld [vmem:[%s680 + $0x180] sm:$0xff]
    %v730 = vld [vmem:[%s680 + $0x188] sm:$0xff]
    %v731 = vld [vmem:[%s680 + $0x190] sm:$0xff]
    %v732 = vld [vmem:[%s680 + $0x198] sm:$0xff]
    %v733 = vld [vmem:[%s680 + $0x1a0] sm:$0xff]
    %v734 = vld [vmem:[%s680 + $0x1a8] sm:$0xff]
    %v735 = vld [vmem:[%s680 + $0x1b0] sm:$0xff]
    %v736 = vld [vmem:[%s680 + $0x1b8] sm:$0xff]
    %v737 = vld [vmem:[%s680 + $0x1c0] sm:$0xff]
    %v738 = vld [vmem:[%s680 + $0x1c8] sm:$0xff]
    %v739 = vld [vmem:[%s680 + $0x1d0] sm:$0xff]
    %v740 = vld [vmem:[%s680 + $0x1d8] sm:$0xff]
    %v741 = vld [vmem:[%s680 + $0x1e0] sm:$0xff]
    %v742 = vld [vmem:[%s680 + $0x1e8] sm:$0xff]
    %v743 = vld [vmem:[%s680 + $0x1f0] sm:$0xff]
    %v744 = vld [vmem:[%s680 + $0x1f8] sm:$0xff]
    %v746 = vrot.slane %v609, 1
    %748 = vmatprep.subr.bf16.mxu0 %v682
    %749 = vmatpush1.bf16.msra.mxu0 %v681
    %750 = vmatprep.subr.bf16.mxu0 %v690
    %751 = vmatpush1.bf16.msra.mxu0 %v689
    %752 = vmatprep.subr.bf16.mxu0 %v698
    %753 = vmatpush1.bf16.msra.mxu0 %v697
    %754 = vmatprep.subr.bf16.mxu0 %v706
    %755 = vmatpush1.bf16.msra.mxu0 %v705
    %756 = vmatprep.subr.bf16.mxu0 %v714
    %757 = vmatpush1.bf16.msra.mxu0 %v713
    %758 = vmatprep.subr.bf16.mxu0 %v722
    %759 = vmatpush1.bf16.msra.mxu0 %v721
    %760 = vmatprep.subr.bf16.mxu0 %v730
    %761 = vmatpush1.bf16.msra.mxu0 %v729
    %762 = vmatprep.subr.bf16.mxu0 %v738
    %763 = vmatpush1.bf16.msra.mxu0 %v737
    %764 = vmatprep.subr.bf16.mxu0 0
    %765 = vmatpush1.bf16.msra.mxu0 0
    %766 = vmatprep.subr.bf16.mxu0 0
    %767 = vmatpush1.bf16.msra.mxu0 0
    %768 = vmatprep.subr.bf16.mxu0 0
    %769 = vmatpush1.bf16.msra.mxu0 0
    %770 = vmatprep.subr.bf16.mxu0 0
    %771 = vmatpush1.bf16.msra.mxu0 0
    %772 = vmatprep.subr.bf16.mxu0 0
    %773 = vmatpush1.bf16.msra.mxu0 0
    %774 = vmatprep.subr.bf16.mxu0 0
    %775 = vmatpush1.bf16.msra.mxu0 0
    %776 = vmatprep.subr.bf16.mxu0 0
    %777 = vmatpush1.bf16.msra.mxu0 0
    %778 = vmatprep.subr.bf16.mxu0 0
    %779 = vmatpush1.bf16.msra.mxu0 0
    %780 = vmatprep.mubr.bf16.mxu0 0
    %781 = vmatmul.mubr.bf16.gmra.mrb[0].mxu0 %v746
    %v782 = vpop.f32.mrb[0].mxu0
    %v783 = vadd.f32 0.0, %v782
    %v784 = vpop.f32.mrb[0].mxu0
    %v785 = vadd.f32 0.0, %v784
    %v786 = vpop.f32.mrb[0].mxu0
    %v787 = vpop.f32.mrb[0].mxu0
    %788 = vdwg.mxu0
    %789 = vmatprep.subr.bf16.mxu0 %v684
    %790 = vmatpush1.bf16.msra.mxu0 %v683
    %791 = vmatprep.subr.bf16.mxu0 %v692
    %792 = vmatpush1.bf16.msra.mxu0 %v691
    %793 = vmatprep.subr.bf16.mxu0 %v700
    %794 = vmatpush1.bf16.msra.mxu0 %v699
    %795 = vmatprep.subr.bf16.mxu0 %v708
    %796 = vmatpush1.bf16.msra.mxu0 %v707
    %797 = vmatprep.subr.bf16.mxu0 %v716
    %798 = vmatpush1.bf16.msra.mxu0 %v715
    %799 = vmatprep.subr.bf16.mxu0 %v724
    %800 = vmatpush1.bf16.msra.mxu0 %v723
    %801 = vmatprep.subr.bf16.mxu0 %v732
    %802 = vmatpush1.bf16.msra.mxu0 %v731
    %803 = vmatprep.subr.bf16.mxu0 %v740
    %804 = vmatpush1.bf16.msra.mxu0 %v739
    %805 = vmatprep.subr.bf16.mxu0 0
    %806 = vmatpush1.bf16.msra.mxu0 0
    %807 = vmatprep.subr.bf16.mxu0 0
    %808 = vmatpush1.bf16.msra.mxu0 0
    %809 = vmatprep.subr.bf16.mxu0 0
    %810 = vmatpush1.bf16.msra.mxu0 0
    %811 = vmatprep.subr.bf16.mxu0 0
    %812 = vmatpush1.bf16.msra.mxu0 0
    %813 = vmatprep.subr.bf16.mxu0 0
    %814 = vmatpush1.bf16.msra.mxu0 0
    %815 = vmatprep.subr.bf16.mxu0 0
    %816 = vmatpush1.bf16.msra.mxu0 0
    %817 = vmatprep.subr.bf16.mxu0 0
    %818 = vmatpush1.bf16.msra.mxu0 0
    %819 = vmatprep.subr.bf16.mxu0 0
    %820 = vmatpush1.bf16.msra.mxu0 0
    %821 = vmatprep.mubr.bf16.mxu0 0
    %822 = vmatmul.mubr.bf16.gmra.mrb[0].mxu0 %v746
    %v823 = vpop.f32.mrb[0].mxu0
    %v824 = vadd.f32 0.0, %v823
    %v825 = vpop.f32.mrb[0].mxu0
    %v826 = vadd.f32 0.0, %v825
    %v827 = vpop.f32.mrb[0].mxu0
    %v828 = vpop.f32.mrb[0].mxu0
    %829 = vdwg.mxu0
    %830 = vmatprep.subr.bf16.mxu0 %v686
    %831 = vmatpush1.bf16.msra.mxu0 %v685
    %832 = vmatprep.subr.bf16.mxu0 %v694
    %833 = vmatpush1.bf16.msra.mxu0 %v693
    %834 = vmatprep.subr.bf16.mxu0 %v702
    %835 = vmatpush1.bf16.msra.mxu0 %v701
    %836 = vmatprep.subr.bf16.mxu0 %v710
    %837 = vmatpush1.bf16.msra.mxu0 %v709
    %838 = vmatprep.subr.bf16.mxu0 %v718
    %839 = vmatpush1.bf16.msra.mxu0 %v717
    %840 = vmatprep.subr.bf16.mxu0 %v726
    %841 = vmatpush1.bf16.msra.mxu0 %v725
    %842 = vmatprep.subr.bf16.mxu0 %v734
    %843 = vmatpush1.bf16.msra.mxu0 %v733
    %844 = vmatprep.subr.bf16.mxu0 %v742
    %845 = vmatpush1.bf16.msra.mxu0 %v741
    %846 = vmatprep.subr.bf16.mxu0 0
    %847 = vmatpush1.bf16.msra.mxu0 0
    %848 = vmatprep.subr.bf16.mxu0 0
    %849 = vmatpush1.bf16.msra.mxu0 0
    %850 = vmatprep.subr.bf16.mxu0 0
    %851 = vmatpush1.bf16.msra.mxu0 0
    %852 = vmatprep.subr.bf16.mxu0 0
    %853 = vmatpush1.bf16.msra.mxu0 0
    %854 = vmatprep.subr.bf16.mxu0 0
    %855 = vmatpush1.bf16.msra.mxu0 0
    %856 = vmatprep.subr.bf16.mxu0 0
    %857 = vmatpush1.bf16.msra.mxu0 0
    %858 = vmatprep.subr.bf16.mxu0 0
    %859 = vmatpush1.bf16.msra.mxu0 0
    %860 = vmatprep.subr.bf16.mxu0 0
    %861 = vmatpush1.bf16.msra.mxu0 0
    %862 = vmatprep.mubr.bf16.mxu0 0
    %863 = vmatmul.mubr.bf16.gmra.mrb[0].mxu0 %v746
    %v864 = vpop.f32.mrb[0].mxu0
    %v865 = vadd.f32 0.0, %v864
    %v866 = vpop.f32.mrb[0].mxu0
    %v867 = vadd.f32 0.0, %v866
    %v868 = vpop.f32.mrb[0].mxu0
    %v869 = vpop.f32.mrb[0].mxu0
    %870 = vdwg.mxu0
    %871 = vmatprep.subr.bf16.mxu0 %v688
    %872 = vmatpush1.bf16.msra.mxu0 %v687
    %873 = vmatprep.subr.bf16.mxu0 %v696
    %874 = vmatpush1.bf16.msra.mxu0 %v695
    %875 = vmatprep.subr.bf16.mxu0 %v704
    %876 = vmatpush1.bf16.msra.mxu0 %v703
    %877 = vmatprep.subr.bf16.mxu0 %v712
    %878 = vmatpush1.bf16.msra.mxu0 %v711
    %879 = vmatprep.subr.bf16.mxu0 %v720
    %880 = vmatpush1.bf16.msra.mxu0 %v719
    %881 = vmatprep.subr.bf16.mxu0 %v728
    %882 = vmatpush1.bf16.msra.mxu0 %v727
    %883 = vmatprep.subr.bf16.mxu0 %v736
    %884 = vmatpush1.bf16.msra.mxu0 %v735
    %885 = vmatprep.subr.bf16.mxu0 %v744
    %886 = vmatpush1.bf16.msra.mxu0 %v743
    %887 = vmatprep.subr.bf16.mxu0 0
    %888 = vmatpush1.bf16.msra.mxu0 0
    %889 = vmatprep.subr.bf16.mxu0 0
    %890 = vmatpush1.bf16.msra.mxu0 0
    %891 = vmatprep.subr.bf16.mxu0 0
    %892 = vmatpush1.bf16.msra.mxu0 0
    %893 = vmatprep.subr.bf16.mxu0 0
    %894 = vmatpush1.bf16.msra.mxu0 0
    %895 = vmatprep.subr.bf16.mxu0 0
    %896 = vmatpush1.bf16.msra.mxu0 0
    %897 = vmatprep.subr.bf16.mxu0 0
    %898 = vmatpush1.bf16.msra.mxu0 0
    %899 = vmatprep.subr.bf16.mxu0 0
    %900 = vmatpush1.bf16.msra.mxu0 0
    %901 = vmatprep.subr.bf16.mxu0 0
    %902 = vmatpush1.bf16.msra.mxu0 0
    %903 = vmatprep.mubr.bf16.mxu0 0
    %904 = vmatmul.mubr.bf16.gmra.mrb[0].mxu0 %v746
    %v905 = vpop.f32.mrb[0].mxu0
    %v906 = vadd.f32 0.0, %v905
    %v907 = vpop.f32.mrb[0].mxu0
    %v908 = vadd.f32 0.0, %v907
    %v909 = vpop.f32.mrb[0].mxu0
    %v910 = vpop.f32.mrb[0].mxu0
    %911 = vdwg.mxu0
    %912 = vmatprep.subr.bf16.mxu0 %v617
    %913 = vmatpush1.bf16.msra.mxu0 %v616
    %914 = vmatprep.subr.bf16.mxu0 %v625
    %915 = vmatpush1.bf16.msra.mxu0 %v624
    %916 = vmatprep.subr.bf16.mxu0 %v633
    %917 = vmatpush1.bf16.msra.mxu0 %v632
    %918 = vmatprep.subr.bf16.mxu0 %v641
    %919 = vmatpush1.bf16.msra.mxu0 %v640
    %920 = vmatprep.subr.bf16.mxu0 %v649
    %921 = vmatpush1.bf16.msra.mxu0 %v648
    %922 = vmatprep.subr.bf16.mxu0 %v657
    %923 = vmatpush1.bf16.msra.mxu0 %v656
    %924 = vmatprep.subr.bf16.mxu0 %v665
    %925 = vmatpush1.bf16.msra.mxu0 %v664
    %926 = vmatprep.subr.bf16.mxu0 %v673
    %927 = vmatpush1.bf16.msra.mxu0 %v672
    %928 = vmatprep.subr.bf16.mxu0 0
    %929 = vmatpush1.bf16.msra.mxu0 0
    %930 = vmatprep.subr.bf16.mxu0 0
    %931 = vmatpush1.bf16.msra.mxu0 0
    %932 = vmatprep.subr.bf16.mxu0 0
    %933 = vmatpush1.bf16.msra.mxu0 0
    %934 = vmatprep.subr.bf16.mxu0 0
    %935 = vmatpush1.bf16.msra.mxu0 0
    %936 = vmatprep.subr.bf16.mxu0 0
    %937 = vmatpush1.bf16.msra.mxu0 0
    %938 = vmatprep.subr.bf16.mxu0 0
    %939 = vmatpush1.bf16.msra.mxu0 0
    %940 = vmatprep.subr.bf16.mxu0 0
    %941 = vmatpush1.bf16.msra.mxu0 0
    %942 = vmatprep.subr.bf16.mxu0 0
    %943 = vmatpush1.bf16.msra.mxu0 0
    %944 = vmatprep.mubr.bf16.mxu0 0
    %945 = vmatmul.mubr.bf16.gmra.mrb[0].mxu0 %v609
    %v946 = vpop.f32.mrb[0].mxu0
    %v947 = vadd.f32 %v783, %v946
    %v948 = vpop.f32.mrb[0].mxu0
    %v949 = vadd.f32 %v785, %v948
    %v950 = vpop.f32.mrb[0].mxu0
    %v951 = vpop.f32.mrb[0].mxu0
    %952 = vdwg.mxu0
    %953 = vmatprep.subr.bf16.mxu0 %v619
    %954 = vmatpush1.bf16.msra.mxu0 %v618
    %955 = vmatprep.subr.bf16.mxu0 %v627
    %956 = vmatpush1.bf16.msra.mxu0 %v626
    %957 = vmatprep.subr.bf16.mxu0 %v635
    %958 = vmatpush1.bf16.msra.mxu0 %v634
    %959 = vmatprep.subr.bf16.mxu0 %v643
    %960 = vmatpush1.bf16.msra.mxu0 %v642
    %961 = vmatprep.subr.bf16.mxu0 %v651
    %962 = vmatpush1.bf16.msra.mxu0 %v650
    %963 = vmatprep.subr.bf16.mxu0 %v659
    %964 = vmatpush1.bf16.msra.mxu0 %v658
    %965 = vmatprep.subr.bf16.mxu0 %v667
    %966 = vmatpush1.bf16.msra.mxu0 %v666
    %967 = vmatprep.subr.bf16.mxu0 %v675
    %968 = vmatpush1.bf16.msra.mxu0 %v674
    %969 = vmatprep.subr.bf16.mxu0 0
    %970 = vmatpush1.bf16.msra.mxu0 0
    %971 = vmatprep.subr.bf16.mxu0 0
    %972 = vmatpush1.bf16.msra.mxu0 0
    %973 = vmatprep.subr.bf16.mxu0 0
    %974 = vmatpush1.bf16.msra.mxu0 0
    %975 = vmatprep.subr.bf16.mxu0 0
    %976 = vmatpush1.bf16.msra.mxu0 0
    %977 = vmatprep.subr.bf16.mxu0 0
    %978 = vmatpush1.bf16.msra.mxu0 0
    %979 = vmatprep.subr.bf16.mxu0 0
    %980 = vmatpush1.bf16.msra.mxu0 0
    %981 = vmatprep.subr.bf16.mxu0 0
    %982 = vmatpush1.bf16.msra.mxu0 0
    %983 = vmatprep.subr.bf16.mxu0 0
    %984 = vmatpush1.bf16.msra.mxu0 0
    %985 = vmatprep.mubr.bf16.mxu0 0
    %986 = vmatmul.mubr.bf16.gmra.mrb[0].mxu0 %v609
    %v987 = vpop.f32.mrb[0].mxu0
    %v988 = vadd.f32 %v824, %v987
    %v989 = vpop.f32.mrb[0].mxu0
    %v990 = vadd.f32 %v826, %v989
    %v991 = vpop.f32.mrb[0].mxu0
    %v992 = vpop.f32.mrb[0].mxu0
    %993 = vdwg.mxu0
    %994 = vmatprep.subr.bf16.mxu0 %v621
    %995 = vmatpush1.bf16.msra.mxu0 %v620
    %996 = vmatprep.subr.bf16.mxu0 %v629
    %997 = vmatpush1.bf16.msra.mxu0 %v628
    %998 = vmatprep.subr.bf16.mxu0 %v637
    %999 = vmatpush1.bf16.msra.mxu0 %v636
    %1000 = vmatprep.subr.bf16.mxu0 %v645
    %1001 = vmatpush1.bf16.msra.mxu0 %v644
    %1002 = vmatprep.subr.bf16.mxu0 %v653
    %1003 = vmatpush1.bf16.msra.mxu0 %v652
    %1004 = vmatprep.subr.bf16.mxu0 %v661
    %1005 = vmatpush1.bf16.msra.mxu0 %v660
    %1006 = vmatprep.subr.bf16.mxu0 %v669
    %1007 = vmatpush1.bf16.msra.mxu0 %v668
    %1008 = vmatprep.subr.bf16.mxu0 %v677
    %1009 = vmatpush1.bf16.msra.mxu0 %v676
    %1010 = vmatprep.subr.bf16.mxu0 0
    %1011 = vmatpush1.bf16.msra.mxu0 0
    %1012 = vmatprep.subr.bf16.mxu0 0
    %1013 = vmatpush1.bf16.msra.mxu0 0
    %1014 = vmatprep.subr.bf16.mxu0 0
    %1015 = vmatpush1.bf16.msra.mxu0 0
    %1016 = vmatprep.subr.bf16.mxu0 0
    %1017 = vmatpush1.bf16.msra.mxu0 0
    %1018 = vmatprep.subr.bf16.mxu0 0
    %1019 = vmatpush1.bf16.msra.mxu0 0
    %1020 = vmatprep.subr.bf16.mxu0 0
    %1021 = vmatpush1.bf16.msra.mxu0 0
    %1022 = vmatprep.subr.bf16.mxu0 0
    %1023 = vmatpush1.bf16.msra.mxu0 0
    %1024 = vmatprep.subr.bf16.mxu0 0
    %1025 = vmatpush1.bf16.msra.mxu0 0
    %1026 = vmatprep.mubr.bf16.mxu0 0
    %1027 = vmatmul.mubr.bf16.gmra.mrb[0].mxu0 %v609
    %v1028 = vpop.f32.mrb[0].mxu0
    %v1029 = vadd.f32 %v865, %v1028
    %v1030 = vpop.f32.mrb[0].mxu0
    %v1031 = vadd.f32 %v867, %v1030
    %v1032 = vpop.f32.mrb[0].mxu0
    %v1033 = vpop.f32.mrb[0].mxu0
    %1034 = vdwg.mxu0
    %1035 = vmatprep.subr.bf16.mxu0 %v623
    %1036 = vmatpush1.bf16.msra.mxu0 %v622
    %1037 = vmatprep.subr.bf16.mxu0 %v631
    %1038 = vmatpush1.bf16.msra.mxu0 %v630
    %1039 = vmatprep.subr.bf16.mxu0 %v639
    %1040 = vmatpush1.bf16.msra.mxu0 %v638
    %1041 = vmatprep.subr.bf16.mxu0 %v647
    %1042 = vmatpush1.bf16.msra.mxu0 %v646
    %1043 = vmatprep.subr.bf16.mxu0 %v655
    %1044 = vmatpush1.bf16.msra.mxu0 %v654
    %1045 = vmatprep.subr.bf16.mxu0 %v663
    %1046 = vmatpush1.bf16.msra.mxu0 %v662
    %1047 = vmatprep.subr.bf16.mxu0 %v671
    %1048 = vmatpush1.bf16.msra.mxu0 %v670
    %1049 = vmatprep.subr.bf16.mxu0 %v679
    %1050 = vmatpush1.bf16.msra.mxu0 %v678
    %1051 = vmatprep.subr.bf16.mxu0 0
    %1052 = vmatpush1.bf16.msra.mxu0 0
    %1053 = vmatprep.subr.bf16.mxu0 0
    %1054 = vmatpush1.bf16.msra.mxu0 0
    %1055 = vmatprep.subr.bf16.mxu0 0
    %1056 = vmatpush1.bf16.msra.mxu0 0
    %1057 = vmatprep.subr.bf16.mxu0 0
    %1058 = vmatpush1.bf16.msra.mxu0 0
    %1059 = vmatprep.subr.bf16.mxu0 0
    %1060 = vmatpush1.bf16.msra.mxu0 0
    %1061 = vmatprep.subr.bf16.mxu0 0
    %1062 = vmatpush1.bf16.msra.mxu0 0
    %1063 = vmatprep.subr.bf16.mxu0 0
    %1064 = vmatpush1.bf16.msra.mxu0 0
    %1065 = vmatprep.subr.bf16.mxu0 0
    %1066 = vmatpush1.bf16.msra.mxu0 0
    %1067 = vmatprep.mubr.bf16.mxu0 0
    %1068 = vmatmul.mubr.bf16.gmra.mrb[0].mxu0 %v609
    %v1069 = vpop.f32.mrb[0].mxu0
    %v1070 = vadd.f32 %v906, %v1069
    %v1071 = vpop.f32.mrb[0].mxu0
    %v1072 = vadd.f32 %v908, %v1071
    %v1073 = vpop.f32.mrb[0].mxu0
    %v1074 = vpop.f32.mrb[0].mxu0
    %1075 = vdwg.mxu0
    %s1076 = scalar_lea.vmem [#allocation2], 1024
    %v1077 = vld [vmem:[%s1076] sm:$0xff]
    %v1078 = vld [vmem:[%s1076 + $0x8] sm:$0xff]
    %v1079 = vld [vmem:[%s1076 + $0x10] sm:$0xff]
    %v1080 = vld [vmem:[%s1076 + $0x18] sm:$0xff]
    %v1081 = vld [vmem:[%s1076 + $0x20] sm:$0xff]
    %v1082 = vld [vmem:[%s1076 + $0x28] sm:$0xff]
    %v1083 = vld [vmem:[%s1076 + $0x30] sm:$0xff]
    %v1084 = vld [vmem:[%s1076 + $0x38] sm:$0xff]
    %v1085 = vld [vmem:[%s1076 + $0x40] sm:$0xff]
    %v1086 = vld [vmem:[%s1076 + $0x48] sm:$0xff]
    %v1087 = vld [vmem:[%s1076 + $0x50] sm:$0xff]
    %v1088 = vld [vmem:[%s1076 + $0x58] sm:$0xff]
    %v1089 = vld [vmem:[%s1076 + $0x60] sm:$0xff]
    %v1090 = vld [vmem:[%s1076 + $0x68] sm:$0xff]
    %v1091 = vld [vmem:[%s1076 + $0x70] sm:$0xff]
    %v1092 = vld [vmem:[%s1076 + $0x78] sm:$0xff]
    %v1093 = vld [vmem:[%s1076 + $0x80] sm:$0xff]
    %v1094 = vld [vmem:[%s1076 + $0x88] sm:$0xff]
    %v1095 = vld [vmem:[%s1076 + $0x90] sm:$0xff]
    %v1096 = vld [vmem:[%s1076 + $0x98] sm:$0xff]
    %v1097 = vld [vmem:[%s1076 + $0xa0] sm:$0xff]
    %v1098 = vld [vmem:[%s1076 + $0xa8] sm:$0xff]
    %v1099 = vld [vmem:[%s1076 + $0xb0] sm:$0xff]
    %v1100 = vld [vmem:[%s1076 + $0xb8] sm:$0xff]
    %v1101 = vld [vmem:[%s1076 + $0xc0] sm:$0xff]
    %v1102 = vld [vmem:[%s1076 + $0xc8] sm:$0xff]
    %v1103 = vld [vmem:[%s1076 + $0xd0] sm:$0xff]
    %v1104 = vld [vmem:[%s1076 + $0xd8] sm:$0xff]
    %v1105 = vld [vmem:[%s1076 + $0xe0] sm:$0xff]
    %v1106 = vld [vmem:[%s1076 + $0xe8] sm:$0xff]
    %v1107 = vld [vmem:[%s1076 + $0xf0] sm:$0xff]
    %v1108 = vld [vmem:[%s1076 + $0xf8] sm:$0xff]
    %v1109 = vld [vmem:[%s1076 + $0x100] sm:$0xff]
    %v1110 = vld [vmem:[%s1076 + $0x108] sm:$0xff]
    %v1111 = vld [vmem:[%s1076 + $0x110] sm:$0xff]
    %v1112 = vld [vmem:[%s1076 + $0x118] sm:$0xff]
    %v1113 = vld [vmem:[%s1076 + $0x120] sm:$0xff]
    %v1114 = vld [vmem:[%s1076 + $0x128] sm:$0xff]
    %v1115 = vld [vmem:[%s1076 + $0x130] sm:$0xff]
    %v1116 = vld [vmem:[%s1076 + $0x138] sm:$0xff]
    %v1117 = vld [vmem:[%s1076 + $0x140] sm:$0xff]
    %v1118 = vld [vmem:[%s1076 + $0x148] sm:$0xff]
    %v1119 = vld [vmem:[%s1076 + $0x150] sm:$0xff]
    %v1120 = vld [vmem:[%s1076 + $0x158] sm:$0xff]
    %v1121 = vld [vmem:[%s1076 + $0x160] sm:$0xff]
    %v1122 = vld [vmem:[%s1076 + $0x168] sm:$0xff]
    %v1123 = vld [vmem:[%s1076 + $0x170] sm:$0xff]
    %v1124 = vld [vmem:[%s1076 + $0x178] sm:$0xff]
    %v1125 = vld [vmem:[%s1076 + $0x180] sm:$0xff]
    %v1126 = vld [vmem:[%s1076 + $0x188] sm:$0xff]
    %v1127 = vld [vmem:[%s1076 + $0x190] sm:$0xff]
    %v1128 = vld [vmem:[%s1076 + $0x198] sm:$0xff]
    %v1129 = vld [vmem:[%s1076 + $0x1a0] sm:$0xff]
    %v1130 = vld [vmem:[%s1076 + $0x1a8] sm:$0xff]
    %v1131 = vld [vmem:[%s1076 + $0x1b0] sm:$0xff]
    %v1132 = vld [vmem:[%s1076 + $0x1b8] sm:$0xff]
    %v1133 = vld [vmem:[%s1076 + $0x1c0] sm:$0xff]
    %v1134 = vld [vmem:[%s1076 + $0x1c8] sm:$0xff]
    %v1135 = vld [vmem:[%s1076 + $0x1d0] sm:$0xff]
    %v1136 = vld [vmem:[%s1076 + $0x1d8] sm:$0xff]
    %v1137 = vld [vmem:[%s1076 + $0x1e0] sm:$0xff]
    %v1138 = vld [vmem:[%s1076 + $0x1e8] sm:$0xff]
    %v1139 = vld [vmem:[%s1076 + $0x1f0] sm:$0xff]
    %v1140 = vld [vmem:[%s1076 + $0x1f8] sm:$0xff]
    %v1141 = vrot.slane %v609, 2
    %1143 = vmatprep.subr.bf16.mxu0 %v1078
    %1144 = vmatpush1.bf16.msra.mxu0 %v1077
    %1145 = vmatprep.subr.bf16.mxu0 %v1086
    %1146 = vmatpush1.bf16.msra.mxu0 %v1085
    %1147 = vmatprep.subr.bf16.mxu0 %v1094
    %1148 = vmatpush1.bf16.msra.mxu0 %v1093
    %1149 = vmatprep.subr.bf16.mxu0 %v1102
    %1150 = vmatpush1.bf16.msra.mxu0 %v1101
    %1151 = vmatprep.subr.bf16.mxu0 %v1110
    %1152 = vmatpush1.bf16.msra.mxu0 %v1109
    %1153 = vmatprep.subr.bf16.mxu0 %v1118
    %1154 = vmatpush1.bf16.msra.mxu0 %v1117
    %1155 = vmatprep.subr.bf16.mxu0 %v1126
    %1156 = vmatpush1.bf16.msra.mxu0 %v1125
    %1157 = vmatprep.subr.bf16.mxu0 %v1134
    %1158 = vmatpush1.bf16.msra.mxu0 %v1133
    %1159 = vmatprep.subr.bf16.mxu0 0
    %1160 = vmatpush1.bf16.msra.mxu0 0
    %1161 = vmatprep.subr.bf16.mxu0 0
    %1162 = vmatpush1.bf16.msra.mxu0 0
    %1163 = vmatprep.subr.bf16.mxu0 0
    %1164 = vmatpush1.bf16.msra.mxu0 0
    %1165 = vmatprep.subr.bf16.mxu0 0
    %1166 = vmatpush1.bf16.msra.mxu0 0
    %1167 = vmatprep.subr.bf16.mxu0 0
    %1168 = vmatpush1.bf16.msra.mxu0 0
    %1169 = vmatprep.subr.bf16.mxu0 0
    %1170 = vmatpush1.bf16.msra.mxu0 0
    %1171 = vmatprep.subr.bf16.mxu0 0
    %1172 = vmatpush1.bf16.msra.mxu0 0
    %1173 = vmatprep.subr.bf16.mxu0 0
    %1174 = vmatpush1.bf16.msra.mxu0 0
    %1175 = vmatprep.mubr.bf16.mxu0 0
    %1176 = vmatmul.mubr.bf16.gmra.mrb[0].mxu0 %v1141
    %v1177 = vpop.f32.mrb[0].mxu0
    %v1178 = vadd.f32 0.0, %v1177
    %v1179 = vpop.f32.mrb[0].mxu0
    %v1180 = vadd.f32 0.0, %v1179
    %v1181 = vpop.f32.mrb[0].mxu0
    %v1182 = vpop.f32.mrb[0].mxu0
    %1183 = vdwg.mxu0
    %1184 = vmatprep.subr.bf16.mxu0 %v1080
    %1185 = vmatpush1.bf16.msra.mxu0 %v1079
    %1186 = vmatprep.subr.bf16.mxu0 %v1088
    %1187 = vmatpush1.bf16.msra.mxu0 %v1087
    %1188 = vmatprep.subr.bf16.mxu0 %v1096
    %1189 = vmatpush1.bf16.msra.mxu0 %v1095
    %1190 = vmatprep.subr.bf16.mxu0 %v1104
    %1191 = vmatpush1.bf16.msra.mxu0 %v1103
    %1192 = vmatprep.subr.bf16.mxu0 %v1112
    %1193 = vmatpush1.bf16.msra.mxu0 %v1111
    %1194 = vmatprep.subr.bf16.mxu0 %v1120
    %1195 = vmatpush1.bf16.msra.mxu0 %v1119
    %1196 = vmatprep.subr.bf16.mxu0 %v1128
    %1197 = vmatpush1.bf16.msra.mxu0 %v1127
    %1198 = vmatprep.subr.bf16.mxu0 %v1136
    %1199 = vmatpush1.bf16.msra.mxu0 %v1135
    %1200 = vmatprep.subr.bf16.mxu0 0
    %1201 = vmatpush1.bf16.msra.mxu0 0
    %1202 = vmatprep.subr.bf16.mxu0 0
    %1203 = vmatpush1.bf16.msra.mxu0 0
    %1204 = vmatprep.subr.bf16.mxu0 0
    %1205 = vmatpush1.bf16.msra.mxu0 0
    %1206 = vmatprep.subr.bf16.mxu0 0
    %1207 = vmatpush1.bf16.msra.mxu0 0
    %1208 = vmatprep.subr.bf16.mxu0 0
    %1209 = vmatpush1.bf16.msra.mxu0 0
    %1210 = vmatprep.subr.bf16.mxu0 0
    %1211 = vmatpush1.bf16.msra.mxu0 0
    %1212 = vmatprep.subr.bf16.mxu0 0
    %1213 = vmatpush1.bf16.msra.mxu0 0
    %1214 = vmatprep.subr.bf16.mxu0 0
    %1215 = vmatpush1.bf16.msra.mxu0 0
    %1216 = vmatprep.mubr.bf16.mxu0 0
    %1217 = vmatmul.mubr.bf16.gmra.mrb[0].mxu0 %v1141
    %v1218 = vpop.f32.mrb[0].mxu0
    %v1219 = vadd.f32 0.0, %v1218
    %v1220 = vpop.f32.mrb[0].mxu0
    %v1221 = vadd.f32 0.0, %v1220
    %v1222 = vpop.f32.mrb[0].mxu0
    %v1223 = vpop.f32.mrb[0].mxu0
    %1224 = vdwg.mxu0
    %1225 = vmatprep.subr.bf16.mxu0 %v1082
    %1226 = vmatpush1.bf16.msra.mxu0 %v1081
    %1227 = vmatprep.subr.bf16.mxu0 %v1090
    %1228 = vmatpush1.bf16.msra.mxu0 %v1089
    %1229 = vmatprep.subr.bf16.mxu0 %v1098
    %1230 = vmatpush1.bf16.msra.mxu0 %v1097
    %1231 = vmatprep.subr.bf16.mxu0 %v1106
    %1232 = vmatpush1.bf16.msra.mxu0 %v1105
    %1233 = vmatprep.subr.bf16.mxu0 %v1114
    %1234 = vmatpush1.bf16.msra.mxu0 %v1113
    %1235 = vmatprep.subr.bf16.mxu0 %v1122
    %1236 = vmatpush1.bf16.msra.mxu0 %v1121
    %1237 = vmatprep.subr.bf16.mxu0 %v1130
    %1238 = vmatpush1.bf16.msra.mxu0 %v1129
    %1239 = vmatprep.subr.bf16.mxu0 %v1138
    %1240 = vmatpush1.bf16.msra.mxu0 %v1137
    %1241 = vmatprep.subr.bf16.mxu0 0
    %1242 = vmatpush1.bf16.msra.mxu0 0
    %1243 = vmatprep.subr.bf16.mxu0 0
    %1244 = vmatpush1.bf16.msra.mxu0 0
    %1245 = vmatprep.subr.bf16.mxu0 0
    %1246 = vmatpush1.bf16.msra.mxu0 0
    %1247 = vmatprep.subr.bf16.mxu0 0
    %1248 = vmatpush1.bf16.msra.mxu0 0
    %1249 = vmatprep.subr.bf16.mxu0 0
    %1250 = vmatpush1.bf16.msra.mxu0 0
    %1251 = vmatprep.subr.bf16.mxu0 0
    %1252 = vmatpush1.bf16.msra.mxu0 0
    %1253 = vmatprep.subr.bf16.mxu0 0
    %1254 = vmatpush1.bf16.msra.mxu0 0
    %1255 = vmatprep.subr.bf16.mxu0 0
    %1256 = vmatpush1.bf16.msra.mxu0 0
    %1257 = vmatprep.mubr.bf16.mxu0 0
    %1258 = vmatmul.mubr.bf16.gmra.mrb[0].mxu0 %v1141
    %v1259 = vpop.f32.mrb[0].mxu0
    %v1260 = vadd.f32 0.0, %v1259
    %v1261 = vpop.f32.mrb[0].mxu0
    %v1262 = vadd.f32 0.0, %v1261
    %v1263 = vpop.f32.mrb[0].mxu0
    %v1264 = vpop.f32.mrb[0].mxu0
    %1265 = vdwg.mxu0
    %1266 = vmatprep.subr.bf16.mxu0 %v1084
    %1267 = vmatpush1.bf16.msra.mxu0 %v1083
    %1268 = vmatprep.subr.bf16.mxu0 %v1092
    %1269 = vmatpush1.bf16.msra.mxu0 %v1091
    %1270 = vmatprep.subr.bf16.mxu0 %v1100
    %1271 = vmatpush1.bf16.msra.mxu0 %v1099
    %1272 = vmatprep.subr.bf16.mxu0 %v1108
    %1273 = vmatpush1.bf16.msra.mxu0 %v1107
    %1274 = vmatprep.subr.bf16.mxu0 %v1116
    %1275 = vmatpush1.bf16.msra.mxu0 %v1115
    %1276 = vmatprep.subr.bf16.mxu0 %v1124
    %1277 = vmatpush1.bf16.msra.mxu0 %v1123
    %1278 = vmatprep.subr.bf16.mxu0 %v1132
    %1279 = vmatpush1.bf16.msra.mxu0 %v1131
    %1280 = vmatprep.subr.bf16.mxu0 %v1140
    %1281 = vmatpush1.bf16.msra.mxu0 %v1139
    %1282 = vmatprep.subr.bf16.mxu0 0
    %1283 = vmatpush1.bf16.msra.mxu0 0
    %1284 = vmatprep.subr.bf16.mxu0 0
    %1285 = vmatpush1.bf16.msra.mxu0 0
    %1286 = vmatprep.subr.bf16.mxu0 0
    %1287 = vmatpush1.bf16.msra.mxu0 0
    %1288 = vmatprep.subr.bf16.mxu0 0
    %1289 = vmatpush1.bf16.msra.mxu0 0
    %1290 = vmatprep.subr.bf16.mxu0 0
    %1291 = vmatpush1.bf16.msra.mxu0 0
    %1292 = vmatprep.subr.bf16.mxu0 0
    %1293 = vmatpush1.bf16.msra.mxu0 0
    %1294 = vmatprep.subr.bf16.mxu0 0
    %1295 = vmatpush1.bf16.msra.mxu0 0
    %1296 = vmatprep.subr.bf16.mxu0 0
    %1297 = vmatpush1.bf16.msra.mxu0 0
    %1298 = vmatprep.mubr.bf16.mxu0 0
    %1299 = vmatmul.mubr.bf16.gmra.mrb[0].mxu0 %v1141
    %v1300 = vpop.f32.mrb[0].mxu0
    %v1301 = vadd.f32 0.0, %v1300
    %v1302 = vpop.f32.mrb[0].mxu0
    %v1303 = vadd.f32 0.0, %v1302
    %v1304 = vpop.f32.mrb[0].mxu0
    %v1305 = vpop.f32.mrb[0].mxu0
    %1306 = vdwg.mxu0
    %v1307 = vadd.f32 %v947, %v1178
    %v1308 = vadd.f32 %v949, %v1180
    %v1309 = vadd.f32 %v988, %v1219
    %v1310 = vadd.f32 %v990, %v1221
    %v1311 = vadd.f32 %v1029, %v1260
    %v1312 = vadd.f32 %v1031, %v1262
    %v1313 = vadd.f32 %v1070, %v1301
    %v1314 = vadd.f32 %v1072, %v1303
    %s1315 = scalar_lea.vmem [#allocation2], 1536
    %v1316 = vld [vmem:[%s1315] sm:$0xff]
    %v1317 = vld [vmem:[%s1315 + $0x8] sm:$0xff]
    %v1318 = vld [vmem:[%s1315 + $0x10] sm:$0xff]
    %v1319 = vld [vmem:[%s1315 + $0x18] sm:$0xff]
    %v1320 = vld [vmem:[%s1315 + $0x20] sm:$0xff]
    %v1321 = vld [vmem:[%s1315 + $0x28] sm:$0xff]
    %v1322 = vld [vmem:[%s1315 + $0x30] sm:$0xff]
    %v1323 = vld [vmem:[%s1315 + $0x38] sm:$0xff]
    %v1324 = vld [vmem:[%s1315 + $0x40] sm:$0xff]
    %v1325 = vld [vmem:[%s1315 + $0x48] sm:$0xff]
    %v1326 = vld [vmem:[%s1315 + $0x50] sm:$0xff]
    %v1327 = vld [vmem:[%s1315 + $0x58] sm:$0xff]
    %v1328 = vld [vmem:[%s1315 + $0x60] sm:$0xff]
    %v1329 = vld [vmem:[%s1315 + $0x68] sm:$0xff]
    %v1330 = vld [vmem:[%s1315 + $0x70] sm:$0xff]
    %v1331 = vld [vmem:[%s1315 + $0x78] sm:$0xff]
    %v1332 = vld [vmem:[%s1315 + $0x80] sm:$0xff]
    %v1333 = vld [vmem:[%s1315 + $0x88] sm:$0xff]
    %v1334 = vld [vmem:[%s1315 + $0x90] sm:$0xff]
    %v1335 = vld [vmem:[%s1315 + $0x98] sm:$0xff]
    %v1336 = vld [vmem:[%s1315 + $0xa0] sm:$0xff]
    %v1337 = vld [vmem:[%s1315 + $0xa8] sm:$0xff]
    %v1338 = vld [vmem:[%s1315 + $0xb0] sm:$0xff]
    %v1339 = vld [vmem:[%s1315 + $0xb8] sm:$0xff]
    %v1340 = vld [vmem:[%s1315 + $0xc0] sm:$0xff]
    %v1341 = vld [vmem:[%s1315 + $0xc8] sm:$0xff]
    %v1342 = vld [vmem:[%s1315 + $0xd0] sm:$0xff]
    %v1343 = vld [vmem:[%s1315 + $0xd8] sm:$0xff]
    %v1344 = vld [vmem:[%s1315 + $0xe0] sm:$0xff]
    %v1345 = vld [vmem:[%s1315 + $0xe8] sm:$0xff]
    %v1346 = vld [vmem:[%s1315 + $0xf0] sm:$0xff]
    %v1347 = vld [vmem:[%s1315 + $0xf8] sm:$0xff]
    %v1348 = vld [vmem:[%s1315 + $0x100] sm:$0xff]
    %v1349 = vld [vmem:[%s1315 + $0x108] sm:$0xff]
    %v1350 = vld [vmem:[%s1315 + $0x110] sm:$0xff]
    %v1351 = vld [vmem:[%s1315 + $0x118] sm:$0xff]
    %v1352 = vld [vmem:[%s1315 + $0x120] sm:$0xff]
    %v1353 = vld [vmem:[%s1315 + $0x128] sm:$0xff]
    %v1354 = vld [vmem:[%s1315 + $0x130] sm:$0xff]
    %v1355 = vld [vmem:[%s1315 + $0x138] sm:$0xff]
    %v1356 = vld [vmem:[%s1315 + $0x140] sm:$0xff]
    %v1357 = vld [vmem:[%s1315 + $0x148] sm:$0xff]
    %v1358 = vld [vmem:[%s1315 + $0x150] sm:$0xff]
    %v1359 = vld [vmem:[%s1315 + $0x158] sm:$0xff]
    %v1360 = vld [vmem:[%s1315 + $0x160] sm:$0xff]
    %v1361 = vld [vmem:[%s1315 + $0x168] sm:$0xff]
    %v1362 = vld [vmem:[%s1315 + $0x170] sm:$0xff]
    %v1363 = vld [vmem:[%s1315 + $0x178] sm:$0xff]
    %v1364 = vld [vmem:[%s1315 + $0x180] sm:$0xff]
    %v1365 = vld [vmem:[%s1315 + $0x188] sm:$0xff]
    %v1366 = vld [vmem:[%s1315 + $0x190] sm:$0xff]
    %v1367 = vld [vmem:[%s1315 + $0x198] sm:$0xff]
    %v1368 = vld [vmem:[%s1315 + $0x1a0] sm:$0xff]
    %v1369 = vld [vmem:[%s1315 + $0x1a8] sm:$0xff]
    %v1370 = vld [vmem:[%s1315 + $0x1b0] sm:$0xff]
    %v1371 = vld [vmem:[%s1315 + $0x1b8] sm:$0xff]
    %v1372 = vld [vmem:[%s1315 + $0x1c0] sm:$0xff]
    %v1373 = vld [vmem:[%s1315 + $0x1c8] sm:$0xff]
    %v1374 = vld [vmem:[%s1315 + $0x1d0] sm:$0xff]
    %v1375 = vld [vmem:[%s1315 + $0x1d8] sm:$0xff]
    %v1376 = vld [vmem:[%s1315 + $0x1e0] sm:$0xff]
    %v1377 = vld [vmem:[%s1315 + $0x1e8] sm:$0xff]
    %v1378 = vld [vmem:[%s1315 + $0x1f0] sm:$0xff]
    %v1379 = vld [vmem:[%s1315 + $0x1f8] sm:$0xff]
    %v1380 = vrot.slane %v609, 3
    %1382 = vmatprep.subr.bf16.mxu0 %v1317
    %1383 = vmatpush1.bf16.msra.mxu0 %v1316
    %1384 = vmatprep.subr.bf16.mxu0 %v1325
    %1385 = vmatpush1.bf16.msra.mxu0 %v1324
    %1386 = vmatprep.subr.bf16.mxu0 %v1333
    %1387 = vmatpush1.bf16.msra.mxu0 %v1332
    %1388 = vmatprep.subr.bf16.mxu0 %v1341
    %1389 = vmatpush1.bf16.msra.mxu0 %v1340
    %1390 = vmatprep.subr.bf16.mxu0 %v1349
    %1391 = vmatpush1.bf16.msra.mxu0 %v1348
    %1392 = vmatprep.subr.bf16.mxu0 %v1357
    %1393 = vmatpush1.bf16.msra.mxu0 %v1356
    %1394 = vmatprep.subr.bf16.mxu0 %v1365
    %1395 = vmatpush1.bf16.msra.mxu0 %v1364
    %1396 = vmatprep.subr.bf16.mxu0 %v1373
    %1397 = vmatpush1.bf16.msra.mxu0 %v1372
    %1398 = vmatprep.subr.bf16.mxu0 0
    %1399 = vmatpush1.bf16.msra.mxu0 0
    %1400 = vmatprep.subr.bf16.mxu0 0
    %1401 = vmatpush1.bf16.msra.mxu0 0
    %1402 = vmatprep.subr.bf16.mxu0 0
    %1403 = vmatpush1.bf16.msra.mxu0 0
    %1404 = vmatprep.subr.bf16.mxu0 0
    %1405 = vmatpush1.bf16.msra.mxu0 0
    %1406 = vmatprep.subr.bf16.mxu0 0
    %1407 = vmatpush1.bf16.msra.mxu0 0
    %1408 = vmatprep.subr.bf16.mxu0 0
    %1409 = vmatpush1.bf16.msra.mxu0 0
    %1410 = vmatprep.subr.bf16.mxu0 0
    %1411 = vmatpush1.bf16.msra.mxu0 0
    %1412 = vmatprep.subr.bf16.mxu0 0
    %1413 = vmatpush1.bf16.msra.mxu0 0
    %1414 = vmatprep.mubr.bf16.mxu0 0
    %1415 = vmatmul.mubr.bf16.gmra.mrb[0].mxu0 %v1380
    %v1416 = vpop.f32.mrb[0].mxu0
    %v1417 = vadd.f32 0.0, %v1416
    %v1418 = vpop.f32.mrb[0].mxu0
    %v1419 = vadd.f32 0.0, %v1418
    %v1420 = vpop.f32.mrb[0].mxu0
    %v1421 = vpop.f32.mrb[0].mxu0
    %1422 = vdwg.mxu0
    %1423 = vmatprep.subr.bf16.mxu0 %v1319
    %1424 = vmatpush1.bf16.msra.mxu0 %v1318
    %1425 = vmatprep.subr.bf16.mxu0 %v1327
    %1426 = vmatpush1.bf16.msra.mxu0 %v1326
    %1427 = vmatprep.subr.bf16.mxu0 %v1335
    %1428 = vmatpush1.bf16.msra.mxu0 %v1334
    %1429 = vmatprep.subr.bf16.mxu0 %v1343
    %1430 = vmatpush1.bf16.msra.mxu0 %v1342
    %1431 = vmatprep.subr.bf16.mxu0 %v1351
    %1432 = vmatpush1.bf16.msra.mxu0 %v1350
    %1433 = vmatprep.subr.bf16.mxu0 %v1359
    %1434 = vmatpush1.bf16.msra.mxu0 %v1358
    %1435 = vmatprep.subr.bf16.mxu0 %v1367
    %1436 = vmatpush1.bf16.msra.mxu0 %v1366
    %1437 = vmatprep.subr.bf16.mxu0 %v1375
    %1438 = vmatpush1.bf16.msra.mxu0 %v1374
    %1439 = vmatprep.subr.bf16.mxu0 0
    %1440 = vmatpush1.bf16.msra.mxu0 0
    %1441 = vmatprep.subr.bf16.mxu0 0
    %1442 = vmatpush1.bf16.msra.mxu0 0
    %1443 = vmatprep.subr.bf16.mxu0 0
    %1444 = vmatpush1.bf16.msra.mxu0 0
    %1445 = vmatprep.subr.bf16.mxu0 0
    %1446 = vmatpush1.bf16.msra.mxu0 0
    %1447 = vmatprep.subr.bf16.mxu0 0
    %1448 = vmatpush1.bf16.msra.mxu0 0
    %1449 = vmatprep.subr.bf16.mxu0 0
    %1450 = vmatpush1.bf16.msra.mxu0 0
    %1451 = vmatprep.subr.bf16.mxu0 0
    %1452 = vmatpush1.bf16.msra.mxu0 0
    %1453 = vmatprep.subr.bf16.mxu0 0
    %1454 = vmatpush1.bf16.msra.mxu0 0
    %1455 = vmatprep.mubr.bf16.mxu0 0
    %1456 = vmatmul.mubr.bf16.gmra.mrb[0].mxu0 %v1380
    %v1457 = vpop.f32.mrb[0].mxu0
    %v1458 = vadd.f32 0.0, %v1457
    %v1459 = vpop.f32.mrb[0].mxu0
    %v1460 = vadd.f32 0.0, %v1459
    %v1461 = vpop.f32.mrb[0].mxu0
    %v1462 = vpop.f32.mrb[0].mxu0
    %1463 = vdwg.mxu0
    %1464 = vmatprep.subr.bf16.mxu0 %v1321
    %1465 = vmatpush1.bf16.msra.mxu0 %v1320
    %1466 = vmatprep.subr.bf16.mxu0 %v1329
    %1467 = vmatpush1.bf16.msra.mxu0 %v1328
    %1468 = vmatprep.subr.bf16.mxu0 %v1337
    %1469 = vmatpush1.bf16.msra.mxu0 %v1336
    %1470 = vmatprep.subr.bf16.mxu0 %v1345
    %1471 = vmatpush1.bf16.msra.mxu0 %v1344
    %1472 = vmatprep.subr.bf16.mxu0 %v1353
    %1473 = vmatpush1.bf16.msra.mxu0 %v1352
    %1474 = vmatprep.subr.bf16.mxu0 %v1361
    %1475 = vmatpush1.bf16.msra.mxu0 %v1360
    %1476 = vmatprep.subr.bf16.mxu0 %v1369
    %1477 = vmatpush1.bf16.msra.mxu0 %v1368
    %1478 = vmatprep.subr.bf16.mxu0 %v1377
    %1479 = vmatpush1.bf16.msra.mxu0 %v1376
    %1480 = vmatprep.subr.bf16.mxu0 0
    %1481 = vmatpush1.bf16.msra.mxu0 0
    %1482 = vmatprep.subr.bf16.mxu0 0
    %1483 = vmatpush1.bf16.msra.mxu0 0
    %1484 = vmatprep.subr.bf16.mxu0 0
    %1485 = vmatpush1.bf16.msra.mxu0 0
    %1486 = vmatprep.subr.bf16.mxu0 0
    %1487 = vmatpush1.bf16.msra.mxu0 0
    %1488 = vmatprep.subr.bf16.mxu0 0
    %1489 = vmatpush1.bf16.msra.mxu0 0
    %1490 = vmatprep.subr.bf16.mxu0 0
    %1491 = vmatpush1.bf16.msra.mxu0 0
    %1492 = vmatprep.subr.bf16.mxu0 0
    %1493 = vmatpush1.bf16.msra.mxu0 0
    %1494 = vmatprep.subr.bf16.mxu0 0
    %1495 = vmatpush1.bf16.msra.mxu0 0
    %1496 = vmatprep.mubr.bf16.mxu0 0
    %1497 = vmatmul.mubr.bf16.gmra.mrb[0].mxu0 %v1380
    %v1498 = vpop.f32.mrb[0].mxu0
    %v1499 = vadd.f32 0.0, %v1498
    %v1500 = vpop.f32.mrb[0].mxu0
    %v1501 = vadd.f32 0.0, %v1500
    %v1502 = vpop.f32.mrb[0].mxu0
    %v1503 = vpop.f32.mrb[0].mxu0
    %1504 = vdwg.mxu0
    %1505 = vmatprep.subr.bf16.mxu0 %v1323
    %1506 = vmatpush1.bf16.msra.mxu0 %v1322
    %1507 = vmatprep.subr.bf16.mxu0 %v1331
    %1508 = vmatpush1.bf16.msra.mxu0 %v1330
    %1509 = vmatprep.subr.bf16.mxu0 %v1339
    %1510 = vmatpush1.bf16.msra.mxu0 %v1338
    %1511 = vmatprep.subr.bf16.mxu0 %v1347
    %1512 = vmatpush1.bf16.msra.mxu0 %v1346
    %1513 = vmatprep.subr.bf16.mxu0 %v1355
    %1514 = vmatpush1.bf16.msra.mxu0 %v1354
    %1515 = vmatprep.subr.bf16.mxu0 %v1363
    %1516 = vmatpush1.bf16.msra.mxu0 %v1362
    %1517 = vmatprep.subr.bf16.mxu0 %v1371
    %1518 = vmatpush1.bf16.msra.mxu0 %v1370
    %1519 = vmatprep.subr.bf16.mxu0 %v1379
    %1520 = vmatpush1.bf16.msra.mxu0 %v1378
    %1521 = vmatprep.subr.bf16.mxu0 0
    %1522 = vmatpush1.bf16.msra.mxu0 0
    %1523 = vmatprep.subr.bf16.mxu0 0
    %1524 = vmatpush1.bf16.msra.mxu0 0
    %1525 = vmatprep.subr.bf16.mxu0 0
    %1526 = vmatpush1.bf16.msra.mxu0 0
    %1527 = vmatprep.subr.bf16.mxu0 0
    %1528 = vmatpush1.bf16.msra.mxu0 0
    %1529 = vmatprep.subr.bf16.mxu0 0
    %1530 = vmatpush1.bf16.msra.mxu0 0
    %1531 = vmatprep.subr.bf16.mxu0 0
    %1532 = vmatpush1.bf16.msra.mxu0 0
    %1533 = vmatprep.subr.bf16.mxu0 0
    %1534 = vmatpush1.bf16.msra.mxu0 0
    %1535 = vmatprep.subr.bf16.mxu0 0
    %1536 = vmatpush1.bf16.msra.mxu0 0
    %1537 = vmatprep.mubr.bf16.mxu0 0
    %1538 = vmatmul.mubr.bf16.gmra.mrb[0].mxu0 %v1380
    %v1539 = vpop.f32.mrb[0].mxu0
    %v1540 = vadd.f32 0.0, %v1539
    %v1541 = vpop.f32.mrb[0].mxu0
    %v1542 = vadd.f32 0.0, %v1541
    %v1543 = vpop.f32.mrb[0].mxu0
    %v1544 = vpop.f32.mrb[0].mxu0
    %1545 = vdwg.mxu0
    %v1546 = vadd.f32 %v1307, %v1417
    %v1547 = vadd.f32 %v1308, %v1419
    %v1548 = vadd.f32 %v1309, %v1458
    %v1549 = vadd.f32 %v1310, %v1460
    %v1550 = vadd.f32 %v1311, %v1499
    %v1551 = vadd.f32 %v1312, %v1501
    %v1552 = vadd.f32 %v1313, %v1540
    %v1553 = vadd.f32 %v1314, %v1542
    %s1554 = sshll.u32 %s613, 4
    %1555 = dma.done %s124, %s1554
    %v1556 = vld [vmem:[%s123] sm:$0xff]
    %v1557 = vld [vmem:[%s123 + $0x8] sm:$0xff]
    %v1558 = vld [vmem:[%s123 + $0x10] sm:$0xff]
    %v1559 = vld [vmem:[%s123 + $0x18] sm:$0xff]
    %v1560 = vld [vmem:[%s123 + $0x20] sm:$0xff]
    %v1561 = vld [vmem:[%s123 + $0x28] sm:$0xff]
    %v1562 = vld [vmem:[%s123 + $0x30] sm:$0xff]
    %v1563 = vld [vmem:[%s123 + $0x38] sm:$0xff]
    %v1564 = vld [vmem:[%s123 + $0x40] sm:$0xff]
    %v1565 = vld [vmem:[%s123 + $0x48] sm:$0xff]
    %v1566 = vld [vmem:[%s123 + $0x50] sm:$0xff]
    %v1567 = vld [vmem:[%s123 + $0x58] sm:$0xff]
    %v1568 = vld [vmem:[%s123 + $0x60] sm:$0xff]
    %v1569 = vld [vmem:[%s123 + $0x68] sm:$0xff]
    %v1570 = vld [vmem:[%s123 + $0x70] sm:$0xff]
    %v1571 = vld [vmem:[%s123 + $0x78] sm:$0xff]
    %v1572 = vld [vmem:[%s123 + $0x80] sm:$0xff]
    %v1573 = vld [vmem:[%s123 + $0x88] sm:$0xff]
    %v1574 = vld [vmem:[%s123 + $0x90] sm:$0xff]
    %v1575 = vld [vmem:[%s123 + $0x98] sm:$0xff]
    %v1576 = vld [vmem:[%s123 + $0xa0] sm:$0xff]
    %v1577 = vld [vmem:[%s123 + $0xa8] sm:$0xff]
    %v1578 = vld [vmem:[%s123 + $0xb0] sm:$0xff]
    %v1579 = vld [vmem:[%s123 + $0xb8] sm:$0xff]
    %v1580 = vld [vmem:[%s123 + $0xc0] sm:$0xff]
    %v1581 = vld [vmem:[%s123 + $0xc8] sm:$0xff]
    %v1582 = vld [vmem:[%s123 + $0xd0] sm:$0xff]
    %v1583 = vld [vmem:[%s123 + $0xd8] sm:$0xff]
    %v1584 = vld [vmem:[%s123 + $0xe0] sm:$0xff]
    %v1585 = vld [vmem:[%s123 + $0xe8] sm:$0xff]
    %v1586 = vld [vmem:[%s123 + $0xf0] sm:$0xff]
    %v1587 = vld [vmem:[%s123 + $0xf8] sm:$0xff]
    %v1588 = vld [vmem:[%s123 + $0x100] sm:$0xff]
    %v1589 = vld [vmem:[%s123 + $0x108] sm:$0xff]
    %v1590 = vld [vmem:[%s123 + $0x110] sm:$0xff]
    %v1591 = vld [vmem:[%s123 + $0x118] sm:$0xff]
    %v1592 = vld [vmem:[%s123 + $0x120] sm:$0xff]
    %v1593 = vld [vmem:[%s123 + $0x128] sm:$0xff]
    %v1594 = vld [vmem:[%s123 + $0x130] sm:$0xff]
    %v1595 = vld [vmem:[%s123 + $0x138] sm:$0xff]
    %v1596 = vld [vmem:[%s123 + $0x140] sm:$0xff]
    %v1597 = vld [vmem:[%s123 + $0x148] sm:$0xff]
    %v1598 = vld [vmem:[%s123 + $0x150] sm:$0xff]
    %v1599 = vld [vmem:[%s123 + $0x158] sm:$0xff]
    %v1600 = vld [vmem:[%s123 + $0x160] sm:$0xff]
    %v1601 = vld [vmem:[%s123 + $0x168] sm:$0xff]
    %v1602 = vld [vmem:[%s123 + $0x170] sm:$0xff]
    %v1603 = vld [vmem:[%s123 + $0x178] sm:$0xff]
    %v1604 = vld [vmem:[%s123 + $0x180] sm:$0xff]
    %v1605 = vld [vmem:[%s123 + $0x188] sm:$0xff]
    %v1606 = vld [vmem:[%s123 + $0x190] sm:$0xff]
    %v1607 = vld [vmem:[%s123 + $0x198] sm:$0xff]
    %v1608 = vld [vmem:[%s123 + $0x1a0] sm:$0xff]
    %v1609 = vld [vmem:[%s123 + $0x1a8] sm:$0xff]
    %v1610 = vld [vmem:[%s123 + $0x1b0] sm:$0xff]
    %v1611 = vld [vmem:[%s123 + $0x1b8] sm:$0xff]
    %v1612 = vld [vmem:[%s123 + $0x1c0] sm:$0xff]
    %v1613 = vld [vmem:[%s123 + $0x1c8] sm:$0xff]
    %v1614 = vld [vmem:[%s123 + $0x1d0] sm:$0xff]
    %v1615 = vld [vmem:[%s123 + $0x1d8] sm:$0xff]
    %v1616 = vld [vmem:[%s123 + $0x1e0] sm:$0xff]
    %v1617 = vld [vmem:[%s123 + $0x1e8] sm:$0xff]
    %v1618 = vld [vmem:[%s123 + $0x1f0] sm:$0xff]
    %v1619 = vld [vmem:[%s123 + $0x1f8] sm:$0xff]
    %v1620 = vrot.slane %v609, 4
    %1622 = vmatprep.subr.bf16.mxu0 %v1557
    %1623 = vmatpush1.bf16.msra.mxu0 %v1556
    %1624 = vmatprep.subr.bf16.mxu0 %v1565
    %1625 = vmatpush1.bf16.msra.mxu0 %v1564
    %1626 = vmatprep.subr.bf16.mxu0 %v1573
    %1627 = vmatpush1.bf16.msra.mxu0 %v1572
    %1628 = vmatprep.subr.bf16.mxu0 %v1581
    %1629 = vmatpush1.bf16.msra.mxu0 %v1580
    %1630 = vmatprep.subr.bf16.mxu0 %v1589
    %1631 = vmatpush1.bf16.msra.mxu0 %v1588
    %1632 = vmatprep.subr.bf16.mxu0 %v1597
    %1633 = vmatpush1.bf16.msra.mxu0 %v1596
    %1634 = vmatprep.subr.bf16.mxu0 %v1605
    %1635 = vmatpush1.bf16.msra.mxu0 %v1604
    %1636 = vmatprep.subr.bf16.mxu0 %v1613
    %1637 = vmatpush1.bf16.msra.mxu0 %v1612
    %1638 = vmatprep.subr.bf16.mxu0 0
    %1639 = vmatpush1.bf16.msra.mxu0 0
    %1640 = vmatprep.subr.bf16.mxu0 0
    %1641 = vmatpush1.bf16.msra.mxu0 0
    %1642 = vmatprep.subr.bf16.mxu0 0
    %1643 = vmatpush1.bf16.msra.mxu0 0
    %1644 = vmatprep.subr.bf16.mxu0 0
    %1645 = vmatpush1.bf16.msra.mxu0 0
    %1646 = vmatprep.subr.bf16.mxu0 0
    %1647 = vmatpush1.bf16.msra.mxu0 0
    %1648 = vmatprep.subr.bf16.mxu0 0
    %1649 = vmatpush1.bf16.msra.mxu0 0
    %1650 = vmatprep.subr.bf16.mxu0 0
    %1651 = vmatpush1.bf16.msra.mxu0 0
    %1652 = vmatprep.subr.bf16.mxu0 0
    %1653 = vmatpush1.bf16.msra.mxu0 0
    %1654 = vmatprep.mubr.bf16.mxu0 0
    %1655 = vmatmul.mubr.bf16.gmra.mrb[0].mxu0 %v1620
    %v1656 = vpop.f32.mrb[0].mxu0
    %v1657 = vadd.f32 0.0, %v1656
    %v1658 = vpop.f32.mrb[0].mxu0
    %v1659 = vadd.f32 0.0, %v1658
    %v1660 = vpop.f32.mrb[0].mxu0
    %v1661 = vpop.f32.mrb[0].mxu0
    %1662 = vdwg.mxu0
    %1663 = vmatprep.subr.bf16.mxu0 %v1559
    %1664 = vmatpush1.bf16.msra.mxu0 %v1558
    %1665 = vmatprep.subr.bf16.mxu0 %v1567
    %1666 = vmatpush1.bf16.msra.mxu0 %v1566
    %1667 = vmatprep.subr.bf16.mxu0 %v1575
    %1668 = vmatpush1.bf16.msra.mxu0 %v1574
    %1669 = vmatprep.subr.bf16.mxu0 %v1583
    %1670 = vmatpush1.bf16.msra.mxu0 %v1582
    %1671 = vmatprep.subr.bf16.mxu0 %v1591
    %1672 = vmatpush1.bf16.msra.mxu0 %v1590
    %1673 = vmatprep.subr.bf16.mxu0 %v1599
    %1674 = vmatpush1.bf16.msra.mxu0 %v1598
    %1675 = vmatprep.subr.bf16.mxu0 %v1607
    %1676 = vmatpush1.bf16.msra.mxu0 %v1606
    %1677 = vmatprep.subr.bf16.mxu0 %v1615
    %1678 = vmatpush1.bf16.msra.mxu0 %v1614
    %1679 = vmatprep.subr.bf16.mxu0 0
    %1680 = vmatpush1.bf16.msra.mxu0 0
    %1681 = vmatprep.subr.bf16.mxu0 0
    %1682 = vmatpush1.bf16.msra.mxu0 0
    %1683 = vmatprep.subr.bf16.mxu0 0
    %1684 = vmatpush1.bf16.msra.mxu0 0
    %1685 = vmatprep.subr.bf16.mxu0 0
    %1686 = vmatpush1.bf16.msra.mxu0 0
    %1687 = vmatprep.subr.bf16.mxu0 0
    %1688 = vmatpush1.bf16.msra.mxu0 0
    %1689 = vmatprep.subr.bf16.mxu0 0
    %1690 = vmatpush1.bf16.msra.mxu0 0
    %1691 = vmatprep.subr.bf16.mxu0 0
    %1692 = vmatpush1.bf16.msra.mxu0 0
    %1693 = vmatprep.subr.bf16.mxu0 0
    %1694 = vmatpush1.bf16.msra.mxu0 0
    %1695 = vmatprep.mubr.bf16.mxu0 0
    %1696 = vmatmul.mubr.bf16.gmra.mrb[0].mxu0 %v1620
    %v1697 = vpop.f32.mrb[0].mxu0
    %v1698 = vadd.f32 0.0, %v1697
    %v1699 = vpop.f32.mrb[0].mxu0
    %v1700 = vadd.f32 0.0, %v1699
    %v1701 = vpop.f32.mrb[0].mxu0
    %v1702 = vpop.f32.mrb[0].mxu0
    %1703 = vdwg.mxu0
    %1704 = vmatprep.subr.bf16.mxu0 %v1561
    %1705 = vmatpush1.bf16.msra.mxu0 %v1560
    %1706 = vmatprep.subr.bf16.mxu0 %v1569
    %1707 = vmatpush1.bf16.msra.mxu0 %v1568
    %1708 = vmatprep.subr.bf16.mxu0 %v1577
    %1709 = vmatpush1.bf16.msra.mxu0 %v1576
    %1710 = vmatprep.subr.bf16.mxu0 %v1585
    %1711 = vmatpush1.bf16.msra.mxu0 %v1584
    %1712 = vmatprep.subr.bf16.mxu0 %v1593
    %1713 = vmatpush1.bf16.msra.mxu0 %v1592
    %1714 = vmatprep.subr.bf16.mxu0 %v1601
    %1715 = vmatpush1.bf16.msra.mxu0 %v1600
    %1716 = vmatprep.subr.bf16.mxu0 %v1609
    %1717 = vmatpush1.bf16.msra.mxu0 %v1608
    %1718 = vmatprep.subr.bf16.mxu0 %v1617
    %1719 = vmatpush1.bf16.msra.mxu0 %v1616
    %1720 = vmatprep.subr.bf16.mxu0 0
    %1721 = vmatpush1.bf16.msra.mxu0 0
    %1722 = vmatprep.subr.bf16.mxu0 0
    %1723 = vmatpush1.bf16.msra.mxu0 0
    %1724 = vmatprep.subr.bf16.mxu0 0
    %1725 = vmatpush1.bf16.msra.mxu0 0
    %1726 = vmatprep.subr.bf16.mxu0 0
    %1727 = vmatpush1.bf16.msra.mxu0 0
    %1728 = vmatprep.subr.bf16.mxu0 0
    %1729 = vmatpush1.bf16.msra.mxu0 0
    %1730 = vmatprep.subr.bf16.mxu0 0
    %1731 = vmatpush1.bf16.msra.mxu0 0
    %1732 = vmatprep.subr.bf16.mxu0 0
    %1733 = vmatpush1.bf16.msra.mxu0 0
    %1734 = vmatprep.subr.bf16.mxu0 0
    %1735 = vmatpush1.bf16.msra.mxu0 0
    %1736 = vmatprep.mubr.bf16.mxu0 0
    %1737 = vmatmul.mubr.bf16.gmra.mrb[0].mxu0 %v1620
    %v1738 = vpop.f32.mrb[0].mxu0
    %v1739 = vadd.f32 0.0, %v1738
    %v1740 = vpop.f32.mrb[0].mxu0
    %v1741 = vadd.f32 0.0, %v1740
    %v1742 = vpop.f32.mrb[0].mxu0
    %v1743 = vpop.f32.mrb[0].mxu0
    %1744 = vdwg.mxu0
    %1745 = vmatprep.subr.bf16.mxu0 %v1563
    %1746 = vmatpush1.bf16.msra.mxu0 %v1562
    %1747 = vmatprep.subr.bf16.mxu0 %v1571
    %1748 = vmatpush1.bf16.msra.mxu0 %v1570
    %1749 = vmatprep.subr.bf16.mxu0 %v1579
    %1750 = vmatpush1.bf16.msra.mxu0 %v1578
    %1751 = vmatprep.subr.bf16.mxu0 %v1587
    %1752 = vmatpush1.bf16.msra.mxu0 %v1586
    %1753 = vmatprep.subr.bf16.mxu0 %v1595
    %1754 = vmatpush1.bf16.msra.mxu0 %v1594
    %1755 = vmatprep.subr.bf16.mxu0 %v1603
    %1756 = vmatpush1.bf16.msra.mxu0 %v1602
    %1757 = vmatprep.subr.bf16.mxu0 %v1611
    %1758 = vmatpush1.bf16.msra.mxu0 %v1610
    %1759 = vmatprep.subr.bf16.mxu0 %v1619
    %1760 = vmatpush1.bf16.msra.mxu0 %v1618
    %1761 = vmatprep.subr.bf16.mxu0 0
    %1762 = vmatpush1.bf16.msra.mxu0 0
    %1763 = vmatprep.subr.bf16.mxu0 0
    %1764 = vmatpush1.bf16.msra.mxu0 0
    %1765 = vmatprep.subr.bf16.mxu0 0
    %1766 = vmatpush1.bf16.msra.mxu0 0
    %1767 = vmatprep.subr.bf16.mxu0 0
    %1768 = vmatpush1.bf16.msra.mxu0 0
    %1769 = vmatprep.subr.bf16.mxu0 0
    %1770 = vmatpush1.bf16.msra.mxu0 0
    %1771 = vmatprep.subr.bf16.mxu0 0
    %1772 = vmatpush1.bf16.msra.mxu0 0
    %1773 = vmatprep.subr.bf16.mxu0 0
    %1774 = vmatpush1.bf16.msra.mxu0 0
    %1775 = vmatprep.subr.bf16.mxu0 0
    %1776 = vmatpush1.bf16.msra.mxu0 0
    %1777 = vmatprep.mubr.bf16.mxu0 0
    %1778 = vmatmul.mubr.bf16.gmra.mrb[0].mxu0 %v1620
    %v1779 = vpop.f32.mrb[0].mxu0
    %v1780 = vadd.f32 0.0, %v1779
    %v1781 = vpop.f32.mrb[0].mxu0
    %v1782 = vadd.f32 0.0, %v1781
    %v1783 = vpop.f32.mrb[0].mxu0
    %v1784 = vpop.f32.mrb[0].mxu0
    %1785 = vdwg.mxu0
    %v1786 = vadd.f32 %v1546, %v1657
    %v1787 = vadd.f32 %v1547, %v1659
    %v1788 = vadd.f32 %v1548, %v1698
    %v1789 = vadd.f32 %v1549, %v1700
    %v1790 = vadd.f32 %v1550, %v1739
    %v1791 = vadd.f32 %v1551, %v1741
    %v1792 = vadd.f32 %v1552, %v1780
    %v1793 = vadd.f32 %v1553, %v1782
    %s1794 = scalar_lea.vmem [#allocation2], 2560
    %v1795 = vld [vmem:[%s1794] sm:$0xff]
    %v1796 = vld [vmem:[%s1794 + $0x8] sm:$0xff]
    %v1797 = vld [vmem:[%s1794 + $0x10] sm:$0xff]
    %v1798 = vld [vmem:[%s1794 + $0x18] sm:$0xff]
    %v1799 = vld [vmem:[%s1794 + $0x20] sm:$0xff]
    %v1800 = vld [vmem:[%s1794 + $0x28] sm:$0xff]
    %v1801 = vld [vmem:[%s1794 + $0x30] sm:$0xff]
    %v1802 = vld [vmem:[%s1794 + $0x38] sm:$0xff]
    %v1803 = vld [vmem:[%s1794 + $0x40] sm:$0xff]
    %v1804 = vld [vmem:[%s1794 + $0x48] sm:$0xff]
    %v1805 = vld [vmem:[%s1794 + $0x50] sm:$0xff]
    %v1806 = vld [vmem:[%s1794 + $0x58] sm:$0xff]
    %v1807 = vld [vmem:[%s1794 + $0x60] sm:$0xff]
    %v1808 = vld [vmem:[%s1794 + $0x68] sm:$0xff]
    %v1809 = vld [vmem:[%s1794 + $0x70] sm:$0xff]
    %v1810 = vld [vmem:[%s1794 + $0x78] sm:$0xff]
    %v1811 = vld [vmem:[%s1794 + $0x80] sm:$0xff]
    %v1812 = vld [vmem:[%s1794 + $0x88] sm:$0xff]
    %v1813 = vld [vmem:[%s1794 + $0x90] sm:$0xff]
    %v1814 = vld [vmem:[%s1794 + $0x98] sm:$0xff]
    %v1815 = vld [vmem:[%s1794 + $0xa0] sm:$0xff]
    %v1816 = vld [vmem:[%s1794 + $0xa8] sm:$0xff]
    %v1817 = vld [vmem:[%s1794 + $0xb0] sm:$0xff]
    %v1818 = vld [vmem:[%s1794 + $0xb8] sm:$0xff]
    %v1819 = vld [vmem:[%s1794 + $0xc0] sm:$0xff]
    %v1820 = vld [vmem:[%s1794 + $0xc8] sm:$0xff]
    %v1821 = vld [vmem:[%s1794 + $0xd0] sm:$0xff]
    %v1822 = vld [vmem:[%s1794 + $0xd8] sm:$0xff]
    %v1823 = vld [vmem:[%s1794 + $0xe0] sm:$0xff]
    %v1824 = vld [vmem:[%s1794 + $0xe8] sm:$0xff]
    %v1825 = vld [vmem:[%s1794 + $0xf0] sm:$0xff]
    %v1826 = vld [vmem:[%s1794 + $0xf8] sm:$0xff]
    %v1827 = vld [vmem:[%s1794 + $0x100] sm:$0xff]
    %v1828 = vld [vmem:[%s1794 + $0x108] sm:$0xff]
    %v1829 = vld [vmem:[%s1794 + $0x110] sm:$0xff]
    %v1830 = vld [vmem:[%s1794 + $0x118] sm:$0xff]
    %v1831 = vld [vmem:[%s1794 + $0x120] sm:$0xff]
    %v1832 = vld [vmem:[%s1794 + $0x128] sm:$0xff]
    %v1833 = vld [vmem:[%s1794 + $0x130] sm:$0xff]
    %v1834 = vld [vmem:[%s1794 + $0x138] sm:$0xff]
    %v1835 = vld [vmem:[%s1794 + $0x140] sm:$0xff]
    %v1836 = vld [vmem:[%s1794 + $0x148] sm:$0xff]
    %v1837 = vld [vmem:[%s1794 + $0x150] sm:$0xff]
    %v1838 = vld [vmem:[%s1794 + $0x158] sm:$0xff]
    %v1839 = vld [vmem:[%s1794 + $0x160] sm:$0xff]
    %v1840 = vld [vmem:[%s1794 + $0x168] sm:$0xff]
    %v1841 = vld [vmem:[%s1794 + $0x170] sm:$0xff]
    %v1842 = vld [vmem:[%s1794 + $0x178] sm:$0xff]
    %v1843 = vld [vmem:[%s1794 + $0x180] sm:$0xff]
    %v1844 = vld [vmem:[%s1794 + $0x188] sm:$0xff]
    %v1845 = vld [vmem:[%s1794 + $0x190] sm:$0xff]
    %v1846 = vld [vmem:[%s1794 + $0x198] sm:$0xff]
    %v1847 = vld [vmem:[%s1794 + $0x1a0] sm:$0xff]
    %v1848 = vld [vmem:[%s1794 + $0x1a8] sm:$0xff]
    %v1849 = vld [vmem:[%s1794 + $0x1b0] sm:$0xff]
    %v1850 = vld [vmem:[%s1794 + $0x1b8] sm:$0xff]
    %v1851 = vld [vmem:[%s1794 + $0x1c0] sm:$0xff]
    %v1852 = vld [vmem:[%s1794 + $0x1c8] sm:$0xff]
    %v1853 = vld [vmem:[%s1794 + $0x1d0] sm:$0xff]
    %v1854 = vld [vmem:[%s1794 + $0x1d8] sm:$0xff]
    %v1855 = vld [vmem:[%s1794 + $0x1e0] sm:$0xff]
    %v1856 = vld [vmem:[%s1794 + $0x1e8] sm:$0xff]
    %v1857 = vld [vmem:[%s1794 + $0x1f0] sm:$0xff]
    %v1858 = vld [vmem:[%s1794 + $0x1f8] sm:$0xff]
    %v1859 = vrot.slane %v609, 5
    %1861 = vmatprep.subr.bf16.mxu0 %v1796
    %1862 = vmatpush1.bf16.msra.mxu0 %v1795
    %1863 = vmatprep.subr.bf16.mxu0 %v1804
    %1864 = vmatpush1.bf16.msra.mxu0 %v1803
    %1865 = vmatprep.subr.bf16.mxu0 %v1812
    %1866 = vmatpush1.bf16.msra.mxu0 %v1811
    %1867 = vmatprep.subr.bf16.mxu0 %v1820
    %1868 = vmatpush1.bf16.msra.mxu0 %v1819
    %1869 = vmatprep.subr.bf16.mxu0 %v1828
    %1870 = vmatpush1.bf16.msra.mxu0 %v1827
    %1871 = vmatprep.subr.bf16.mxu0 %v1836
    %1872 = vmatpush1.bf16.msra.mxu0 %v1835
    %1873 = vmatprep.subr.bf16.mxu0 %v1844
    %1874 = vmatpush1.bf16.msra.mxu0 %v1843
    %1875 = vmatprep.subr.bf16.mxu0 %v1852
    %1876 = vmatpush1.bf16.msra.mxu0 %v1851
    %1877 = vmatprep.subr.bf16.mxu0 0
    %1878 = vmatpush1.bf16.msra.mxu0 0
    %1879 = vmatprep.subr.bf16.mxu0 0
    %1880 = vmatpush1.bf16.msra.mxu0 0
    %1881 = vmatprep.subr.bf16.mxu0 0
    %1882 = vmatpush1.bf16.msra.mxu0 0
    %1883 = vmatprep.subr.bf16.mxu0 0
    %1884 = vmatpush1.bf16.msra.mxu0 0
    %1885 = vmatprep.subr.bf16.mxu0 0
    %1886 = vmatpush1.bf16.msra.mxu0 0
    %1887 = vmatprep.subr.bf16.mxu0 0
    %1888 = vmatpush1.bf16.msra.mxu0 0
    %1889 = vmatprep.subr.bf16.mxu0 0
    %1890 = vmatpush1.bf16.msra.mxu0 0
    %1891 = vmatprep.subr.bf16.mxu0 0
    %1892 = vmatpush1.bf16.msra.mxu0 0
    %1893 = vmatprep.mubr.bf16.mxu0 0
    %1894 = vmatmul.mubr.bf16.gmra.mrb[0].mxu0 %v1859
    %v1895 = vpop.f32.mrb[0].mxu0
    %v1896 = vadd.f32 0.0, %v1895
    %v1897 = vpop.f32.mrb[0].mxu0
    %v1898 = vadd.f32 0.0, %v1897
    %v1899 = vpop.f32.mrb[0].mxu0
    %v1900 = vpop.f32.mrb[0].mxu0
    %1901 = vdwg.mxu0
    %1902 = vmatprep.subr.bf16.mxu0 %v1798
    %1903 = vmatpush1.bf16.msra.mxu0 %v1797
    %1904 = vmatprep.subr.bf16.mxu0 %v1806
    %1905 = vmatpush1.bf16.msra.mxu0 %v1805
    %1906 = vmatprep.subr.bf16.mxu0 %v1814
    %1907 = vmatpush1.bf16.msra.mxu0 %v1813
    %1908 = vmatprep.subr.bf16.mxu0 %v1822
    %1909 = vmatpush1.bf16.msra.mxu0 %v1821
    %1910 = vmatprep.subr.bf16.mxu0 %v1830
    %1911 = vmatpush1.bf16.msra.mxu0 %v1829
    %1912 = vmatprep.subr.bf16.mxu0 %v1838
    %1913 = vmatpush1.bf16.msra.mxu0 %v1837
    %1914 = vmatprep.subr.bf16.mxu0 %v1846
    %1915 = vmatpush1.bf16.msra.mxu0 %v1845
    %1916 = vmatprep.subr.bf16.mxu0 %v1854
    %1917 = vmatpush1.bf16.msra.mxu0 %v1853
    %1918 = vmatprep.subr.bf16.mxu0 0
    %1919 = vmatpush1.bf16.msra.mxu0 0
    %1920 = vmatprep.subr.bf16.mxu0 0
    %1921 = vmatpush1.bf16.msra.mxu0 0
    %1922 = vmatprep.subr.bf16.mxu0 0
    %1923 = vmatpush1.bf16.msra.mxu0 0
    %1924 = vmatprep.subr.bf16.mxu0 0
    %1925 = vmatpush1.bf16.msra.mxu0 0
    %1926 = vmatprep.subr.bf16.mxu0 0
    %1927 = vmatpush1.bf16.msra.mxu0 0
    %1928 = vmatprep.subr.bf16.mxu0 0
    %1929 = vmatpush1.bf16.msra.mxu0 0
    %1930 = vmatprep.subr.bf16.mxu0 0
    %1931 = vmatpush1.bf16.msra.mxu0 0
    %1932 = vmatprep.subr.bf16.mxu0 0
    %1933 = vmatpush1.bf16.msra.mxu0 0
    %1934 = vmatprep.mubr.bf16.mxu0 0
    %1935 = vmatmul.mubr.bf16.gmra.mrb[0].mxu0 %v1859
    %v1936 = vpop.f32.mrb[0].mxu0
    %v1937 = vadd.f32 0.0, %v1936
    %v1938 = vpop.f32.mrb[0].mxu0
    %v1939 = vadd.f32 0.0, %v1938
    %v1940 = vpop.f32.mrb[0].mxu0
    %v1941 = vpop.f32.mrb[0].mxu0
    %1942 = vdwg.mxu0
    %1943 = vmatprep.subr.bf16.mxu0 %v1800
    %1944 = vmatpush1.bf16.msra.mxu0 %v1799
    %1945 = vmatprep.subr.bf16.mxu0 %v1808
    %1946 = vmatpush1.bf16.msra.mxu0 %v1807
    %1947 = vmatprep.subr.bf16.mxu0 %v1816
    %1948 = vmatpush1.bf16.msra.mxu0 %v1815
    %1949 = vmatprep.subr.bf16.mxu0 %v1824
    %1950 = vmatpush1.bf16.msra.mxu0 %v1823
    %1951 = vmatprep.subr.bf16.mxu0 %v1832
    %1952 = vmatpush1.bf16.msra.mxu0 %v1831
    %1953 = vmatprep.subr.bf16.mxu0 %v1840
    %1954 = vmatpush1.bf16.msra.mxu0 %v1839
    %1955 = vmatprep.subr.bf16.mxu0 %v1848
    %1956 = vmatpush1.bf16.msra.mxu0 %v1847
    %1957 = vmatprep.subr.bf16.mxu0 %v1856
    %1958 = vmatpush1.bf16.msra.mxu0 %v1855
    %1959 = vmatprep.subr.bf16.mxu0 0
    %1960 = vmatpush1.bf16.msra.mxu0 0
    %1961 = vmatprep.subr.bf16.mxu0 0
    %1962 = vmatpush1.bf16.msra.mxu0 0
    %1963 = vmatprep.subr.bf16.mxu0 0
    %1964 = vmatpush1.bf16.msra.mxu0 0
    %1965 = vmatprep.subr.bf16.mxu0 0
    %1966 = vmatpush1.bf16.msra.mxu0 0
    %1967 = vmatprep.subr.bf16.mxu0 0
    %1968 = vmatpush1.bf16.msra.mxu0 0
    %1969 = vmatprep.subr.bf16.mxu0 0
    %1970 = vmatpush1.bf16.msra.mxu0 0
    %1971 = vmatprep.subr.bf16.mxu0 0
    %1972 = vmatpush1.bf16.msra.mxu0 0
    %1973 = vmatprep.subr.bf16.mxu0 0
    %1974 = vmatpush1.bf16.msra.mxu0 0
    %1975 = vmatprep.mubr.bf16.mxu0 0
    %1976 = vmatmul.mubr.bf16.gmra.mrb[0].mxu0 %v1859
    %v1977 = vpop.f32.mrb[0].mxu0
    %v1978 = vadd.f32 0.0, %v1977
    %v1979 = vpop.f32.mrb[0].mxu0
    %v1980 = vadd.f32 0.0, %v1979
    %v1981 = vpop.f32.mrb[0].mxu0
    %v1982 = vpop.f32.mrb[0].mxu0
    %1983 = vdwg.mxu0
    %1984 = vmatprep.subr.bf16.mxu0 %v1802
    %1985 = vmatpush1.bf16.msra.mxu0 %v1801
    %1986 = vmatprep.subr.bf16.mxu0 %v1810
    %1987 = vmatpush1.bf16.msra.mxu0 %v1809
    %1988 = vmatprep.subr.bf16.mxu0 %v1818
    %1989 = vmatpush1.bf16.msra.mxu0 %v1817
    %1990 = vmatprep.subr.bf16.mxu0 %v1826
    %1991 = vmatpush1.bf16.msra.mxu0 %v1825
    %1992 = vmatprep.subr.bf16.mxu0 %v1834
    %1993 = vmatpush1.bf16.msra.mxu0 %v1833
    %1994 = vmatprep.subr.bf16.mxu0 %v1842
    %1995 = vmatpush1.bf16.msra.mxu0 %v1841
    %1996 = vmatprep.subr.bf16.mxu0 %v1850
    %1997 = vmatpush1.bf16.msra.mxu0 %v1849
    %1998 = vmatprep.subr.bf16.mxu0 %v1858
    %1999 = vmatpush1.bf16.msra.mxu0 %v1857
    %2000 = vmatprep.subr.bf16.mxu0 0
    %2001 = vmatpush1.bf16.msra.mxu0 0
    %2002 = vmatprep.subr.bf16.mxu0 0
    %2003 = vmatpush1.bf16.msra.mxu0 0
    %2004 = vmatprep.subr.bf16.mxu0 0
    %2005 = vmatpush1.bf16.msra.mxu0 0
    %2006 = vmatprep.subr.bf16.mxu0 0
    %2007 = vmatpush1.bf16.msra.mxu0 0
    %2008 = vmatprep.subr.bf16.mxu0 0
    %2009 = vmatpush1.bf16.msra.mxu0 0
    %2010 = vmatprep.subr.bf16.mxu0 0
    %2011 = vmatpush1.bf16.msra.mxu0 0
    %2012 = vmatprep.subr.bf16.mxu0 0
    %2013 = vmatpush1.bf16.msra.mxu0 0
    %2014 = vmatprep.subr.bf16.mxu0 0
    %2015 = vmatpush1.bf16.msra.mxu0 0
    %2016 = vmatprep.mubr.bf16.mxu0 0
    %2017 = vmatmul.mubr.bf16.gmra.mrb[0].mxu0 %v1859
    %v2018 = vpop.f32.mrb[0].mxu0
    %v2019 = vadd.f32 0.0, %v2018
    %v2020 = vpop.f32.mrb[0].mxu0
    %v2021 = vadd.f32 0.0, %v2020
    %v2022 = vpop.f32.mrb[0].mxu0
    %v2023 = vpop.f32.mrb[0].mxu0
    %2024 = vdwg.mxu0
    %v2025 = vadd.f32 %v1786, %v1896
    %v2026 = vadd.f32 %v1787, %v1898
    %v2027 = vadd.f32 %v1788, %v1937
    %v2028 = vadd.f32 %v1789, %v1939
    %v2029 = vadd.f32 %v1790, %v1978
    %v2030 = vadd.f32 %v1791, %v1980
    %v2031 = vadd.f32 %v1792, %v2019
    %v2032 = vadd.f32 %v1793, %v2021
    %s2033 = scalar_lea.vmem [#allocation2], 3072
    %v2034 = vld [vmem:[%s2033] sm:$0xff]
    %v2035 = vld [vmem:[%s2033 + $0x8] sm:$0xff]
    %v2036 = vld [vmem:[%s2033 + $0x10] sm:$0xff]
    %v2037 = vld [vmem:[%s2033 + $0x18] sm:$0xff]
    %v2038 = vld [vmem:[%s2033 + $0x20] sm:$0xff]
    %v2039 = vld [vmem:[%s2033 + $0x28] sm:$0xff]
    %v2040 = vld [vmem:[%s2033 + $0x30] sm:$0xff]
    %v2041 = vld [vmem:[%s2033 + $0x38] sm:$0xff]
    %v2042 = vld [vmem:[%s2033 + $0x40] sm:$0xff]
    %v2043 = vld [vmem:[%s2033 + $0x48] sm:$0xff]
    %v2044 = vld [vmem:[%s2033 + $0x50] sm:$0xff]
    %v2045 = vld [vmem:[%s2033 + $0x58] sm:$0xff]
    %v2046 = vld [vmem:[%s2033 + $0x60] sm:$0xff]
    %v2047 = vld [vmem:[%s2033 + $0x68] sm:$0xff]
    %v2048 = vld [vmem:[%s2033 + $0x70] sm:$0xff]
    %v2049 = vld [vmem:[%s2033 + $0x78] sm:$0xff]
    %v2050 = vld [vmem:[%s2033 + $0x80] sm:$0xff]
    %v2051 = vld [vmem:[%s2033 + $0x88] sm:$0xff]
    %v2052 = vld [vmem:[%s2033 + $0x90] sm:$0xff]
    %v2053 = vld [vmem:[%s2033 + $0x98] sm:$0xff]
    %v2054 = vld [vmem:[%s2033 + $0xa0] sm:$0xff]
    %v2055 = vld [vmem:[%s2033 + $0xa8] sm:$0xff]
    %v2056 = vld [vmem:[%s2033 + $0xb0] sm:$0xff]
    %v2057 = vld [vmem:[%s2033 + $0xb8] sm:$0xff]
    %v2058 = vld [vmem:[%s2033 + $0xc0] sm:$0xff]
    %v2059 = vld [vmem:[%s2033 + $0xc8] sm:$0xff]
    %v2060 = vld [vmem:[%s2033 + $0xd0] sm:$0xff]
    %v2061 = vld [vmem:[%s2033 + $0xd8] sm:$0xff]
    %v2062 = vld [vmem:[%s2033 + $0xe0] sm:$0xff]
    %v2063 = vld [vmem:[%s2033 + $0xe8] sm:$0xff]
    %v2064 = vld [vmem:[%s2033 + $0xf0] sm:$0xff]
    %v2065 = vld [vmem:[%s2033 + $0xf8] sm:$0xff]
    %v2066 = vld [vmem:[%s2033 + $0x100] sm:$0xff]
    %v2067 = vld [vmem:[%s2033 + $0x108] sm:$0xff]
    %v2068 = vld [vmem:[%s2033 + $0x110] sm:$0xff]
    %v2069 = vld [vmem:[%s2033 + $0x118] sm:$0xff]
    %v2070 = vld [vmem:[%s2033 + $0x120] sm:$0xff]
    %v2071 = vld [vmem:[%s2033 + $0x128] sm:$0xff]
    %v2072 = vld [vmem:[%s2033 + $0x130] sm:$0xff]
    %v2073 = vld [vmem:[%s2033 + $0x138] sm:$0xff]
    %v2074 = vld [vmem:[%s2033 + $0x140] sm:$0xff]
    %v2075 = vld [vmem:[%s2033 + $0x148] sm:$0xff]
    %v2076 = vld [vmem:[%s2033 + $0x150] sm:$0xff]
    %v2077 = vld [vmem:[%s2033 + $0x158] sm:$0xff]
    %v2078 = vld [vmem:[%s2033 + $0x160] sm:$0xff]
    %v2079 = vld [vmem:[%s2033 + $0x168] sm:$0xff]
    %v2080 = vld [vmem:[%s2033 + $0x170] sm:$0xff]
    %v2081 = vld [vmem:[%s2033 + $0x178] sm:$0xff]
    %v2082 = vld [vmem:[%s2033 + $0x180] sm:$0xff]
    %v2083 = vld [vmem:[%s2033 + $0x188] sm:$0xff]
    %v2084 = vld [vmem:[%s2033 + $0x190] sm:$0xff]
    %v2085 = vld [vmem:[%s2033 + $0x198] sm:$0xff]
    %v2086 = vld [vmem:[%s2033 + $0x1a0] sm:$0xff]
    %v2087 = vld [vmem:[%s2033 + $0x1a8] sm:$0xff]
    %v2088 = vld [vmem:[%s2033 + $0x1b0] sm:$0xff]
    %v2089 = vld [vmem:[%s2033 + $0x1b8] sm:$0xff]
    %v2090 = vld [vmem:[%s2033 + $0x1c0] sm:$0xff]
    %v2091 = vld [vmem:[%s2033 + $0x1c8] sm:$0xff]
    %v2092 = vld [vmem:[%s2033 + $0x1d0] sm:$0xff]
    %v2093 = vld [vmem:[%s2033 + $0x1d8] sm:$0xff]
    %v2094 = vld [vmem:[%s2033 + $0x1e0] sm:$0xff]
    %v2095 = vld [vmem:[%s2033 + $0x1e8] sm:$0xff]
    %v2096 = vld [vmem:[%s2033 + $0x1f0] sm:$0xff]
    %v2097 = vld [vmem:[%s2033 + $0x1f8] sm:$0xff]
    %v2098 = vrot.slane %v609, 6
    %2100 = vmatprep.subr.bf16.mxu0 %v2035
    %2101 = vmatpush1.bf16.msra.mxu0 %v2034
    %2102 = vmatprep.subr.bf16.mxu0 %v2043
    %2103 = vmatpush1.bf16.msra.mxu0 %v2042
    %2104 = vmatprep.subr.bf16.mxu0 %v2051
    %2105 = vmatpush1.bf16.msra.mxu0 %v2050
    %2106 = vmatprep.subr.bf16.mxu0 %v2059
    %2107 = vmatpush1.bf16.msra.mxu0 %v2058
    %2108 = vmatprep.subr.bf16.mxu0 %v2067
    %2109 = vmatpush1.bf16.msra.mxu0 %v2066
    %2110 = vmatprep.subr.bf16.mxu0 %v2075
    %2111 = vmatpush1.bf16.msra.mxu0 %v2074
    %2112 = vmatprep.subr.bf16.mxu0 %v2083
    %2113 = vmatpush1.bf16.msra.mxu0 %v2082
    %2114 = vmatprep.subr.bf16.mxu0 %v2091
    %2115 = vmatpush1.bf16.msra.mxu0 %v2090
    %2116 = vmatprep.subr.bf16.mxu0 0
    %2117 = vmatpush1.bf16.msra.mxu0 0
    %2118 = vmatprep.subr.bf16.mxu0 0
    %2119 = vmatpush1.bf16.msra.mxu0 0
    %2120 = vmatprep.subr.bf16.mxu0 0
    %2121 = vmatpush1.bf16.msra.mxu0 0
    %2122 = vmatprep.subr.bf16.mxu0 0
    %2123 = vmatpush1.bf16.msra.mxu0 0
    %2124 = vmatprep.subr.bf16.mxu0 0
    %2125 = vmatpush1.bf16.msra.mxu0 0
    %2126 = vmatprep.subr.bf16.mxu0 0
    %2127 = vmatpush1.bf16.msra.mxu0 0
    %2128 = vmatprep.subr.bf16.mxu0 0
    %2129 = vmatpush1.bf16.msra.mxu0 0
    %2130 = vmatprep.subr.bf16.mxu0 0
    %2131 = vmatpush1.bf16.msra.mxu0 0
    %2132 = vmatprep.mubr.bf16.mxu0 0
    %2133 = vmatmul.mubr.bf16.gmra.mrb[0].mxu0 %v2098
    %v2134 = vpop.f32.mrb[0].mxu0
    %v2135 = vadd.f32 0.0, %v2134
    %v2136 = vpop.f32.mrb[0].mxu0
    %v2137 = vadd.f32 0.0, %v2136
    %v2138 = vpop.f32.mrb[0].mxu0
    %v2139 = vpop.f32.mrb[0].mxu0
    %2140 = vdwg.mxu0
    %2141 = vmatprep.subr.bf16.mxu0 %v2037
    %2142 = vmatpush1.bf16.msra.mxu0 %v2036
    %2143 = vmatprep.subr.bf16.mxu0 %v2045
    %2144 = vmatpush1.bf16.msra.mxu0 %v2044
    %2145 = vmatprep.subr.bf16.mxu0 %v2053
    %2146 = vmatpush1.bf16.msra.mxu0 %v2052
    %2147 = vmatprep.subr.bf16.mxu0 %v2061
    %2148 = vmatpush1.bf16.msra.mxu0 %v2060
    %2149 = vmatprep.subr.bf16.mxu0 %v2069
    %2150 = vmatpush1.bf16.msra.mxu0 %v2068
    %2151 = vmatprep.subr.bf16.mxu0 %v2077
    %2152 = vmatpush1.bf16.msra.mxu0 %v2076
    %2153 = vmatprep.subr.bf16.mxu0 %v2085
    %2154 = vmatpush1.bf16.msra.mxu0 %v2084
    %2155 = vmatprep.subr.bf16.mxu0 %v2093
    %2156 = vmatpush1.bf16.msra.mxu0 %v2092
    %2157 = vmatprep.subr.bf16.mxu0 0
    %2158 = vmatpush1.bf16.msra.mxu0 0
    %2159 = vmatprep.subr.bf16.mxu0 0
    %2160 = vmatpush1.bf16.msra.mxu0 0
    %2161 = vmatprep.subr.bf16.mxu0 0
    %2162 = vmatpush1.bf16.msra.mxu0 0
    %2163 = vmatprep.subr.bf16.mxu0 0
    %2164 = vmatpush1.bf16.msra.mxu0 0
    %2165 = vmatprep.subr.bf16.mxu0 0
    %2166 = vmatpush1.bf16.msra.mxu0 0
    %2167 = vmatprep.subr.bf16.mxu0 0
    %2168 = vmatpush1.bf16.msra.mxu0 0
    %2169 = vmatprep.subr.bf16.mxu0 0
    %2170 = vmatpush1.bf16.msra.mxu0 0
    %2171 = vmatprep.subr.bf16.mxu0 0
    %2172 = vmatpush1.bf16.msra.mxu0 0
    %2173 = vmatprep.mubr.bf16.mxu0 0
    %2174 = vmatmul.mubr.bf16.gmra.mrb[0].mxu0 %v2098
    %v2175 = vpop.f32.mrb[0].mxu0
    %v2176 = vadd.f32 0.0, %v2175
    %v2177 = vpop.f32.mrb[0].mxu0
    %v2178 = vadd.f32 0.0, %v2177
    %v2179 = vpop.f32.mrb[0].mxu0
    %v2180 = vpop.f32.mrb[0].mxu0
    %2181 = vdwg.mxu0
    %2182 = vmatprep.subr.bf16.mxu0 %v2039
    %2183 = vmatpush1.bf16.msra.mxu0 %v2038
    %2184 = vmatprep.subr.bf16.mxu0 %v2047
    %2185 = vmatpush1.bf16.msra.mxu0 %v2046
    %2186 = vmatprep.subr.bf16.mxu0 %v2055
    %2187 = vmatpush1.bf16.msra.mxu0 %v2054
    %2188 = vmatprep.subr.bf16.mxu0 %v2063
    %2189 = vmatpush1.bf16.msra.mxu0 %v2062
    %2190 = vmatprep.subr.bf16.mxu0 %v2071
    %2191 = vmatpush1.bf16.msra.mxu0 %v2070
    %2192 = vmatprep.subr.bf16.mxu0 %v2079
    %2193 = vmatpush1.bf16.msra.mxu0 %v2078
    %2194 = vmatprep.subr.bf16.mxu0 %v2087
    %2195 = vmatpush1.bf16.msra.mxu0 %v2086
    %2196 = vmatprep.subr.bf16.mxu0 %v2095
    %2197 = vmatpush1.bf16.msra.mxu0 %v2094
    %2198 = vmatprep.subr.bf16.mxu0 0
    %2199 = vmatpush1.bf16.msra.mxu0 0
    %2200 = vmatprep.subr.bf16.mxu0 0
    %2201 = vmatpush1.bf16.msra.mxu0 0
    %2202 = vmatprep.subr.bf16.mxu0 0
    %2203 = vmatpush1.bf16.msra.mxu0 0
    %2204 = vmatprep.subr.bf16.mxu0 0
    %2205 = vmatpush1.bf16.msra.mxu0 0
    %2206 = vmatprep.subr.bf16.mxu0 0
    %2207 = vmatpush1.bf16.msra.mxu0 0
    %2208 = vmatprep.subr.bf16.mxu0 0
    %2209 = vmatpush1.bf16.msra.mxu0 0
    %2210 = vmatprep.subr.bf16.mxu0 0
    %2211 = vmatpush1.bf16.msra.mxu0 0
    %2212 = vmatprep.subr.bf16.mxu0 0
    %2213 = vmatpush1.bf16.msra.mxu0 0
    %2214 = vmatprep.mubr.bf16.mxu0 0
    %2215 = vmatmul.mubr.bf16.gmra.mrb[0].mxu0 %v2098
    %v2216 = vpop.f32.mrb[0].mxu0
    %v2217 = vadd.f32 0.0, %v2216
    %v2218 = vpop.f32.mrb[0].mxu0
    %v2219 = vadd.f32 0.0, %v2218
    %v2220 = vpop.f32.mrb[0].mxu0
    %v2221 = vpop.f32.mrb[0].mxu0
    %2222 = vdwg.mxu0
    %2223 = vmatprep.subr.bf16.mxu0 %v2041
    %2224 = vmatpush1.bf16.msra.mxu0 %v2040
    %2225 = vmatprep.subr.bf16.mxu0 %v2049
    %2226 = vmatpush1.bf16.msra.mxu0 %v2048
    %2227 = vmatprep.subr.bf16.mxu0 %v2057
    %2228 = vmatpush1.bf16.msra.mxu0 %v2056
    %2229 = vmatprep.subr.bf16.mxu0 %v2065
    %2230 = vmatpush1.bf16.msra.mxu0 %v2064
    %2231 = vmatprep.subr.bf16.mxu0 %v2073
    %2232 = vmatpush1.bf16.msra.mxu0 %v2072
    %2233 = vmatprep.subr.bf16.mxu0 %v2081
    %2234 = vmatpush1.bf16.msra.mxu0 %v2080
    %2235 = vmatprep.subr.bf16.mxu0 %v2089
    %2236 = vmatpush1.bf16.msra.mxu0 %v2088
    %2237 = vmatprep.subr.bf16.mxu0 %v2097
    %2238 = vmatpush1.bf16.msra.mxu0 %v2096
    %2239 = vmatprep.subr.bf16.mxu0 0
    %2240 = vmatpush1.bf16.msra.mxu0 0
    %2241 = vmatprep.subr.bf16.mxu0 0
    %2242 = vmatpush1.bf16.msra.mxu0 0
    %2243 = vmatprep.subr.bf16.mxu0 0
    %2244 = vmatpush1.bf16.msra.mxu0 0
    %2245 = vmatprep.subr.bf16.mxu0 0
    %2246 = vmatpush1.bf16.msra.mxu0 0
    %2247 = vmatprep.subr.bf16.mxu0 0
    %2248 = vmatpush1.bf16.msra.mxu0 0
    %2249 = vmatprep.subr.bf16.mxu0 0
    %2250 = vmatpush1.bf16.msra.mxu0 0
    %2251 = vmatprep.subr.bf16.mxu0 0
    %2252 = vmatpush1.bf16.msra.mxu0 0
    %2253 = vmatprep.subr.bf16.mxu0 0
    %2254 = vmatpush1.bf16.msra.mxu0 0
    %2255 = vmatprep.mubr.bf16.mxu0 0
    %2256 = vmatmul.mubr.bf16.gmra.mrb[0].mxu0 %v2098
    %v2257 = vpop.f32.mrb[0].mxu0
    %v2258 = vadd.f32 0.0, %v2257
    %v2259 = vpop.f32.mrb[0].mxu0
    %v2260 = vadd.f32 0.0, %v2259
    %v2261 = vpop.f32.mrb[0].mxu0
    %v2262 = vpop.f32.mrb[0].mxu0
    %2263 = vdwg.mxu0
    %v2264 = vadd.f32 %v2025, %v2135
    %v2265 = vadd.f32 %v2026, %v2137
    %v2266 = vadd.f32 %v2027, %v2176
    %v2267 = vadd.f32 %v2028, %v2178
    %v2268 = vadd.f32 %v2029, %v2217
    %v2269 = vadd.f32 %v2030, %v2219
    %v2270 = vadd.f32 %v2031, %v2258
    %v2271 = vadd.f32 %v2032, %v2260
    %s2272 = scalar_lea.vmem [#allocation2], 3584
    %v2273 = vld [vmem:[%s2272] sm:$0xff]
    %v2274 = vld [vmem:[%s2272 + $0x8] sm:$0xff]
    %v2275 = vld [vmem:[%s2272 + $0x10] sm:$0xff]
    %v2276 = vld [vmem:[%s2272 + $0x18] sm:$0xff]
    %v2277 = vld [vmem:[%s2272 + $0x20] sm:$0xff]
    %v2278 = vld [vmem:[%s2272 + $0x28] sm:$0xff]
    %v2279 = vld [vmem:[%s2272 + $0x30] sm:$0xff]
    %v2280 = vld [vmem:[%s2272 + $0x38] sm:$0xff]
    %v2281 = vld [vmem:[%s2272 + $0x40] sm:$0xff]
    %v2282 = vld [vmem:[%s2272 + $0x48] sm:$0xff]
    %v2283 = vld [vmem:[%s2272 + $0x50] sm:$0xff]
    %v2284 = vld [vmem:[%s2272 + $0x58] sm:$0xff]
    %v2285 = vld [vmem:[%s2272 + $0x60] sm:$0xff]
    %v2286 = vld [vmem:[%s2272 + $0x68] sm:$0xff]
    %v2287 = vld [vmem:[%s2272 + $0x70] sm:$0xff]
    %v2288 = vld [vmem:[%s2272 + $0x78] sm:$0xff]
    %v2289 = vld [vmem:[%s2272 + $0x80] sm:$0xff]
    %v2290 = vld [vmem:[%s2272 + $0x88] sm:$0xff]
    %v2291 = vld [vmem:[%s2272 + $0x90] sm:$0xff]
    %v2292 = vld [vmem:[%s2272 + $0x98] sm:$0xff]
    %v2293 = vld [vmem:[%s2272 + $0xa0] sm:$0xff]
    %v2294 = vld [vmem:[%s2272 + $0xa8] sm:$0xff]
    %v2295 = vld [vmem:[%s2272 + $0xb0] sm:$0xff]
    %v2296 = vld [vmem:[%s2272 + $0xb8] sm:$0xff]
    %v2297 = vld [vmem:[%s2272 + $0xc0] sm:$0xff]
    %v2298 = vld [vmem:[%s2272 + $0xc8] sm:$0xff]
    %v2299 = vld [vmem:[%s2272 + $0xd0] sm:$0xff]
    %v2300 = vld [vmem:[%s2272 + $0xd8] sm:$0xff]
    %v2301 = vld [vmem:[%s2272 + $0xe0] sm:$0xff]
    %v2302 = vld [vmem:[%s2272 + $0xe8] sm:$0xff]
    %v2303 = vld [vmem:[%s2272 + $0xf0] sm:$0xff]
    %v2304 = vld [vmem:[%s2272 + $0xf8] sm:$0xff]
    %v2305 = vld [vmem:[%s2272 + $0x100] sm:$0xff]
    %v2306 = vld [vmem:[%s2272 + $0x108] sm:$0xff]
    %v2307 = vld [vmem:[%s2272 + $0x110] sm:$0xff]
    %v2308 = vld [vmem:[%s2272 + $0x118] sm:$0xff]
    %v2309 = vld [vmem:[%s2272 + $0x120] sm:$0xff]
    %v2310 = vld [vmem:[%s2272 + $0x128] sm:$0xff]
    %v2311 = vld [vmem:[%s2272 + $0x130] sm:$0xff]
    %v2312 = vld [vmem:[%s2272 + $0x138] sm:$0xff]
    %v2313 = vld [vmem:[%s2272 + $0x140] sm:$0xff]
    %v2314 = vld [vmem:[%s2272 + $0x148] sm:$0xff]
    %v2315 = vld [vmem:[%s2272 + $0x150] sm:$0xff]
    %v2316 = vld [vmem:[%s2272 + $0x158] sm:$0xff]
    %v2317 = vld [vmem:[%s2272 + $0x160] sm:$0xff]
    %v2318 = vld [vmem:[%s2272 + $0x168] sm:$0xff]
    %v2319 = vld [vmem:[%s2272 + $0x170] sm:$0xff]
    %v2320 = vld [vmem:[%s2272 + $0x178] sm:$0xff]
    %v2321 = vld [vmem:[%s2272 + $0x180] sm:$0xff]
    %v2322 = vld [vmem:[%s2272 + $0x188] sm:$0xff]
    %v2323 = vld [vmem:[%s2272 + $0x190] sm:$0xff]
    %v2324 = vld [vmem:[%s2272 + $0x198] sm:$0xff]
    %v2325 = vld [vmem:[%s2272 + $0x1a0] sm:$0xff]
    %v2326 = vld [vmem:[%s2272 + $0x1a8] sm:$0xff]
    %v2327 = vld [vmem:[%s2272 + $0x1b0] sm:$0xff]
    %v2328 = vld [vmem:[%s2272 + $0x1b8] sm:$0xff]
    %v2329 = vld [vmem:[%s2272 + $0x1c0] sm:$0xff]
    %v2330 = vld [vmem:[%s2272 + $0x1c8] sm:$0xff]
    %v2331 = vld [vmem:[%s2272 + $0x1d0] sm:$0xff]
    %v2332 = vld [vmem:[%s2272 + $0x1d8] sm:$0xff]
    %v2333 = vld [vmem:[%s2272 + $0x1e0] sm:$0xff]
    %v2334 = vld [vmem:[%s2272 + $0x1e8] sm:$0xff]
    %v2335 = vld [vmem:[%s2272 + $0x1f0] sm:$0xff]
    %v2336 = vld [vmem:[%s2272 + $0x1f8] sm:$0xff]
    %v2337 = vrot.slane %v609, 7
    %2339 = vmatprep.subr.bf16.mxu0 %v2274
    %2340 = vmatpush1.bf16.msra.mxu0 %v2273
    %2341 = vmatprep.subr.bf16.mxu0 %v2282
    %2342 = vmatpush1.bf16.msra.mxu0 %v2281
    %2343 = vmatprep.subr.bf16.mxu0 %v2290
    %2344 = vmatpush1.bf16.msra.mxu0 %v2289
    %2345 = vmatprep.subr.bf16.mxu0 %v2298
    %2346 = vmatpush1.bf16.msra.mxu0 %v2297
    %2347 = vmatprep.subr.bf16.mxu0 %v2306
    %2348 = vmatpush1.bf16.msra.mxu0 %v2305
    %2349 = vmatprep.subr.bf16.mxu0 %v2314
    %2350 = vmatpush1.bf16.msra.mxu0 %v2313
    %2351 = vmatprep.subr.bf16.mxu0 %v2322
    %2352 = vmatpush1.bf16.msra.mxu0 %v2321
    %2353 = vmatprep.subr.bf16.mxu0 %v2330
    %2354 = vmatpush1.bf16.msra.mxu0 %v2329
    %2355 = vmatprep.subr.bf16.mxu0 0
    %2356 = vmatpush1.bf16.msra.mxu0 0
    %2357 = vmatprep.subr.bf16.mxu0 0
    %2358 = vmatpush1.bf16.msra.mxu0 0
    %2359 = vmatprep.subr.bf16.mxu0 0
    %2360 = vmatpush1.bf16.msra.mxu0 0
    %2361 = vmatprep.subr.bf16.mxu0 0
    %2362 = vmatpush1.bf16.msra.mxu0 0
    %2363 = vmatprep.subr.bf16.mxu0 0
    %2364 = vmatpush1.bf16.msra.mxu0 0
    %2365 = vmatprep.subr.bf16.mxu0 0
    %2366 = vmatpush1.bf16.msra.mxu0 0
    %2367 = vmatprep.subr.bf16.mxu0 0
    %2368 = vmatpush1.bf16.msra.mxu0 0
    %2369 = vmatprep.subr.bf16.mxu0 0
    %2370 = vmatpush1.bf16.msra.mxu0 0
    %2371 = vmatprep.mubr.bf16.mxu0 0
    %2372 = vmatmul.mubr.bf16.gmra.mrb[0].mxu0 %v2337
    %v2373 = vpop.f32.mrb[0].mxu0
    %v2374 = vadd.f32 0.0, %v2373
    %v2375 = vpop.f32.mrb[0].mxu0
    %v2376 = vadd.f32 0.0, %v2375
    %v2377 = vpop.f32.mrb[0].mxu0
    %v2378 = vpop.f32.mrb[0].mxu0
    %2379 = vdwg.mxu0
    %2380 = vmatprep.subr.bf16.mxu0 %v2276
    %2381 = vmatpush1.bf16.msra.mxu0 %v2275
    %2382 = vmatprep.subr.bf16.mxu0 %v2284
    %2383 = vmatpush1.bf16.msra.mxu0 %v2283
    %2384 = vmatprep.subr.bf16.mxu0 %v2292
    %2385 = vmatpush1.bf16.msra.mxu0 %v2291
    %2386 = vmatprep.subr.bf16.mxu0 %v2300
    %2387 = vmatpush1.bf16.msra.mxu0 %v2299
    %2388 = vmatprep.subr.bf16.mxu0 %v2308
    %2389 = vmatpush1.bf16.msra.mxu0 %v2307
    %2390 = vmatprep.subr.bf16.mxu0 %v2316
    %2391 = vmatpush1.bf16.msra.mxu0 %v2315
    %2392 = vmatprep.subr.bf16.mxu0 %v2324
    %2393 = vmatpush1.bf16.msra.mxu0 %v2323
    %2394 = vmatprep.subr.bf16.mxu0 %v2332
    %2395 = vmatpush1.bf16.msra.mxu0 %v2331
    %2396 = vmatprep.subr.bf16.mxu0 0
    %2397 = vmatpush1.bf16.msra.mxu0 0
    %2398 = vmatprep.subr.bf16.mxu0 0
    %2399 = vmatpush1.bf16.msra.mxu0 0
    %2400 = vmatprep.subr.bf16.mxu0 0
    %2401 = vmatpush1.bf16.msra.mxu0 0
    %2402 = vmatprep.subr.bf16.mxu0 0
    %2403 = vmatpush1.bf16.msra.mxu0 0
    %2404 = vmatprep.subr.bf16.mxu0 0
    %2405 = vmatpush1.bf16.msra.mxu0 0
    %2406 = vmatprep.subr.bf16.mxu0 0
    %2407 = vmatpush1.bf16.msra.mxu0 0
    %2408 = vmatprep.subr.bf16.mxu0 0
    %2409 = vmatpush1.bf16.msra.mxu0 0
    %2410 = vmatprep.subr.bf16.mxu0 0
    %2411 = vmatpush1.bf16.msra.mxu0 0
    %2412 = vmatprep.mubr.bf16.mxu0 0
    %2413 = vmatmul.mubr.bf16.gmra.mrb[0].mxu0 %v2337
    %v2414 = vpop.f32.mrb[0].mxu0
    %v2415 = vadd.f32 0.0, %v2414
    %v2416 = vpop.f32.mrb[0].mxu0
    %v2417 = vadd.f32 0.0, %v2416
    %v2418 = vpop.f32.mrb[0].mxu0
    %v2419 = vpop.f32.mrb[0].mxu0
    %2420 = vdwg.mxu0
    %2421 = vmatprep.subr.bf16.mxu0 %v2278
    %2422 = vmatpush1.bf16.msra.mxu0 %v2277
    %2423 = vmatprep.subr.bf16.mxu0 %v2286
    %2424 = vmatpush1.bf16.msra.mxu0 %v2285
    %2425 = vmatprep.subr.bf16.mxu0 %v2294
    %2426 = vmatpush1.bf16.msra.mxu0 %v2293
    %2427 = vmatprep.subr.bf16.mxu0 %v2302
    %2428 = vmatpush1.bf16.msra.mxu0 %v2301
    %2429 = vmatprep.subr.bf16.mxu0 %v2310
    %2430 = vmatpush1.bf16.msra.mxu0 %v2309
    %2431 = vmatprep.subr.bf16.mxu0 %v2318
    %2432 = vmatpush1.bf16.msra.mxu0 %v2317
    %2433 = vmatprep.subr.bf16.mxu0 %v2326
    %2434 = vmatpush1.bf16.msra.mxu0 %v2325
    %2435 = vmatprep.subr.bf16.mxu0 %v2334
    %2436 = vmatpush1.bf16.msra.mxu0 %v2333
    %2437 = vmatprep.subr.bf16.mxu0 0
    %2438 = vmatpush1.bf16.msra.mxu0 0
    %2439 = vmatprep.subr.bf16.mxu0 0
    %2440 = vmatpush1.bf16.msra.mxu0 0
    %2441 = vmatprep.subr.bf16.mxu0 0
    %2442 = vmatpush1.bf16.msra.mxu0 0
    %2443 = vmatprep.subr.bf16.mxu0 0
    %2444 = vmatpush1.bf16.msra.mxu0 0
    %2445 = vmatprep.subr.bf16.mxu0 0
    %2446 = vmatpush1.bf16.msra.mxu0 0
    %2447 = vmatprep.subr.bf16.mxu0 0
    %2448 = vmatpush1.bf16.msra.mxu0 0
    %2449 = vmatprep.subr.bf16.mxu0 0
    %2450 = vmatpush1.bf16.msra.mxu0 0
    %2451 = vmatprep.subr.bf16.mxu0 0
    %2452 = vmatpush1.bf16.msra.mxu0 0
    %2453 = vmatprep.mubr.bf16.mxu0 0
    %2454 = vmatmul.mubr.bf16.gmra.mrb[0].mxu0 %v2337
    %v2455 = vpop.f32.mrb[0].mxu0
    %v2456 = vadd.f32 0.0, %v2455
    %v2457 = vpop.f32.mrb[0].mxu0
    %v2458 = vadd.f32 0.0, %v2457
    %v2459 = vpop.f32.mrb[0].mxu0
    %v2460 = vpop.f32.mrb[0].mxu0
    %2461 = vdwg.mxu0
    %2462 = vmatprep.subr.bf16.mxu0 %v2280
    %2463 = vmatpush1.bf16.msra.mxu0 %v2279
    %2464 = vmatprep.subr.bf16.mxu0 %v2288
    %2465 = vmatpush1.bf16.msra.mxu0 %v2287
    %2466 = vmatprep.subr.bf16.mxu0 %v2296
    %2467 = vmatpush1.bf16.msra.mxu0 %v2295
    %2468 = vmatprep.subr.bf16.mxu0 %v2304
    %2469 = vmatpush1.bf16.msra.mxu0 %v2303
    %2470 = vmatprep.subr.bf16.mxu0 %v2312
    %2471 = vmatpush1.bf16.msra.mxu0 %v2311
    %2472 = vmatprep.subr.bf16.mxu0 %v2320
    %2473 = vmatpush1.bf16.msra.mxu0 %v2319
    %2474 = vmatprep.subr.bf16.mxu0 %v2328
    %2475 = vmatpush1.bf16.msra.mxu0 %v2327
    %2476 = vmatprep.subr.bf16.mxu0 %v2336
    %2477 = vmatpush1.bf16.msra.mxu0 %v2335
    %2478 = vmatprep.subr.bf16.mxu0 0
    %2479 = vmatpush1.bf16.msra.mxu0 0
    %2480 = vmatprep.subr.bf16.mxu0 0
    %2481 = vmatpush1.bf16.msra.mxu0 0
    %2482 = vmatprep.subr.bf16.mxu0 0
    %2483 = vmatpush1.bf16.msra.mxu0 0
    %2484 = vmatprep.subr.bf16.mxu0 0
    %2485 = vmatpush1.bf16.msra.mxu0 0
    %2486 = vmatprep.subr.bf16.mxu0 0
    %2487 = vmatpush1.bf16.msra.mxu0 0
    %2488 = vmatprep.subr.bf16.mxu0 0
    %2489 = vmatpush1.bf16.msra.mxu0 0
    %2490 = vmatprep.subr.bf16.mxu0 0
    %2491 = vmatpush1.bf16.msra.mxu0 0
    %2492 = vmatprep.subr.bf16.mxu0 0
    %2493 = vmatpush1.bf16.msra.mxu0 0
    %2494 = vmatprep.mubr.bf16.mxu0 0
    %2495 = vmatmul.mubr.bf16.gmra.mrb[0].mxu0 %v2337
    %v2496 = vpop.f32.mrb[0].mxu0
    %v2497 = vadd.f32 0.0, %v2496
    %v2498 = vpop.f32.mrb[0].mxu0
    %v2499 = vadd.f32 0.0, %v2498
    %v2500 = vpop.f32.mrb[0].mxu0
    %v2501 = vpop.f32.mrb[0].mxu0
    %2502 = vdwg.mxu0
    %v2503 = vadd.f32 %v2264, %v2374
    %v2504 = vadd.f32 %v2265, %v2376
    %v2505 = vadd.f32 %v2266, %v2415
    %v2506 = vadd.f32 %v2267, %v2417
    %v2507 = vadd.f32 %v2268, %v2456
    %v2508 = vadd.f32 %v2269, %v2458
    %v2509 = vadd.f32 %v2270, %v2497
    %v2510 = vadd.f32 %v2271, %v2499
    %s2511 = sshll.u32 %s613, 4
    %2512 = dma.done %s161, %s2511
    %v2513 = vld [vmem:[%s160] sm:$0xff]
    %v2514 = vld [vmem:[%s160 + $0x8] sm:$0xff]
    %v2515 = vld [vmem:[%s160 + $0x10] sm:$0xff]
    %v2516 = vld [vmem:[%s160 + $0x18] sm:$0xff]
    %v2517 = vld [vmem:[%s160 + $0x20] sm:$0xff]
    %v2518 = vld [vmem:[%s160 + $0x28] sm:$0xff]
    %v2519 = vld [vmem:[%s160 + $0x30] sm:$0xff]
    %v2520 = vld [vmem:[%s160 + $0x38] sm:$0xff]
    %v2521 = vld [vmem:[%s160 + $0x40] sm:$0xff]
    %v2522 = vld [vmem:[%s160 + $0x48] sm:$0xff]
    %v2523 = vld [vmem:[%s160 + $0x50] sm:$0xff]
    %v2524 = vld [vmem:[%s160 + $0x58] sm:$0xff]
    %v2525 = vld [vmem:[%s160 + $0x60] sm:$0xff]
    %v2526 = vld [vmem:[%s160 + $0x68] sm:$0xff]
    %v2527 = vld [vmem:[%s160 + $0x70] sm:$0xff]
    %v2528 = vld [vmem:[%s160 + $0x78] sm:$0xff]
    %v2529 = vld [vmem:[%s160 + $0x80] sm:$0xff]
    %v2530 = vld [vmem:[%s160 + $0x88] sm:$0xff]
    %v2531 = vld [vmem:[%s160 + $0x90] sm:$0xff]
    %v2532 = vld [vmem:[%s160 + $0x98] sm:$0xff]
    %v2533 = vld [vmem:[%s160 + $0xa0] sm:$0xff]
    %v2534 = vld [vmem:[%s160 + $0xa8] sm:$0xff]
    %v2535 = vld [vmem:[%s160 + $0xb0] sm:$0xff]
    %v2536 = vld [vmem:[%s160 + $0xb8] sm:$0xff]
    %v2537 = vld [vmem:[%s160 + $0xc0] sm:$0xff]
    %v2538 = vld [vmem:[%s160 + $0xc8] sm:$0xff]
    %v2539 = vld [vmem:[%s160 + $0xd0] sm:$0xff]
    %v2540 = vld [vmem:[%s160 + $0xd8] sm:$0xff]
    %v2541 = vld [vmem:[%s160 + $0xe0] sm:$0xff]
    %v2542 = vld [vmem:[%s160 + $0xe8] sm:$0xff]
    %v2543 = vld [vmem:[%s160 + $0xf0] sm:$0xff]
    %v2544 = vld [vmem:[%s160 + $0xf8] sm:$0xff]
    %v2545 = vld [vmem:[%s160 + $0x100] sm:$0xff]
    %v2546 = vld [vmem:[%s160 + $0x108] sm:$0xff]
    %v2547 = vld [vmem:[%s160 + $0x110] sm:$0xff]
    %v2548 = vld [vmem:[%s160 + $0x118] sm:$0xff]
    %v2549 = vld [vmem:[%s160 + $0x120] sm:$0xff]
    %v2550 = vld [vmem:[%s160 + $0x128] sm:$0xff]
    %v2551 = vld [vmem:[%s160 + $0x130] sm:$0xff]
    %v2552 = vld [vmem:[%s160 + $0x138] sm:$0xff]
    %v2553 = vld [vmem:[%s160 + $0x140] sm:$0xff]
    %v2554 = vld [vmem:[%s160 + $0x148] sm:$0xff]
    %v2555 = vld [vmem:[%s160 + $0x150] sm:$0xff]
    %v2556 = vld [vmem:[%s160 + $0x158] sm:$0xff]
    %v2557 = vld [vmem:[%s160 + $0x160] sm:$0xff]
    %v2558 = vld [vmem:[%s160 + $0x168] sm:$0xff]
    %v2559 = vld [vmem:[%s160 + $0x170] sm:$0xff]
    %v2560 = vld [vmem:[%s160 + $0x178] sm:$0xff]
    %v2561 = vld [vmem:[%s160 + $0x180] sm:$0xff]
    %v2562 = vld [vmem:[%s160 + $0x188] sm:$0xff]
    %v2563 = vld [vmem:[%s160 + $0x190] sm:$0xff]
    %v2564 = vld [vmem:[%s160 + $0x198] sm:$0xff]
    %v2565 = vld [vmem:[%s160 + $0x1a0] sm:$0xff]
    %v2566 = vld [vmem:[%s160 + $0x1a8] sm:$0xff]
    %v2567 = vld [vmem:[%s160 + $0x1b0] sm:$0xff]
    %v2568 = vld [vmem:[%s160 + $0x1b8] sm:$0xff]
    %v2569 = vld [vmem:[%s160 + $0x1c0] sm:$0xff]
    %v2570 = vld [vmem:[%s160 + $0x1c8] sm:$0xff]
    %v2571 = vld [vmem:[%s160 + $0x1d0] sm:$0xff]
    %v2572 = vld [vmem:[%s160 + $0x1d8] sm:$0xff]
    %v2573 = vld [vmem:[%s160 + $0x1e0] sm:$0xff]
    %v2574 = vld [vmem:[%s160 + $0x1e8] sm:$0xff]
    %v2575 = vld [vmem:[%s160 + $0x1f0] sm:$0xff]
    %v2576 = vld [vmem:[%s160 + $0x1f8] sm:$0xff]
    %2577 = vmatprep.subr.bf16.mxu0 %v2514
    %2578 = vmatpush1.bf16.msra.mxu0 %v2513
    %2579 = vmatprep.subr.bf16.mxu0 %v2522
    %2580 = vmatpush1.bf16.msra.mxu0 %v2521
    %2581 = vmatprep.subr.bf16.mxu0 %v2530
    %2582 = vmatpush1.bf16.msra.mxu0 %v2529
    %2583 = vmatprep.subr.bf16.mxu0 %v2538
    %2584 = vmatpush1.bf16.msra.mxu0 %v2537
    %2585 = vmatprep.subr.bf16.mxu0 %v2546
    %2586 = vmatpush1.bf16.msra.mxu0 %v2545
    %2587 = vmatprep.subr.bf16.mxu0 %v2554
    %2588 = vmatpush1.bf16.msra.mxu0 %v2553
    %2589 = vmatprep.subr.bf16.mxu0 %v2562
    %2590 = vmatpush1.bf16.msra.mxu0 %v2561
    %2591 = vmatprep.subr.bf16.mxu0 %v2570
    %2592 = vmatpush1.bf16.msra.mxu0 %v2569
    %2593 = vmatprep.subr.bf16.mxu0 0
    %2594 = vmatpush1.bf16.msra.mxu0 0
    %2595 = vmatprep.subr.bf16.mxu0 0
    %2596 = vmatpush1.bf16.msra.mxu0 0
    %2597 = vmatprep.subr.bf16.mxu0 0
    %2598 = vmatpush1.bf16.msra.mxu0 0
    %2599 = vmatprep.subr.bf16.mxu0 0
    %2600 = vmatpush1.bf16.msra.mxu0 0
    %2601 = vmatprep.subr.bf16.mxu0 0
    %2602 = vmatpush1.bf16.msra.mxu0 0
    %2603 = vmatprep.subr.bf16.mxu0 0
    %2604 = vmatpush1.bf16.msra.mxu0 0
    %2605 = vmatprep.subr.bf16.mxu0 0
    %2606 = vmatpush1.bf16.msra.mxu0 0
    %2607 = vmatprep.subr.bf16.mxu0 0
    %2608 = vmatpush1.bf16.msra.mxu0 0
    %2609 = vmatprep.mubr.bf16.mxu0 0
    %2610 = vmatmul.mubr.bf16.gmra.mrb[0].mxu0 %v610
    %v2611 = vpop.f32.mrb[0].mxu0
    %v2612 = vadd.f32 0.0, %v2611
    %v2613 = vpop.f32.mrb[0].mxu0
    %v2614 = vadd.f32 0.0, %v2613
    %v2615 = vpop.f32.mrb[0].mxu0
    %v2616 = vpop.f32.mrb[0].mxu0
    %2617 = vdwg.mxu0
    %2618 = vmatprep.subr.bf16.mxu0 %v2516
    %2619 = vmatpush1.bf16.msra.mxu0 %v2515
    %2620 = vmatprep.subr.bf16.mxu0 %v2524
    %2621 = vmatpush1.bf16.msra.mxu0 %v2523
    %2622 = vmatprep.subr.bf16.mxu0 %v2532
    %2623 = vmatpush1.bf16.msra.mxu0 %v2531
    %2624 = vmatprep.subr.bf16.mxu0 %v2540
    %2625 = vmatpush1.bf16.msra.mxu0 %v2539
    %2626 = vmatprep.subr.bf16.mxu0 %v2548
    %2627 = vmatpush1.bf16.msra.mxu0 %v2547
    %2628 = vmatprep.subr.bf16.mxu0 %v2556
    %2629 = vmatpush1.bf16.msra.mxu0 %v2555
    %2630 = vmatprep.subr.bf16.mxu0 %v2564
    %2631 = vmatpush1.bf16.msra.mxu0 %v2563
    %2632 = vmatprep.subr.bf16.mxu0 %v2572
    %2633 = vmatpush1.bf16.msra.mxu0 %v2571
    %2634 = vmatprep.subr.bf16.mxu0 0
    %2635 = vmatpush1.bf16.msra.mxu0 0
    %2636 = vmatprep.subr.bf16.mxu0 0
    %2637 = vmatpush1.bf16.msra.mxu0 0
    %2638 = vmatprep.subr.bf16.mxu0 0
    %2639 = vmatpush1.bf16.msra.mxu0 0
    %2640 = vmatprep.subr.bf16.mxu0 0
    %2641 = vmatpush1.bf16.msra.mxu0 0
    %2642 = vmatprep.subr.bf16.mxu0 0
    %2643 = vmatpush1.bf16.msra.mxu0 0
    %2644 = vmatprep.subr.bf16.mxu0 0
    %2645 = vmatpush1.bf16.msra.mxu0 0
    %2646 = vmatprep.subr.bf16.mxu0 0
    %2647 = vmatpush1.bf16.msra.mxu0 0
    %2648 = vmatprep.subr.bf16.mxu0 0
    %2649 = vmatpush1.bf16.msra.mxu0 0
    %2650 = vmatprep.mubr.bf16.mxu0 0
    %2651 = vmatmul.mubr.bf16.gmra.mrb[0].mxu0 %v610
    %v2652 = vpop.f32.mrb[0].mxu0
    %v2653 = vadd.f32 0.0, %v2652
    %v2654 = vpop.f32.mrb[0].mxu0
    %v2655 = vadd.f32 0.0, %v2654
    %v2656 = vpop.f32.mrb[0].mxu0
    %v2657 = vpop.f32.mrb[0].mxu0
    %2658 = vdwg.mxu0
    %2659 = vmatprep.subr.bf16.mxu0 %v2518
    %2660 = vmatpush1.bf16.msra.mxu0 %v2517
    %2661 = vmatprep.subr.bf16.mxu0 %v2526
    %2662 = vmatpush1.bf16.msra.mxu0 %v2525
    %2663 = vmatprep.subr.bf16.mxu0 %v2534
    %2664 = vmatpush1.bf16.msra.mxu0 %v2533
    %2665 = vmatprep.subr.bf16.mxu0 %v2542
    %2666 = vmatpush1.bf16.msra.mxu0 %v2541
    %2667 = vmatprep.subr.bf16.mxu0 %v2550
    %2668 = vmatpush1.bf16.msra.mxu0 %v2549
    %2669 = vmatprep.subr.bf16.mxu0 %v2558
    %2670 = vmatpush1.bf16.msra.mxu0 %v2557
    %2671 = vmatprep.subr.bf16.mxu0 %v2566
    %2672 = vmatpush1.bf16.msra.mxu0 %v2565
    %2673 = vmatprep.subr.bf16.mxu0 %v2574
    %2674 = vmatpush1.bf16.msra.mxu0 %v2573
    %2675 = vmatprep.subr.bf16.mxu0 0
    %2676 = vmatpush1.bf16.msra.mxu0 0
    %2677 = vmatprep.subr.bf16.mxu0 0
    %2678 = vmatpush1.bf16.msra.mxu0 0
    %2679 = vmatprep.subr.bf16.mxu0 0
    %2680 = vmatpush1.bf16.msra.mxu0 0
    %2681 = vmatprep.subr.bf16.mxu0 0
    %2682 = vmatpush1.bf16.msra.mxu0 0
    %2683 = vmatprep.subr.bf16.mxu0 0
    %2684 = vmatpush1.bf16.msra.mxu0 0
    %2685 = vmatprep.subr.bf16.mxu0 0
    %2686 = vmatpush1.bf16.msra.mxu0 0
    %2687 = vmatprep.subr.bf16.mxu0 0
    %2688 = vmatpush1.bf16.msra.mxu0 0
    %2689 = vmatprep.subr.bf16.mxu0 0
    %2690 = vmatpush1.bf16.msra.mxu0 0
    %2691 = vmatprep.mubr.bf16.mxu0 0
    %2692 = vmatmul.mubr.bf16.gmra.mrb[0].mxu0 %v610
    %v2693 = vpop.f32.mrb[0].mxu0
    %v2694 = vadd.f32 0.0, %v2693
    %v2695 = vpop.f32.mrb[0].mxu0
    %v2696 = vadd.f32 0.0, %v2695
    %v2697 = vpop.f32.mrb[0].mxu0
    %v2698 = vpop.f32.mrb[0].mxu0
    %2699 = vdwg.mxu0
    %2700 = vmatprep.subr.bf16.mxu0 %v2520
    %2701 = vmatpush1.bf16.msra.mxu0 %v2519
    %2702 = vmatprep.subr.bf16.mxu0 %v2528
    %2703 = vmatpush1.bf16.msra.mxu0 %v2527
    %2704 = vmatprep.subr.bf16.mxu0 %v2536
    %2705 = vmatpush1.bf16.msra.mxu0 %v2535
    %2706 = vmatprep.subr.bf16.mxu0 %v2544
    %2707 = vmatpush1.bf16.msra.mxu0 %v2543
    %2708 = vmatprep.subr.bf16.mxu0 %v2552
    %2709 = vmatpush1.bf16.msra.mxu0 %v2551
    %2710 = vmatprep.subr.bf16.mxu0 %v2560
    %2711 = vmatpush1.bf16.msra.mxu0 %v2559
    %2712 = vmatprep.subr.bf16.mxu0 %v2568
    %2713 = vmatpush1.bf16.msra.mxu0 %v2567
    %2714 = vmatprep.subr.bf16.mxu0 %v2576
    %2715 = vmatpush1.bf16.msra.mxu0 %v2575
    %2716 = vmatprep.subr.bf16.mxu0 0
    %2717 = vmatpush1.bf16.msra.mxu0 0
    %2718 = vmatprep.subr.bf16.mxu0 0
    %2719 = vmatpush1.bf16.msra.mxu0 0
    %2720 = vmatprep.subr.bf16.mxu0 0
    %2721 = vmatpush1.bf16.msra.mxu0 0
    %2722 = vmatprep.subr.bf16.mxu0 0
    %2723 = vmatpush1.bf16.msra.mxu0 0
    %2724 = vmatprep.subr.bf16.mxu0 0
    %2725 = vmatpush1.bf16.msra.mxu0 0
    %2726 = vmatprep.subr.bf16.mxu0 0
    %2727 = vmatpush1.bf16.msra.mxu0 0
    %2728 = vmatprep.subr.bf16.mxu0 0
    %2729 = vmatpush1.bf16.msra.mxu0 0
    %2730 = vmatprep.subr.bf16.mxu0 0
    %2731 = vmatpush1.bf16.msra.mxu0 0
    %2732 = vmatprep.mubr.bf16.mxu0 0
    %2733 = vmatmul.mubr.bf16.gmra.mrb[0].mxu0 %v610
    %v2734 = vpop.f32.mrb[0].mxu0
    %v2735 = vadd.f32 0.0, %v2734
    %v2736 = vpop.f32.mrb[0].mxu0
    %v2737 = vadd.f32 0.0, %v2736
    %v2738 = vpop.f32.mrb[0].mxu0
    %v2739 = vpop.f32.mrb[0].mxu0
    %2740 = vdwg.mxu0
    %v2741 = vadd.f32 %v2503, %v2612
    %v2742 = vadd.f32 %v2504, %v2614
    %v2743 = vadd.f32 %v2505, %v2653
    %v2744 = vadd.f32 %v2506, %v2655
    %v2745 = vadd.f32 %v2507, %v2694
    %v2746 = vadd.f32 %v2508, %v2696
    %v2747 = vadd.f32 %v2509, %v2735
    %v2748 = vadd.f32 %v2510, %v2737
    %s2749 = scalar_lea.vmem [#allocation2], 4608
    %v2750 = vld [vmem:[%s2749] sm:$0xff]
    %v2751 = vld [vmem:[%s2749 + $0x8] sm:$0xff]
    %v2752 = vld [vmem:[%s2749 + $0x10] sm:$0xff]
    %v2753 = vld [vmem:[%s2749 + $0x18] sm:$0xff]
    %v2754 = vld [vmem:[%s2749 + $0x20] sm:$0xff]
    %v2755 = vld [vmem:[%s2749 + $0x28] sm:$0xff]
    %v2756 = vld [vmem:[%s2749 + $0x30] sm:$0xff]
    %v2757 = vld [vmem:[%s2749 + $0x38] sm:$0xff]
    %v2758 = vld [vmem:[%s2749 + $0x40] sm:$0xff]
    %v2759 = vld [vmem:[%s2749 + $0x48] sm:$0xff]
    %v2760 = vld [vmem:[%s2749 + $0x50] sm:$0xff]
    %v2761 = vld [vmem:[%s2749 + $0x58] sm:$0xff]
    %v2762 = vld [vmem:[%s2749 + $0x60] sm:$0xff]
    %v2763 = vld [vmem:[%s2749 + $0x68] sm:$0xff]
    %v2764 = vld [vmem:[%s2749 + $0x70] sm:$0xff]
    %v2765 = vld [vmem:[%s2749 + $0x78] sm:$0xff]
    %v2766 = vld [vmem:[%s2749 + $0x80] sm:$0xff]
    %v2767 = vld [vmem:[%s2749 + $0x88] sm:$0xff]
    %v2768 = vld [vmem:[%s2749 + $0x90] sm:$0xff]
    %v2769 = vld [vmem:[%s2749 + $0x98] sm:$0xff]
    %v2770 = vld [vmem:[%s2749 + $0xa0] sm:$0xff]
    %v2771 = vld [vmem:[%s2749 + $0xa8] sm:$0xff]
    %v2772 = vld [vmem:[%s2749 + $0xb0] sm:$0xff]
    %v2773 = vld [vmem:[%s2749 + $0xb8] sm:$0xff]
    %v2774 = vld [vmem:[%s2749 + $0xc0] sm:$0xff]
    %v2775 = vld [vmem:[%s2749 + $0xc8] sm:$0xff]
    %v2776 = vld [vmem:[%s2749 + $0xd0] sm:$0xff]
    %v2777 = vld [vmem:[%s2749 + $0xd8] sm:$0xff]
    %v2778 = vld [vmem:[%s2749 + $0xe0] sm:$0xff]
    %v2779 = vld [vmem:[%s2749 + $0xe8] sm:$0xff]
    %v2780 = vld [vmem:[%s2749 + $0xf0] sm:$0xff]
    %v2781 = vld [vmem:[%s2749 + $0xf8] sm:$0xff]
    %v2782 = vld [vmem:[%s2749 + $0x100] sm:$0xff]
    %v2783 = vld [vmem:[%s2749 + $0x108] sm:$0xff]
    %v2784 = vld [vmem:[%s2749 + $0x110] sm:$0xff]
    %v2785 = vld [vmem:[%s2749 + $0x118] sm:$0xff]
    %v2786 = vld [vmem:[%s2749 + $0x120] sm:$0xff]
    %v2787 = vld [vmem:[%s2749 + $0x128] sm:$0xff]
    %v2788 = vld [vmem:[%s2749 + $0x130] sm:$0xff]
    %v2789 = vld [vmem:[%s2749 + $0x138] sm:$0xff]
    %v2790 = vld [vmem:[%s2749 + $0x140] sm:$0xff]
    %v2791 = vld [vmem:[%s2749 + $0x148] sm:$0xff]
    %v2792 = vld [vmem:[%s2749 + $0x150] sm:$0xff]
    %v2793 = vld [vmem:[%s2749 + $0x158] sm:$0xff]
    %v2794 = vld [vmem:[%s2749 + $0x160] sm:$0xff]
    %v2795 = vld [vmem:[%s2749 + $0x168] sm:$0xff]
    %v2796 = vld [vmem:[%s2749 + $0x170] sm:$0xff]
    %v2797 = vld [vmem:[%s2749 + $0x178] sm:$0xff]
    %v2798 = vld [vmem:[%s2749 + $0x180] sm:$0xff]
    %v2799 = vld [vmem:[%s2749 + $0x188] sm:$0xff]
    %v2800 = vld [vmem:[%s2749 + $0x190] sm:$0xff]
    %v2801 = vld [vmem:[%s2749 + $0x198] sm:$0xff]
    %v2802 = vld [vmem:[%s2749 + $0x1a0] sm:$0xff]
    %v2803 = vld [vmem:[%s2749 + $0x1a8] sm:$0xff]
    %v2804 = vld [vmem:[%s2749 + $0x1b0] sm:$0xff]
    %v2805 = vld [vmem:[%s2749 + $0x1b8] sm:$0xff]
    %v2806 = vld [vmem:[%s2749 + $0x1c0] sm:$0xff]
    %v2807 = vld [vmem:[%s2749 + $0x1c8] sm:$0xff]
    %v2808 = vld [vmem:[%s2749 + $0x1d0] sm:$0xff]
    %v2809 = vld [vmem:[%s2749 + $0x1d8] sm:$0xff]
    %v2810 = vld [vmem:[%s2749 + $0x1e0] sm:$0xff]
    %v2811 = vld [vmem:[%s2749 + $0x1e8] sm:$0xff]
    %v2812 = vld [vmem:[%s2749 + $0x1f0] sm:$0xff]
    %v2813 = vld [vmem:[%s2749 + $0x1f8] sm:$0xff]
    %v2815 = vrot.slane %v610, 1
    %2817 = vmatprep.subr.bf16.mxu0 %v2751
    %2818 = vmatpush1.bf16.msra.mxu0 %v2750
    %2819 = vmatprep.subr.bf16.mxu0 %v2759
    %2820 = vmatpush1.bf16.msra.mxu0 %v2758
    %2821 = vmatprep.subr.bf16.mxu0 %v2767
    %2822 = vmatpush1.bf16.msra.mxu0 %v2766
    %2823 = vmatprep.subr.bf16.mxu0 %v2775
    %2824 = vmatpush1.bf16.msra.mxu0 %v2774
    %2825 = vmatprep.subr.bf16.mxu0 %v2783
    %2826 = vmatpush1.bf16.msra.mxu0 %v2782
    %2827 = vmatprep.subr.bf16.mxu0 %v2791
    %2828 = vmatpush1.bf16.msra.mxu0 %v2790
    %2829 = vmatprep.subr.bf16.mxu0 %v2799
    %2830 = vmatpush1.bf16.msra.mxu0 %v2798
    %2831 = vmatprep.subr.bf16.mxu0 %v2807
    %2832 = vmatpush1.bf16.msra.mxu0 %v2806
    %2833 = vmatprep.subr.bf16.mxu0 0
    %2834 = vmatpush1.bf16.msra.mxu0 0
    %2835 = vmatprep.subr.bf16.mxu0 0
    %2836 = vmatpush1.bf16.msra.mxu0 0
    %2837 = vmatprep.subr.bf16.mxu0 0
    %2838 = vmatpush1.bf16.msra.mxu0 0
    %2839 = vmatprep.subr.bf16.mxu0 0
    %2840 = vmatpush1.bf16.msra.mxu0 0
    %2841 = vmatprep.subr.bf16.mxu0 0
    %2842 = vmatpush1.bf16.msra.mxu0 0
    %2843 = vmatprep.subr.bf16.mxu0 0
    %2844 = vmatpush1.bf16.msra.mxu0 0
    %2845 = vmatprep.subr.bf16.mxu0 0
    %2846 = vmatpush1.bf16.msra.mxu0 0
    %2847 = vmatprep.subr.bf16.mxu0 0
    %2848 = vmatpush1.bf16.msra.mxu0 0
    %2849 = vmatprep.mubr.bf16.mxu0 0
    %2850 = vmatmul.mubr.bf16.gmra.mrb[0].mxu0 %v2815
    %v2851 = vpop.f32.mrb[0].mxu0
    %v2852 = vadd.f32 0.0, %v2851
    %v2853 = vpop.f32.mrb[0].mxu0
    %v2854 = vadd.f32 0.0, %v2853
    %v2855 = vpop.f32.mrb[0].mxu0
    %v2856 = vpop.f32.mrb[0].mxu0
    %2857 = vdwg.mxu0
    %2858 = vmatprep.subr.bf16.mxu0 %v2753
    %2859 = vmatpush1.bf16.msra.mxu0 %v2752
    %2860 = vmatprep.subr.bf16.mxu0 %v2761
    %2861 = vmatpush1.bf16.msra.mxu0 %v2760
    %2862 = vmatprep.subr.bf16.mxu0 %v2769
    %2863 = vmatpush1.bf16.msra.mxu0 %v2768
    %2864 = vmatprep.subr.bf16.mxu0 %v2777
    %2865 = vmatpush1.bf16.msra.mxu0 %v2776
    %2866 = vmatprep.subr.bf16.mxu0 %v2785
    %2867 = vmatpush1.bf16.msra.mxu0 %v2784
    %2868 = vmatprep.subr.bf16.mxu0 %v2793
    %2869 = vmatpush1.bf16.msra.mxu0 %v2792
    %2870 = vmatprep.subr.bf16.mxu0 %v2801
    %2871 = vmatpush1.bf16.msra.mxu0 %v2800
    %2872 = vmatprep.subr.bf16.mxu0 %v2809
    %2873 = vmatpush1.bf16.msra.mxu0 %v2808
    %2874 = vmatprep.subr.bf16.mxu0 0
    %2875 = vmatpush1.bf16.msra.mxu0 0
    %2876 = vmatprep.subr.bf16.mxu0 0
    %2877 = vmatpush1.bf16.msra.mxu0 0
    %2878 = vmatprep.subr.bf16.mxu0 0
    %2879 = vmatpush1.bf16.msra.mxu0 0
    %2880 = vmatprep.subr.bf16.mxu0 0
    %2881 = vmatpush1.bf16.msra.mxu0 0
    %2882 = vmatprep.subr.bf16.mxu0 0
    %2883 = vmatpush1.bf16.msra.mxu0 0
    %2884 = vmatprep.subr.bf16.mxu0 0
    %2885 = vmatpush1.bf16.msra.mxu0 0
    %2886 = vmatprep.subr.bf16.mxu0 0
    %2887 = vmatpush1.bf16.msra.mxu0 0
    %2888 = vmatprep.subr.bf16.mxu0 0
    %2889 = vmatpush1.bf16.msra.mxu0 0
    %2890 = vmatprep.mubr.bf16.mxu0 0
    %2891 = vmatmul.mubr.bf16.gmra.mrb[0].mxu0 %v2815
    %v2892 = vpop.f32.mrb[0].mxu0
    %v2893 = vadd.f32 0.0, %v2892
    %v2894 = vpop.f32.mrb[0].mxu0
    %v2895 = vadd.f32 0.0, %v2894
    %v2896 = vpop.f32.mrb[0].mxu0
    %v2897 = vpop.f32.mrb[0].mxu0
    %2898 = vdwg.mxu0
    %2899 = vmatprep.subr.bf16.mxu0 %v2755
    %2900 = vmatpush1.bf16.msra.mxu0 %v2754
    %2901 = vmatprep.subr.bf16.mxu0 %v2763
    %2902 = vmatpush1.bf16.msra.mxu0 %v2762
    %2903 = vmatprep.subr.bf16.mxu0 %v2771
    %2904 = vmatpush1.bf16.msra.mxu0 %v2770
    %2905 = vmatprep.subr.bf16.mxu0 %v2779
    %2906 = vmatpush1.bf16.msra.mxu0 %v2778
    %2907 = vmatprep.subr.bf16.mxu0 %v2787
    %2908 = vmatpush1.bf16.msra.mxu0 %v2786
    %2909 = vmatprep.subr.bf16.mxu0 %v2795
    %2910 = vmatpush1.bf16.msra.mxu0 %v2794
    %2911 = vmatprep.subr.bf16.mxu0 %v2803
    %2912 = vmatpush1.bf16.msra.mxu0 %v2802
    %2913 = vmatprep.subr.bf16.mxu0 %v2811
    %2914 = vmatpush1.bf16.msra.mxu0 %v2810
    %2915 = vmatprep.subr.bf16.mxu0 0
    %2916 = vmatpush1.bf16.msra.mxu0 0
    %2917 = vmatprep.subr.bf16.mxu0 0
    %2918 = vmatpush1.bf16.msra.mxu0 0
    %2919 = vmatprep.subr.bf16.mxu0 0
    %2920 = vmatpush1.bf16.msra.mxu0 0
    %2921 = vmatprep.subr.bf16.mxu0 0
    %2922 = vmatpush1.bf16.msra.mxu0 0
    %2923 = vmatprep.subr.bf16.mxu0 0
    %2924 = vmatpush1.bf16.msra.mxu0 0
    %2925 = vmatprep.subr.bf16.mxu0 0
    %2926 = vmatpush1.bf16.msra.mxu0 0
    %2927 = vmatprep.subr.bf16.mxu0 0
    %2928 = vmatpush1.bf16.msra.mxu0 0
    %2929 = vmatprep.subr.bf16.mxu0 0
    %2930 = vmatpush1.bf16.msra.mxu0 0
    %2931 = vmatprep.mubr.bf16.mxu0 0
    %2932 = vmatmul.mubr.bf16.gmra.mrb[0].mxu0 %v2815
    %v2933 = vpop.f32.mrb[0].mxu0
    %v2934 = vadd.f32 0.0, %v2933
    %v2935 = vpop.f32.mrb[0].mxu0
    %v2936 = vadd.f32 0.0, %v2935
    %v2937 = vpop.f32.mrb[0].mxu0
    %v2938 = vpop.f32.mrb[0].mxu0
    %2939 = vdwg.mxu0
    %2940 = vmatprep.subr.bf16.mxu0 %v2757
    %2941 = vmatpush1.bf16.msra.mxu0 %v2756
    %2942 = vmatprep.subr.bf16.mxu0 %v2765
    %2943 = vmatpush1.bf16.msra.mxu0 %v2764
    %2944 = vmatprep.subr.bf16.mxu0 %v2773
    %2945 = vmatpush1.bf16.msra.mxu0 %v2772
    %2946 = vmatprep.subr.bf16.mxu0 %v2781
    %2947 = vmatpush1.bf16.msra.mxu0 %v2780
    %2948 = vmatprep.subr.bf16.mxu0 %v2789
    %2949 = vmatpush1.bf16.msra.mxu0 %v2788
    %2950 = vmatprep.subr.bf16.mxu0 %v2797
    %2951 = vmatpush1.bf16.msra.mxu0 %v2796
    %2952 = vmatprep.subr.bf16.mxu0 %v2805
    %2953 = vmatpush1.bf16.msra.mxu0 %v2804
    %2954 = vmatprep.subr.bf16.mxu0 %v2813
    %2955 = vmatpush1.bf16.msra.mxu0 %v2812
    %2956 = vmatprep.subr.bf16.mxu0 0
    %2957 = vmatpush1.bf16.msra.mxu0 0
    %2958 = vmatprep.subr.bf16.mxu0 0
    %2959 = vmatpush1.bf16.msra.mxu0 0
    %2960 = vmatprep.subr.bf16.mxu0 0
    %2961 = vmatpush1.bf16.msra.mxu0 0
    %2962 = vmatprep.subr.bf16.mxu0 0
    %2963 = vmatpush1.bf16.msra.mxu0 0
    %2964 = vmatprep.subr.bf16.mxu0 0
    %2965 = vmatpush1.bf16.msra.mxu0 0
    %2966 = vmatprep.subr.bf16.mxu0 0
    %2967 = vmatpush1.bf16.msra.mxu0 0
    %2968 = vmatprep.subr.bf16.mxu0 0
    %2969 = vmatpush1.bf16.msra.mxu0 0
    %2970 = vmatprep.subr.bf16.mxu0 0
    %2971 = vmatpush1.bf16.msra.mxu0 0
    %2972 = vmatprep.mubr.bf16.mxu0 0
    %2973 = vmatmul.mubr.bf16.gmra.mrb[0].mxu0 %v2815
    %v2974 = vpop.f32.mrb[0].mxu0
    %v2975 = vadd.f32 0.0, %v2974
    %v2976 = vpop.f32.mrb[0].mxu0
    %v2977 = vadd.f32 0.0, %v2976
    %v2978 = vpop.f32.mrb[0].mxu0
    %v2979 = vpop.f32.mrb[0].mxu0
    %2980 = vdwg.mxu0
    %v2981 = vadd.f32 %v2741, %v2852
    %v2982 = vadd.f32 %v2742, %v2854
    %v2983 = vadd.f32 %v2743, %v2893
    %v2984 = vadd.f32 %v2744, %v2895
    %v2985 = vadd.f32 %v2745, %v2934
    %v2986 = vadd.f32 %v2746, %v2936
    %v2987 = vadd.f32 %v2747, %v2975
    %v2988 = vadd.f32 %v2748, %v2977
    %s2989 = scalar_lea.vmem [#allocation2], 5120
    %v2990 = vld [vmem:[%s2989] sm:$0xff]
    %v2991 = vld [vmem:[%s2989 + $0x8] sm:$0xff]
    %v2992 = vld [vmem:[%s2989 + $0x10] sm:$0xff]
    %v2993 = vld [vmem:[%s2989 + $0x18] sm:$0xff]
    %v2994 = vld [vmem:[%s2989 + $0x20] sm:$0xff]
    %v2995 = vld [vmem:[%s2989 + $0x28] sm:$0xff]
    %v2996 = vld [vmem:[%s2989 + $0x30] sm:$0xff]
    %v2997 = vld [vmem:[%s2989 + $0x38] sm:$0xff]
    %v2998 = vld [vmem:[%s2989 + $0x40] sm:$0xff]
    %v2999 = vld [vmem:[%s2989 + $0x48] sm:$0xff]
    %v3000 = vld [vmem:[%s2989 + $0x50] sm:$0xff]
    %v3001 = vld [vmem:[%s2989 + $0x58] sm:$0xff]
    %v3002 = vld [vmem:[%s2989 + $0x60] sm:$0xff]
    %v3003 = vld [vmem:[%s2989 + $0x68] sm:$0xff]
    %v3004 = vld [vmem:[%s2989 + $0x70] sm:$0xff]
    %v3005 = vld [vmem:[%s2989 + $0x78] sm:$0xff]
    %v3006 = vld [vmem:[%s2989 + $0x80] sm:$0xff]
    %v3007 = vld [vmem:[%s2989 + $0x88] sm:$0xff]
    %v3008 = vld [vmem:[%s2989 + $0x90] sm:$0xff]
    %v3009 = vld [vmem:[%s2989 + $0x98] sm:$0xff]
    %v3010 = vld [vmem:[%s2989 + $0xa0] sm:$0xff]
    %v3011 = vld [vmem:[%s2989 + $0xa8] sm:$0xff]
    %v3012 = vld [vmem:[%s2989 + $0xb0] sm:$0xff]
    %v3013 = vld [vmem:[%s2989 + $0xb8] sm:$0xff]
    %v3014 = vld [vmem:[%s2989 + $0xc0] sm:$0xff]
    %v3015 = vld [vmem:[%s2989 + $0xc8] sm:$0xff]
    %v3016 = vld [vmem:[%s2989 + $0xd0] sm:$0xff]
    %v3017 = vld [vmem:[%s2989 + $0xd8] sm:$0xff]
    %v3018 = vld [vmem:[%s2989 + $0xe0] sm:$0xff]
    %v3019 = vld [vmem:[%s2989 + $0xe8] sm:$0xff]
    %v3020 = vld [vmem:[%s2989 + $0xf0] sm:$0xff]
    %v3021 = vld [vmem:[%s2989 + $0xf8] sm:$0xff]
    %v3022 = vld [vmem:[%s2989 + $0x100] sm:$0xff]
    %v3023 = vld [vmem:[%s2989 + $0x108] sm:$0xff]
    %v3024 = vld [vmem:[%s2989 + $0x110] sm:$0xff]
    %v3025 = vld [vmem:[%s2989 + $0x118] sm:$0xff]
    %v3026 = vld [vmem:[%s2989 + $0x120] sm:$0xff]
    %v3027 = vld [vmem:[%s2989 + $0x128] sm:$0xff]
    %v3028 = vld [vmem:[%s2989 + $0x130] sm:$0xff]
    %v3029 = vld [vmem:[%s2989 + $0x138] sm:$0xff]
    %v3030 = vld [vmem:[%s2989 + $0x140] sm:$0xff]
    %v3031 = vld [vmem:[%s2989 + $0x148] sm:$0xff]
    %v3032 = vld [vmem:[%s2989 + $0x150] sm:$0xff]
    %v3033 = vld [vmem:[%s2989 + $0x158] sm:$0xff]
    %v3034 = vld [vmem:[%s2989 + $0x160] sm:$0xff]
    %v3035 = vld [vmem:[%s2989 + $0x168] sm:$0xff]
    %v3036 = vld [vmem:[%s2989 + $0x170] sm:$0xff]
    %v3037 = vld [vmem:[%s2989 + $0x178] sm:$0xff]
    %v3038 = vld [vmem:[%s2989 + $0x180] sm:$0xff]
    %v3039 = vld [vmem:[%s2989 + $0x188] sm:$0xff]
    %v3040 = vld [vmem:[%s2989 + $0x190] sm:$0xff]
    %v3041 = vld [vmem:[%s2989 + $0x198] sm:$0xff]
    %v3042 = vld [vmem:[%s2989 + $0x1a0] sm:$0xff]
    %v3043 = vld [vmem:[%s2989 + $0x1a8] sm:$0xff]
    %v3044 = vld [vmem:[%s2989 + $0x1b0] sm:$0xff]
    %v3045 = vld [vmem:[%s2989 + $0x1b8] sm:$0xff]
    %v3046 = vld [vmem:[%s2989 + $0x1c0] sm:$0xff]
    %v3047 = vld [vmem:[%s2989 + $0x1c8] sm:$0xff]
    %v3048 = vld [vmem:[%s2989 + $0x1d0] sm:$0xff]
    %v3049 = vld [vmem:[%s2989 + $0x1d8] sm:$0xff]
    %v3050 = vld [vmem:[%s2989 + $0x1e0] sm:$0xff]
    %v3051 = vld [vmem:[%s2989 + $0x1e8] sm:$0xff]
    %v3052 = vld [vmem:[%s2989 + $0x1f0] sm:$0xff]
    %v3053 = vld [vmem:[%s2989 + $0x1f8] sm:$0xff]
    %v3054 = vrot.slane %v610, 2
    %3056 = vmatprep.subr.bf16.mxu0 %v2991
    %3057 = vmatpush1.bf16.msra.mxu0 %v2990
    %3058 = vmatprep.subr.bf16.mxu0 %v2999
    %3059 = vmatpush1.bf16.msra.mxu0 %v2998
    %3060 = vmatprep.subr.bf16.mxu0 %v3007
    %3061 = vmatpush1.bf16.msra.mxu0 %v3006
    %3062 = vmatprep.subr.bf16.mxu0 %v3015
    %3063 = vmatpush1.bf16.msra.mxu0 %v3014
    %3064 = vmatprep.subr.bf16.mxu0 %v3023
    %3065 = vmatpush1.bf16.msra.mxu0 %v3022
    %3066 = vmatprep.subr.bf16.mxu0 %v3031
    %3067 = vmatpush1.bf16.msra.mxu0 %v3030
    %3068 = vmatprep.subr.bf16.mxu0 %v3039
    %3069 = vmatpush1.bf16.msra.mxu0 %v3038
    %3070 = vmatprep.subr.bf16.mxu0 %v3047
    %3071 = vmatpush1.bf16.msra.mxu0 %v3046
    %3072 = vmatprep.subr.bf16.mxu0 0
    %3073 = vmatpush1.bf16.msra.mxu0 0
    %3074 = vmatprep.subr.bf16.mxu0 0
    %3075 = vmatpush1.bf16.msra.mxu0 0
    %3076 = vmatprep.subr.bf16.mxu0 0
    %3077 = vmatpush1.bf16.msra.mxu0 0
    %3078 = vmatprep.subr.bf16.mxu0 0
    %3079 = vmatpush1.bf16.msra.mxu0 0
    %3080 = vmatprep.subr.bf16.mxu0 0
    %3081 = vmatpush1.bf16.msra.mxu0 0
    %3082 = vmatprep.subr.bf16.mxu0 0
    %3083 = vmatpush1.bf16.msra.mxu0 0
    %3084 = vmatprep.subr.bf16.mxu0 0
    %3085 = vmatpush1.bf16.msra.mxu0 0
    %3086 = vmatprep.subr.bf16.mxu0 0
    %3087 = vmatpush1.bf16.msra.mxu0 0
    %3088 = vmatprep.mubr.bf16.mxu0 0
    %3089 = vmatmul.mubr.bf16.gmra.mrb[0].mxu0 %v3054
    %v3090 = vpop.f32.mrb[0].mxu0
    %v3091 = vadd.f32 0.0, %v3090
    %v3092 = vpop.f32.mrb[0].mxu0
    %v3093 = vadd.f32 0.0, %v3092
    %v3094 = vpop.f32.mrb[0].mxu0
    %v3095 = vpop.f32.mrb[0].mxu0
    %3096 = vdwg.mxu0
    %3097 = vmatprep.subr.bf16.mxu0 %v2993
    %3098 = vmatpush1.bf16.msra.mxu0 %v2992
    %3099 = vmatprep.subr.bf16.mxu0 %v3001
    %3100 = vmatpush1.bf16.msra.mxu0 %v3000
    %3101 = vmatprep.subr.bf16.mxu0 %v3009
    %3102 = vmatpush1.bf16.msra.mxu0 %v3008
    %3103 = vmatprep.subr.bf16.mxu0 %v3017
    %3104 = vmatpush1.bf16.msra.mxu0 %v3016
    %3105 = vmatprep.subr.bf16.mxu0 %v3025
    %3106 = vmatpush1.bf16.msra.mxu0 %v3024
    %3107 = vmatprep.subr.bf16.mxu0 %v3033
    %3108 = vmatpush1.bf16.msra.mxu0 %v3032
    %3109 = vmatprep.subr.bf16.mxu0 %v3041
    %3110 = vmatpush1.bf16.msra.mxu0 %v3040
    %3111 = vmatprep.subr.bf16.mxu0 %v3049
    %3112 = vmatpush1.bf16.msra.mxu0 %v3048
    %3113 = vmatprep.subr.bf16.mxu0 0
    %3114 = vmatpush1.bf16.msra.mxu0 0
    %3115 = vmatprep.subr.bf16.mxu0 0
    %3116 = vmatpush1.bf16.msra.mxu0 0
    %3117 = vmatprep.subr.bf16.mxu0 0
    %3118 = vmatpush1.bf16.msra.mxu0 0
    %3119 = vmatprep.subr.bf16.mxu0 0
    %3120 = vmatpush1.bf16.msra.mxu0 0
    %3121 = vmatprep.subr.bf16.mxu0 0
    %3122 = vmatpush1.bf16.msra.mxu0 0
    %3123 = vmatprep.subr.bf16.mxu0 0
    %3124 = vmatpush1.bf16.msra.mxu0 0
    %3125 = vmatprep.subr.bf16.mxu0 0
    %3126 = vmatpush1.bf16.msra.mxu0 0
    %3127 = vmatprep.subr.bf16.mxu0 0
    %3128 = vmatpush1.bf16.msra.mxu0 0
    %3129 = vmatprep.mubr.bf16.mxu0 0
    %3130 = vmatmul.mubr.bf16.gmra.mrb[0].mxu0 %v3054
    %v3131 = vpop.f32.mrb[0].mxu0
    %v3132 = vadd.f32 0.0, %v3131
    %v3133 = vpop.f32.mrb[0].mxu0
    %v3134 = vadd.f32 0.0, %v3133
    %v3135 = vpop.f32.mrb[0].mxu0
    %v3136 = vpop.f32.mrb[0].mxu0
    %3137 = vdwg.mxu0
    %3138 = vmatprep.subr.bf16.mxu0 %v2995
    %3139 = vmatpush1.bf16.msra.mxu0 %v2994
    %3140 = vmatprep.subr.bf16.mxu0 %v3003
    %3141 = vmatpush1.bf16.msra.mxu0 %v3002
    %3142 = vmatprep.subr.bf16.mxu0 %v3011
    %3143 = vmatpush1.bf16.msra.mxu0 %v3010
    %3144 = vmatprep.subr.bf16.mxu0 %v3019
    %3145 = vmatpush1.bf16.msra.mxu0 %v3018
    %3146 = vmatprep.subr.bf16.mxu0 %v3027
    %3147 = vmatpush1.bf16.msra.mxu0 %v3026
    %3148 = vmatprep.subr.bf16.mxu0 %v3035
    %3149 = vmatpush1.bf16.msra.mxu0 %v3034
    %3150 = vmatprep.subr.bf16.mxu0 %v3043
    %3151 = vmatpush1.bf16.msra.mxu0 %v3042
    %3152 = vmatprep.subr.bf16.mxu0 %v3051
    %3153 = vmatpush1.bf16.msra.mxu0 %v3050
    %3154 = vmatprep.subr.bf16.mxu0 0
    %3155 = vmatpush1.bf16.msra.mxu0 0
    %3156 = vmatprep.subr.bf16.mxu0 0
    %3157 = vmatpush1.bf16.msra.mxu0 0
    %3158 = vmatprep.subr.bf16.mxu0 0
    %3159 = vmatpush1.bf16.msra.mxu0 0
    %3160 = vmatprep.subr.bf16.mxu0 0
    %3161 = vmatpush1.bf16.msra.mxu0 0
    %3162 = vmatprep.subr.bf16.mxu0 0
    %3163 = vmatpush1.bf16.msra.mxu0 0
    %3164 = vmatprep.subr.bf16.mxu0 0
    %3165 = vmatpush1.bf16.msra.mxu0 0
    %3166 = vmatprep.subr.bf16.mxu0 0
    %3167 = vmatpush1.bf16.msra.mxu0 0
    %3168 = vmatprep.subr.bf16.mxu0 0
    %3169 = vmatpush1.bf16.msra.mxu0 0
    %3170 = vmatprep.mubr.bf16.mxu0 0
    %3171 = vmatmul.mubr.bf16.gmra.mrb[0].mxu0 %v3054
    %v3172 = vpop.f32.mrb[0].mxu0
    %v3173 = vadd.f32 0.0, %v3172
    %v3174 = vpop.f32.mrb[0].mxu0
    %v3175 = vadd.f32 0.0, %v3174
    %v3176 = vpop.f32.mrb[0].mxu0
    %v3177 = vpop.f32.mrb[0].mxu0
    %3178 = vdwg.mxu0
    %3179 = vmatprep.subr.bf16.mxu0 %v2997
    %3180 = vmatpush1.bf16.msra.mxu0 %v2996
    %3181 = vmatprep.subr.bf16.mxu0 %v3005
    %3182 = vmatpush1.bf16.msra.mxu0 %v3004
    %3183 = vmatprep.subr.bf16.mxu0 %v3013
    %3184 = vmatpush1.bf16.msra.mxu0 %v3012
    %3185 = vmatprep.subr.bf16.mxu0 %v3021
    %3186 = vmatpush1.bf16.msra.mxu0 %v3020
    %3187 = vmatprep.subr.bf16.mxu0 %v3029
    %3188 = vmatpush1.bf16.msra.mxu0 %v3028
    %3189 = vmatprep.subr.bf16.mxu0 %v3037
    %3190 = vmatpush1.bf16.msra.mxu0 %v3036
    %3191 = vmatprep.subr.bf16.mxu0 %v3045
    %3192 = vmatpush1.bf16.msra.mxu0 %v3044
    %3193 = vmatprep.subr.bf16.mxu0 %v3053
    %3194 = vmatpush1.bf16.msra.mxu0 %v3052
    %3195 = vmatprep.subr.bf16.mxu0 0
    %3196 = vmatpush1.bf16.msra.mxu0 0
    %3197 = vmatprep.subr.bf16.mxu0 0
    %3198 = vmatpush1.bf16.msra.mxu0 0
    %3199 = vmatprep.subr.bf16.mxu0 0
    %3200 = vmatpush1.bf16.msra.mxu0 0
    %3201 = vmatprep.subr.bf16.mxu0 0
    %3202 = vmatpush1.bf16.msra.mxu0 0
    %3203 = vmatprep.subr.bf16.mxu0 0
    %3204 = vmatpush1.bf16.msra.mxu0 0
    %3205 = vmatprep.subr.bf16.mxu0 0
    %3206 = vmatpush1.bf16.msra.mxu0 0
    %3207 = vmatprep.subr.bf16.mxu0 0
    %3208 = vmatpush1.bf16.msra.mxu0 0
    %3209 = vmatprep.subr.bf16.mxu0 0
    %3210 = vmatpush1.bf16.msra.mxu0 0
    %3211 = vmatprep.mubr.bf16.mxu0 0
    %3212 = vmatmul.mubr.bf16.gmra.mrb[0].mxu0 %v3054
    %v3213 = vpop.f32.mrb[0].mxu0
    %v3214 = vadd.f32 0.0, %v3213
    %v3215 = vpop.f32.mrb[0].mxu0
    %v3216 = vadd.f32 0.0, %v3215
    %v3217 = vpop.f32.mrb[0].mxu0
    %v3218 = vpop.f32.mrb[0].mxu0
    %3219 = vdwg.mxu0
    %v3220 = vadd.f32 %v2981, %v3091
    %v3221 = vadd.f32 %v2982, %v3093
    %v3222 = vadd.f32 %v2983, %v3132
    %v3223 = vadd.f32 %v2984, %v3134
    %v3224 = vadd.f32 %v2985, %v3173
    %v3225 = vadd.f32 %v2986, %v3175
    %v3226 = vadd.f32 %v2987, %v3214
    %v3227 = vadd.f32 %v2988, %v3216
    %s3228 = scalar_lea.vmem [#allocation2], 5632
    %v3229 = vld [vmem:[%s3228] sm:$0xff]
    %v3230 = vld [vmem:[%s3228 + $0x8] sm:$0xff]
    %v3231 = vld [vmem:[%s3228 + $0x10] sm:$0xff]
    %v3232 = vld [vmem:[%s3228 + $0x18] sm:$0xff]
    %v3233 = vld [vmem:[%s3228 + $0x20] sm:$0xff]
    %v3234 = vld [vmem:[%s3228 + $0x28] sm:$0xff]
    %v3235 = vld [vmem:[%s3228 + $0x30] sm:$0xff]
    %v3236 = vld [vmem:[%s3228 + $0x38] sm:$0xff]
    %v3237 = vld [vmem:[%s3228 + $0x40] sm:$0xff]
    %v3238 = vld [vmem:[%s3228 + $0x48] sm:$0xff]
    %v3239 = vld [vmem:[%s3228 + $0x50] sm:$0xff]
    %v3240 = vld [vmem:[%s3228 + $0x58] sm:$0xff]
    %v3241 = vld [vmem:[%s3228 + $0x60] sm:$0xff]
    %v3242 = vld [vmem:[%s3228 + $0x68] sm:$0xff]
    %v3243 = vld [vmem:[%s3228 + $0x70] sm:$0xff]
    %v3244 = vld [vmem:[%s3228 + $0x78] sm:$0xff]
    %v3245 = vld [vmem:[%s3228 + $0x80] sm:$0xff]
    %v3246 = vld [vmem:[%s3228 + $0x88] sm:$0xff]
    %v3247 = vld [vmem:[%s3228 + $0x90] sm:$0xff]
    %v3248 = vld [vmem:[%s3228 + $0x98] sm:$0xff]
    %v3249 = vld [vmem:[%s3228 + $0xa0] sm:$0xff]
    %v3250 = vld [vmem:[%s3228 + $0xa8] sm:$0xff]
    %v3251 = vld [vmem:[%s3228 + $0xb0] sm:$0xff]
    %v3252 = vld [vmem:[%s3228 + $0xb8] sm:$0xff]
    %v3253 = vld [vmem:[%s3228 + $0xc0] sm:$0xff]
    %v3254 = vld [vmem:[%s3228 + $0xc8] sm:$0xff]
    %v3255 = vld [vmem:[%s3228 + $0xd0] sm:$0xff]
    %v3256 = vld [vmem:[%s3228 + $0xd8] sm:$0xff]
    %v3257 = vld [vmem:[%s3228 + $0xe0] sm:$0xff]
    %v3258 = vld [vmem:[%s3228 + $0xe8] sm:$0xff]
    %v3259 = vld [vmem:[%s3228 + $0xf0] sm:$0xff]
    %v3260 = vld [vmem:[%s3228 + $0xf8] sm:$0xff]
    %v3261 = vld [vmem:[%s3228 + $0x100] sm:$0xff]
    %v3262 = vld [vmem:[%s3228 + $0x108] sm:$0xff]
    %v3263 = vld [vmem:[%s3228 + $0x110] sm:$0xff]
    %v3264 = vld [vmem:[%s3228 + $0x118] sm:$0xff]
    %v3265 = vld [vmem:[%s3228 + $0x120] sm:$0xff]
    %v3266 = vld [vmem:[%s3228 + $0x128] sm:$0xff]
    %v3267 = vld [vmem:[%s3228 + $0x130] sm:$0xff]
    %v3268 = vld [vmem:[%s3228 + $0x138] sm:$0xff]
    %v3269 = vld [vmem:[%s3228 + $0x140] sm:$0xff]
    %v3270 = vld [vmem:[%s3228 + $0x148] sm:$0xff]
    %v3271 = vld [vmem:[%s3228 + $0x150] sm:$0xff]
    %v3272 = vld [vmem:[%s3228 + $0x158] sm:$0xff]
    %v3273 = vld [vmem:[%s3228 + $0x160] sm:$0xff]
    %v3274 = vld [vmem:[%s3228 + $0x168] sm:$0xff]
    %v3275 = vld [vmem:[%s3228 + $0x170] sm:$0xff]
    %v3276 = vld [vmem:[%s3228 + $0x178] sm:$0xff]
    %v3277 = vld [vmem:[%s3228 + $0x180] sm:$0xff]
    %v3278 = vld [vmem:[%s3228 + $0x188] sm:$0xff]
    %v3279 = vld [vmem:[%s3228 + $0x190] sm:$0xff]
    %v3280 = vld [vmem:[%s3228 + $0x198] sm:$0xff]
    %v3281 = vld [vmem:[%s3228 + $0x1a0] sm:$0xff]
    %v3282 = vld [vmem:[%s3228 + $0x1a8] sm:$0xff]
    %v3283 = vld [vmem:[%s3228 + $0x1b0] sm:$0xff]
    %v3284 = vld [vmem:[%s3228 + $0x1b8] sm:$0xff]
    %v3285 = vld [vmem:[%s3228 + $0x1c0] sm:$0xff]
    %v3286 = vld [vmem:[%s3228 + $0x1c8] sm:$0xff]
    %v3287 = vld [vmem:[%s3228 + $0x1d0] sm:$0xff]
    %v3288 = vld [vmem:[%s3228 + $0x1d8] sm:$0xff]
    %v3289 = vld [vmem:[%s3228 + $0x1e0] sm:$0xff]
    %v3290 = vld [vmem:[%s3228 + $0x1e8] sm:$0xff]
    %v3291 = vld [vmem:[%s3228 + $0x1f0] sm:$0xff]
    %v3292 = vld [vmem:[%s3228 + $0x1f8] sm:$0xff]
    %v3293 = vrot.slane %v610, 3
    %3295 = vmatprep.subr.bf16.mxu0 %v3230
    %3296 = vmatpush1.bf16.msra.mxu0 %v3229
    %3297 = vmatprep.subr.bf16.mxu0 %v3238
    %3298 = vmatpush1.bf16.msra.mxu0 %v3237
    %3299 = vmatprep.subr.bf16.mxu0 %v3246
    %3300 = vmatpush1.bf16.msra.mxu0 %v3245
    %3301 = vmatprep.subr.bf16.mxu0 %v3254
    %3302 = vmatpush1.bf16.msra.mxu0 %v3253
    %3303 = vmatprep.subr.bf16.mxu0 %v3262
    %3304 = vmatpush1.bf16.msra.mxu0 %v3261
    %3305 = vmatprep.subr.bf16.mxu0 %v3270
    %3306 = vmatpush1.bf16.msra.mxu0 %v3269
    %3307 = vmatprep.subr.bf16.mxu0 %v3278
    %3308 = vmatpush1.bf16.msra.mxu0 %v3277
    %3309 = vmatprep.subr.bf16.mxu0 %v3286
    %3310 = vmatpush1.bf16.msra.mxu0 %v3285
    %3311 = vmatprep.subr.bf16.mxu0 0
    %3312 = vmatpush1.bf16.msra.mxu0 0
    %3313 = vmatprep.subr.bf16.mxu0 0
    %3314 = vmatpush1.bf16.msra.mxu0 0
    %3315 = vmatprep.subr.bf16.mxu0 0
    %3316 = vmatpush1.bf16.msra.mxu0 0
    %3317 = vmatprep.subr.bf16.mxu0 0
    %3318 = vmatpush1.bf16.msra.mxu0 0
    %3319 = vmatprep.subr.bf16.mxu0 0
    %3320 = vmatpush1.bf16.msra.mxu0 0
    %3321 = vmatprep.subr.bf16.mxu0 0
    %3322 = vmatpush1.bf16.msra.mxu0 0
    %3323 = vmatprep.subr.bf16.mxu0 0
    %3324 = vmatpush1.bf16.msra.mxu0 0
    %3325 = vmatprep.subr.bf16.mxu0 0
    %3326 = vmatpush1.bf16.msra.mxu0 0
    %3327 = vmatprep.mubr.bf16.mxu0 0
    %3328 = vmatmul.mubr.bf16.gmra.mrb[0].mxu0 %v3293
    %v3329 = vpop.f32.mrb[0].mxu0
    %v3330 = vadd.f32 0.0, %v3329
    %v3331 = vpop.f32.mrb[0].mxu0
    %v3332 = vadd.f32 0.0, %v3331
    %v3333 = vpop.f32.mrb[0].mxu0
    %v3334 = vpop.f32.mrb[0].mxu0
    %3335 = vdwg.mxu0
    %3336 = vmatprep.subr.bf16.mxu0 %v3232
    %3337 = vmatpush1.bf16.msra.mxu0 %v3231
    %3338 = vmatprep.subr.bf16.mxu0 %v3240
    %3339 = vmatpush1.bf16.msra.mxu0 %v3239
    %3340 = vmatprep.subr.bf16.mxu0 %v3248
    %3341 = vmatpush1.bf16.msra.mxu0 %v3247
    %3342 = vmatprep.subr.bf16.mxu0 %v3256
    %3343 = vmatpush1.bf16.msra.mxu0 %v3255
    %3344 = vmatprep.subr.bf16.mxu0 %v3264
    %3345 = vmatpush1.bf16.msra.mxu0 %v3263
    %3346 = vmatprep.subr.bf16.mxu0 %v3272
    %3347 = vmatpush1.bf16.msra.mxu0 %v3271
    %3348 = vmatprep.subr.bf16.mxu0 %v3280
    %3349 = vmatpush1.bf16.msra.mxu0 %v3279
    %3350 = vmatprep.subr.bf16.mxu0 %v3288
    %3351 = vmatpush1.bf16.msra.mxu0 %v3287
    %3352 = vmatprep.subr.bf16.mxu0 0
    %3353 = vmatpush1.bf16.msra.mxu0 0
    %3354 = vmatprep.subr.bf16.mxu0 0
    %3355 = vmatpush1.bf16.msra.mxu0 0
    %3356 = vmatprep.subr.bf16.mxu0 0
    %3357 = vmatpush1.bf16.msra.mxu0 0
    %3358 = vmatprep.subr.bf16.mxu0 0
    %3359 = vmatpush1.bf16.msra.mxu0 0
    %3360 = vmatprep.subr.bf16.mxu0 0
    %3361 = vmatpush1.bf16.msra.mxu0 0
    %3362 = vmatprep.subr.bf16.mxu0 0
    %3363 = vmatpush1.bf16.msra.mxu0 0
    %3364 = vmatprep.subr.bf16.mxu0 0
    %3365 = vmatpush1.bf16.msra.mxu0 0
    %3366 = vmatprep.subr.bf16.mxu0 0
    %3367 = vmatpush1.bf16.msra.mxu0 0
    %3368 = vmatprep.mubr.bf16.mxu0 0
    %3369 = vmatmul.mubr.bf16.gmra.mrb[0].mxu0 %v3293
    %v3370 = vpop.f32.mrb[0].mxu0
    %v3371 = vadd.f32 0.0, %v3370
    %v3372 = vpop.f32.mrb[0].mxu0
    %v3373 = vadd.f32 0.0, %v3372
    %v3374 = vpop.f32.mrb[0].mxu0
    %v3375 = vpop.f32.mrb[0].mxu0
    %3376 = vdwg.mxu0
    %3377 = vmatprep.subr.bf16.mxu0 %v3234
    %3378 = vmatpush1.bf16.msra.mxu0 %v3233
    %3379 = vmatprep.subr.bf16.mxu0 %v3242
    %3380 = vmatpush1.bf16.msra.mxu0 %v3241
    %3381 = vmatprep.subr.bf16.mxu0 %v3250
    %3382 = vmatpush1.bf16.msra.mxu0 %v3249
    %3383 = vmatprep.subr.bf16.mxu0 %v3258
    %3384 = vmatpush1.bf16.msra.mxu0 %v3257
    %3385 = vmatprep.subr.bf16.mxu0 %v3266
    %3386 = vmatpush1.bf16.msra.mxu0 %v3265
    %3387 = vmatprep.subr.bf16.mxu0 %v3274
    %3388 = vmatpush1.bf16.msra.mxu0 %v3273
    %3389 = vmatprep.subr.bf16.mxu0 %v3282
    %3390 = vmatpush1.bf16.msra.mxu0 %v3281
    %3391 = vmatprep.subr.bf16.mxu0 %v3290
    %3392 = vmatpush1.bf16.msra.mxu0 %v3289
    %3393 = vmatprep.subr.bf16.mxu0 0
    %3394 = vmatpush1.bf16.msra.mxu0 0
    %3395 = vmatprep.subr.bf16.mxu0 0
    %3396 = vmatpush1.bf16.msra.mxu0 0
    %3397 = vmatprep.subr.bf16.mxu0 0
    %3398 = vmatpush1.bf16.msra.mxu0 0
    %3399 = vmatprep.subr.bf16.mxu0 0
    %3400 = vmatpush1.bf16.msra.mxu0 0
    %3401 = vmatprep.subr.bf16.mxu0 0
    %3402 = vmatpush1.bf16.msra.mxu0 0
    %3403 = vmatprep.subr.bf16.mxu0 0
    %3404 = vmatpush1.bf16.msra.mxu0 0
    %3405 = vmatprep.subr.bf16.mxu0 0
    %3406 = vmatpush1.bf16.msra.mxu0 0
    %3407 = vmatprep.subr.bf16.mxu0 0
    %3408 = vmatpush1.bf16.msra.mxu0 0
    %3409 = vmatprep.mubr.bf16.mxu0 0
    %3410 = vmatmul.mubr.bf16.gmra.mrb[0].mxu0 %v3293
    %v3411 = vpop.f32.mrb[0].mxu0
    %v3412 = vadd.f32 0.0, %v3411
    %v3413 = vpop.f32.mrb[0].mxu0
    %v3414 = vadd.f32 0.0, %v3413
    %v3415 = vpop.f32.mrb[0].mxu0
    %v3416 = vpop.f32.mrb[0].mxu0
    %3417 = vdwg.mxu0
    %3418 = vmatprep.subr.bf16.mxu0 %v3236
    %3419 = vmatpush1.bf16.msra.mxu0 %v3235
    %3420 = vmatprep.subr.bf16.mxu0 %v3244
    %3421 = vmatpush1.bf16.msra.mxu0 %v3243
    %3422 = vmatprep.subr.bf16.mxu0 %v3252
    %3423 = vmatpush1.bf16.msra.mxu0 %v3251
    %3424 = vmatprep.subr.bf16.mxu0 %v3260
    %3425 = vmatpush1.bf16.msra.mxu0 %v3259
    %3426 = vmatprep.subr.bf16.mxu0 %v3268
    %3427 = vmatpush1.bf16.msra.mxu0 %v3267
    %3428 = vmatprep.subr.bf16.mxu0 %v3276
    %3429 = vmatpush1.bf16.msra.mxu0 %v3275
    %3430 = vmatprep.subr.bf16.mxu0 %v3284
    %3431 = vmatpush1.bf16.msra.mxu0 %v3283
    %3432 = vmatprep.subr.bf16.mxu0 %v3292
    %3433 = vmatpush1.bf16.msra.mxu0 %v3291
    %3434 = vmatprep.subr.bf16.mxu0 0
    %3435 = vmatpush1.bf16.msra.mxu0 0
    %3436 = vmatprep.subr.bf16.mxu0 0
    %3437 = vmatpush1.bf16.msra.mxu0 0
    %3438 = vmatprep.subr.bf16.mxu0 0
    %3439 = vmatpush1.bf16.msra.mxu0 0
    %3440 = vmatprep.subr.bf16.mxu0 0
    %3441 = vmatpush1.bf16.msra.mxu0 0
    %3442 = vmatprep.subr.bf16.mxu0 0
    %3443 = vmatpush1.bf16.msra.mxu0 0
    %3444 = vmatprep.subr.bf16.mxu0 0
    %3445 = vmatpush1.bf16.msra.mxu0 0
    %3446 = vmatprep.subr.bf16.mxu0 0
    %3447 = vmatpush1.bf16.msra.mxu0 0
    %3448 = vmatprep.subr.bf16.mxu0 0
    %3449 = vmatpush1.bf16.msra.mxu0 0
    %3450 = vmatprep.mubr.bf16.mxu0 0
    %3451 = vmatmul.mubr.bf16.gmra.mrb[0].mxu0 %v3293
    %v3452 = vpop.f32.mrb[0].mxu0
    %v3453 = vadd.f32 0.0, %v3452
    %v3454 = vpop.f32.mrb[0].mxu0
    %v3455 = vadd.f32 0.0, %v3454
    %v3456 = vpop.f32.mrb[0].mxu0
    %v3457 = vpop.f32.mrb[0].mxu0
    %3458 = vdwg.mxu0
    %v3459 = vadd.f32 %v3220, %v3330
    %v3460 = vadd.f32 %v3221, %v3332
    %v3461 = vadd.f32 %v3222, %v3371
    %v3462 = vadd.f32 %v3223, %v3373
    %v3463 = vadd.f32 %v3224, %v3412
    %v3464 = vadd.f32 %v3225, %v3414
    %v3465 = vadd.f32 %v3226, %v3453
    %v3466 = vadd.f32 %v3227, %v3455
    %s3467 = sshll.u32 %s613, 4
    %3468 = dma.done %s198, %s3467
    %v3469 = vld [vmem:[%s197] sm:$0xff]
    %v3470 = vld [vmem:[%s197 + $0x8] sm:$0xff]
    %v3471 = vld [vmem:[%s197 + $0x10] sm:$0xff]
    %v3472 = vld [vmem:[%s197 + $0x18] sm:$0xff]
    %v3473 = vld [vmem:[%s197 + $0x20] sm:$0xff]
    %v3474 = vld [vmem:[%s197 + $0x28] sm:$0xff]
    %v3475 = vld [vmem:[%s197 + $0x30] sm:$0xff]
    %v3476 = vld [vmem:[%s197 + $0x38] sm:$0xff]
    %v3477 = vld [vmem:[%s197 + $0x40] sm:$0xff]
    %v3478 = vld [vmem:[%s197 + $0x48] sm:$0xff]
    %v3479 = vld [vmem:[%s197 + $0x50] sm:$0xff]
    %v3480 = vld [vmem:[%s197 + $0x58] sm:$0xff]
    %v3481 = vld [vmem:[%s197 + $0x60] sm:$0xff]
    %v3482 = vld [vmem:[%s197 + $0x68] sm:$0xff]
    %v3483 = vld [vmem:[%s197 + $0x70] sm:$0xff]
    %v3484 = vld [vmem:[%s197 + $0x78] sm:$0xff]
    %v3485 = vld [vmem:[%s197 + $0x80] sm:$0xff]
    %v3486 = vld [vmem:[%s197 + $0x88] sm:$0xff]
    %v3487 = vld [vmem:[%s197 + $0x90] sm:$0xff]
    %v3488 = vld [vmem:[%s197 + $0x98] sm:$0xff]
    %v3489 = vld [vmem:[%s197 + $0xa0] sm:$0xff]
    %v3490 = vld [vmem:[%s197 + $0xa8] sm:$0xff]
    %v3491 = vld [vmem:[%s197 + $0xb0] sm:$0xff]
    %v3492 = vld [vmem:[%s197 + $0xb8] sm:$0xff]
    %v3493 = vld [vmem:[%s197 + $0xc0] sm:$0xff]
    %v3494 = vld [vmem:[%s197 + $0xc8] sm:$0xff]
    %v3495 = vld [vmem:[%s197 + $0xd0] sm:$0xff]
    %v3496 = vld [vmem:[%s197 + $0xd8] sm:$0xff]
    %v3497 = vld [vmem:[%s197 + $0xe0] sm:$0xff]
    %v3498 = vld [vmem:[%s197 + $0xe8] sm:$0xff]
    %v3499 = vld [vmem:[%s197 + $0xf0] sm:$0xff]
    %v3500 = vld [vmem:[%s197 + $0xf8] sm:$0xff]
    %v3501 = vld [vmem:[%s197 + $0x100] sm:$0xff]
    %v3502 = vld [vmem:[%s197 + $0x108] sm:$0xff]
    %v3503 = vld [vmem:[%s197 + $0x110] sm:$0xff]
    %v3504 = vld [vmem:[%s197 + $0x118] sm:$0xff]
    %v3505 = vld [vmem:[%s197 + $0x120] sm:$0xff]
    %v3506 = vld [vmem:[%s197 + $0x128] sm:$0xff]
    %v3507 = vld [vmem:[%s197 + $0x130] sm:$0xff]
    %v3508 = vld [vmem:[%s197 + $0x138] sm:$0xff]
    %v3509 = vld [vmem:[%s197 + $0x140] sm:$0xff]
    %v3510 = vld [vmem:[%s197 + $0x148] sm:$0xff]
    %v3511 = vld [vmem:[%s197 + $0x150] sm:$0xff]
    %v3512 = vld [vmem:[%s197 + $0x158] sm:$0xff]
    %v3513 = vld [vmem:[%s197 + $0x160] sm:$0xff]
    %v3514 = vld [vmem:[%s197 + $0x168] sm:$0xff]
    %v3515 = vld [vmem:[%s197 + $0x170] sm:$0xff]
    %v3516 = vld [vmem:[%s197 + $0x178] sm:$0xff]
    %v3517 = vld [vmem:[%s197 + $0x180] sm:$0xff]
    %v3518 = vld [vmem:[%s197 + $0x188] sm:$0xff]
    %v3519 = vld [vmem:[%s197 + $0x190] sm:$0xff]
    %v3520 = vld [vmem:[%s197 + $0x198] sm:$0xff]
    %v3521 = vld [vmem:[%s197 + $0x1a0] sm:$0xff]
    %v3522 = vld [vmem:[%s197 + $0x1a8] sm:$0xff]
    %v3523 = vld [vmem:[%s197 + $0x1b0] sm:$0xff]
    %v3524 = vld [vmem:[%s197 + $0x1b8] sm:$0xff]
    %v3525 = vld [vmem:[%s197 + $0x1c0] sm:$0xff]
    %v3526 = vld [vmem:[%s197 + $0x1c8] sm:$0xff]
    %v3527 = vld [vmem:[%s197 + $0x1d0] sm:$0xff]
    %v3528 = vld [vmem:[%s197 + $0x1d8] sm:$0xff]
    %v3529 = vld [vmem:[%s197 + $0x1e0] sm:$0xff]
    %v3530 = vld [vmem:[%s197 + $0x1e8] sm:$0xff]
    %v3531 = vld [vmem:[%s197 + $0x1f0] sm:$0xff]
    %v3532 = vld [vmem:[%s197 + $0x1f8] sm:$0xff]
    %v3533 = vrot.slane %v610, 4
    %3535 = vmatprep.subr.bf16.mxu0 %v3470
    %3536 = vmatpush1.bf16.msra.mxu0 %v3469
    %3537 = vmatprep.subr.bf16.mxu0 %v3478
    %3538 = vmatpush1.bf16.msra.mxu0 %v3477
    %3539 = vmatprep.subr.bf16.mxu0 %v3486
    %3540 = vmatpush1.bf16.msra.mxu0 %v3485
    %3541 = vmatprep.subr.bf16.mxu0 %v3494
    %3542 = vmatpush1.bf16.msra.mxu0 %v3493
    %3543 = vmatprep.subr.bf16.mxu0 %v3502
    %3544 = vmatpush1.bf16.msra.mxu0 %v3501
    %3545 = vmatprep.subr.bf16.mxu0 %v3510
    %3546 = vmatpush1.bf16.msra.mxu0 %v3509
    %3547 = vmatprep.subr.bf16.mxu0 %v3518
    %3548 = vmatpush1.bf16.msra.mxu0 %v3517
    %3549 = vmatprep.subr.bf16.mxu0 %v3526
    %3550 = vmatpush1.bf16.msra.mxu0 %v3525
    %3551 = vmatprep.subr.bf16.mxu0 0
    %3552 = vmatpush1.bf16.msra.mxu0 0
    %3553 = vmatprep.subr.bf16.mxu0 0
    %3554 = vmatpush1.bf16.msra.mxu0 0
    %3555 = vmatprep.subr.bf16.mxu0 0
    %3556 = vmatpush1.bf16.msra.mxu0 0
    %3557 = vmatprep.subr.bf16.mxu0 0
    %3558 = vmatpush1.bf16.msra.mxu0 0
    %3559 = vmatprep.subr.bf16.mxu0 0
    %3560 = vmatpush1.bf16.msra.mxu0 0
    %3561 = vmatprep.subr.bf16.mxu0 0
    %3562 = vmatpush1.bf16.msra.mxu0 0
    %3563 = vmatprep.subr.bf16.mxu0 0
    %3564 = vmatpush1.bf16.msra.mxu0 0
    %3565 = vmatprep.subr.bf16.mxu0 0
    %3566 = vmatpush1.bf16.msra.mxu0 0
    %3567 = vmatprep.mubr.bf16.mxu0 0
    %3568 = vmatmul.mubr.bf16.gmra.mrb[0].mxu0 %v3533
    %v3569 = vpop.f32.mrb[0].mxu0
    %v3570 = vadd.f32 0.0, %v3569
    %v3571 = vpop.f32.mrb[0].mxu0
    %v3572 = vadd.f32 0.0, %v3571
    %v3573 = vpop.f32.mrb[0].mxu0
    %v3574 = vpop.f32.mrb[0].mxu0
    %3575 = vdwg.mxu0
    %3576 = vmatprep.subr.bf16.mxu0 %v3472
    %3577 = vmatpush1.bf16.msra.mxu0 %v3471
    %3578 = vmatprep.subr.bf16.mxu0 %v3480
    %3579 = vmatpush1.bf16.msra.mxu0 %v3479
    %3580 = vmatprep.subr.bf16.mxu0 %v3488
    %3581 = vmatpush1.bf16.msra.mxu0 %v3487
    %3582 = vmatprep.subr.bf16.mxu0 %v3496
    %3583 = vmatpush1.bf16.msra.mxu0 %v3495
    %3584 = vmatprep.subr.bf16.mxu0 %v3504
    %3585 = vmatpush1.bf16.msra.mxu0 %v3503
    %3586 = vmatprep.subr.bf16.mxu0 %v3512
    %3587 = vmatpush1.bf16.msra.mxu0 %v3511
    %3588 = vmatprep.subr.bf16.mxu0 %v3520
    %3589 = vmatpush1.bf16.msra.mxu0 %v3519
    %3590 = vmatprep.subr.bf16.mxu0 %v3528
    %3591 = vmatpush1.bf16.msra.mxu0 %v3527
    %3592 = vmatprep.subr.bf16.mxu0 0
    %3593 = vmatpush1.bf16.msra.mxu0 0
    %3594 = vmatprep.subr.bf16.mxu0 0
    %3595 = vmatpush1.bf16.msra.mxu0 0
    %3596 = vmatprep.subr.bf16.mxu0 0
    %3597 = vmatpush1.bf16.msra.mxu0 0
    %3598 = vmatprep.subr.bf16.mxu0 0
    %3599 = vmatpush1.bf16.msra.mxu0 0
    %3600 = vmatprep.subr.bf16.mxu0 0
    %3601 = vmatpush1.bf16.msra.mxu0 0
    %3602 = vmatprep.subr.bf16.mxu0 0
    %3603 = vmatpush1.bf16.msra.mxu0 0
    %3604 = vmatprep.subr.bf16.mxu0 0
    %3605 = vmatpush1.bf16.msra.mxu0 0
    %3606 = vmatprep.subr.bf16.mxu0 0
    %3607 = vmatpush1.bf16.msra.mxu0 0
    %3608 = vmatprep.mubr.bf16.mxu0 0
    %3609 = vmatmul.mubr.bf16.gmra.mrb[0].mxu0 %v3533
    %v3610 = vpop.f32.mrb[0].mxu0
    %v3611 = vadd.f32 0.0, %v3610
    %v3612 = vpop.f32.mrb[0].mxu0
    %v3613 = vadd.f32 0.0, %v3612
    %v3614 = vpop.f32.mrb[0].mxu0
    %v3615 = vpop.f32.mrb[0].mxu0
    %3616 = vdwg.mxu0
    %3617 = vmatprep.subr.bf16.mxu0 %v3474
    %3618 = vmatpush1.bf16.msra.mxu0 %v3473
    %3619 = vmatprep.subr.bf16.mxu0 %v3482
    %3620 = vmatpush1.bf16.msra.mxu0 %v3481
    %3621 = vmatprep.subr.bf16.mxu0 %v3490
    %3622 = vmatpush1.bf16.msra.mxu0 %v3489
    %3623 = vmatprep.subr.bf16.mxu0 %v3498
    %3624 = vmatpush1.bf16.msra.mxu0 %v3497
    %3625 = vmatprep.subr.bf16.mxu0 %v3506
    %3626 = vmatpush1.bf16.msra.mxu0 %v3505
    %3627 = vmatprep.subr.bf16.mxu0 %v3514
    %3628 = vmatpush1.bf16.msra.mxu0 %v3513
    %3629 = vmatprep.subr.bf16.mxu0 %v3522
    %3630 = vmatpush1.bf16.msra.mxu0 %v3521
    %3631 = vmatprep.subr.bf16.mxu0 %v3530
    %3632 = vmatpush1.bf16.msra.mxu0 %v3529
    %3633 = vmatprep.subr.bf16.mxu0 0
    %3634 = vmatpush1.bf16.msra.mxu0 0
    %3635 = vmatprep.subr.bf16.mxu0 0
    %3636 = vmatpush1.bf16.msra.mxu0 0
    %3637 = vmatprep.subr.bf16.mxu0 0
    %3638 = vmatpush1.bf16.msra.mxu0 0
    %3639 = vmatprep.subr.bf16.mxu0 0
    %3640 = vmatpush1.bf16.msra.mxu0 0
    %3641 = vmatprep.subr.bf16.mxu0 0
    %3642 = vmatpush1.bf16.msra.mxu0 0
    %3643 = vmatprep.subr.bf16.mxu0 0
    %3644 = vmatpush1.bf16.msra.mxu0 0
    %3645 = vmatprep.subr.bf16.mxu0 0
    %3646 = vmatpush1.bf16.msra.mxu0 0
    %3647 = vmatprep.subr.bf16.mxu0 0
    %3648 = vmatpush1.bf16.msra.mxu0 0
    %3649 = vmatprep.mubr.bf16.mxu0 0
    %3650 = vmatmul.mubr.bf16.gmra.mrb[0].mxu0 %v3533
    %v3651 = vpop.f32.mrb[0].mxu0
    %v3652 = vadd.f32 0.0, %v3651
    %v3653 = vpop.f32.mrb[0].mxu0
    %v3654 = vadd.f32 0.0, %v3653
    %v3655 = vpop.f32.mrb[0].mxu0
    %v3656 = vpop.f32.mrb[0].mxu0
    %3657 = vdwg.mxu0
    %3658 = vmatprep.subr.bf16.mxu0 %v3476
    %3659 = vmatpush1.bf16.msra.mxu0 %v3475
    %3660 = vmatprep.subr.bf16.mxu0 %v3484
    %3661 = vmatpush1.bf16.msra.mxu0 %v3483
    %3662 = vmatprep.subr.bf16.mxu0 %v3492
    %3663 = vmatpush1.bf16.msra.mxu0 %v3491
    %3664 = vmatprep.subr.bf16.mxu0 %v3500
    %3665 = vmatpush1.bf16.msra.mxu0 %v3499
    %3666 = vmatprep.subr.bf16.mxu0 %v3508
    %3667 = vmatpush1.bf16.msra.mxu0 %v3507
    %3668 = vmatprep.subr.bf16.mxu0 %v3516
    %3669 = vmatpush1.bf16.msra.mxu0 %v3515
    %3670 = vmatprep.subr.bf16.mxu0 %v3524
    %3671 = vmatpush1.bf16.msra.mxu0 %v3523
    %3672 = vmatprep.subr.bf16.mxu0 %v3532
    %3673 = vmatpush1.bf16.msra.mxu0 %v3531
    %3674 = vmatprep.subr.bf16.mxu0 0
    %3675 = vmatpush1.bf16.msra.mxu0 0
    %3676 = vmatprep.subr.bf16.mxu0 0
    %3677 = vmatpush1.bf16.msra.mxu0 0
    %3678 = vmatprep.subr.bf16.mxu0 0
    %3679 = vmatpush1.bf16.msra.mxu0 0
    %3680 = vmatprep.subr.bf16.mxu0 0
    %3681 = vmatpush1.bf16.msra.mxu0 0
    %3682 = vmatprep.subr.bf16.mxu0 0
    %3683 = vmatpush1.bf16.msra.mxu0 0
    %3684 = vmatprep.subr.bf16.mxu0 0
    %3685 = vmatpush1.bf16.msra.mxu0 0
    %3686 = vmatprep.subr.bf16.mxu0 0
    %3687 = vmatpush1.bf16.msra.mxu0 0
    %3688 = vmatprep.subr.bf16.mxu0 0
    %3689 = vmatpush1.bf16.msra.mxu0 0
    %3690 = vmatprep.mubr.bf16.mxu0 0
    %3691 = vmatmul.mubr.bf16.gmra.mrb[0].mxu0 %v3533
    %v3692 = vpop.f32.mrb[0].mxu0
    %v3693 = vadd.f32 0.0, %v3692
    %v3694 = vpop.f32.mrb[0].mxu0
    %v3695 = vadd.f32 0.0, %v3694
    %v3696 = vpop.f32.mrb[0].mxu0
    %v3697 = vpop.f32.mrb[0].mxu0
    %3698 = vdwg.mxu0
    %v3699 = vadd.f32 %v3459, %v3570
    %v3700 = vadd.f32 %v3460, %v3572
    %v3701 = vadd.f32 %v3461, %v3611
    %v3702 = vadd.f32 %v3462, %v3613
    %v3703 = vadd.f32 %v3463, %v3652
    %v3704 = vadd.f32 %v3464, %v3654
    %v3705 = vadd.f32 %v3465, %v3693
    %v3706 = vadd.f32 %v3466, %v3695
    %s3707 = scalar_lea.vmem [#allocation2], 6656
    %v3708 = vld [vmem:[%s3707] sm:$0xff]
    %v3709 = vld [vmem:[%s3707 + $0x8] sm:$0xff]
    %v3710 = vld [vmem:[%s3707 + $0x10] sm:$0xff]
    %v3711 = vld [vmem:[%s3707 + $0x18] sm:$0xff]
    %v3712 = vld [vmem:[%s3707 + $0x20] sm:$0xff]
    %v3713 = vld [vmem:[%s3707 + $0x28] sm:$0xff]
    %v3714 = vld [vmem:[%s3707 + $0x30] sm:$0xff]
    %v3715 = vld [vmem:[%s3707 + $0x38] sm:$0xff]
    %v3716 = vld [vmem:[%s3707 + $0x40] sm:$0xff]
    %v3717 = vld [vmem:[%s3707 + $0x48] sm:$0xff]
    %v3718 = vld [vmem:[%s3707 + $0x50] sm:$0xff]
    %v3719 = vld [vmem:[%s3707 + $0x58] sm:$0xff]
    %v3720 = vld [vmem:[%s3707 + $0x60] sm:$0xff]
    %v3721 = vld [vmem:[%s3707 + $0x68] sm:$0xff]
    %v3722 = vld [vmem:[%s3707 + $0x70] sm:$0xff]
    %v3723 = vld [vmem:[%s3707 + $0x78] sm:$0xff]
    %v3724 = vld [vmem:[%s3707 + $0x80] sm:$0xff]
    %v3725 = vld [vmem:[%s3707 + $0x88] sm:$0xff]
    %v3726 = vld [vmem:[%s3707 + $0x90] sm:$0xff]
    %v3727 = vld [vmem:[%s3707 + $0x98] sm:$0xff]
    %v3728 = vld [vmem:[%s3707 + $0xa0] sm:$0xff]
    %v3729 = vld [vmem:[%s3707 + $0xa8] sm:$0xff]
    %v3730 = vld [vmem:[%s3707 + $0xb0] sm:$0xff]
    %v3731 = vld [vmem:[%s3707 + $0xb8] sm:$0xff]
    %v3732 = vld [vmem:[%s3707 + $0xc0] sm:$0xff]
    %v3733 = vld [vmem:[%s3707 + $0xc8] sm:$0xff]
    %v3734 = vld [vmem:[%s3707 + $0xd0] sm:$0xff]
    %v3735 = vld [vmem:[%s3707 + $0xd8] sm:$0xff]
    %v3736 = vld [vmem:[%s3707 + $0xe0] sm:$0xff]
    %v3737 = vld [vmem:[%s3707 + $0xe8] sm:$0xff]
    %v3738 = vld [vmem:[%s3707 + $0xf0] sm:$0xff]
    %v3739 = vld [vmem:[%s3707 + $0xf8] sm:$0xff]
    %v3740 = vld [vmem:[%s3707 + $0x100] sm:$0xff]
    %v3741 = vld [vmem:[%s3707 + $0x108] sm:$0xff]
    %v3742 = vld [vmem:[%s3707 + $0x110] sm:$0xff]
    %v3743 = vld [vmem:[%s3707 + $0x118] sm:$0xff]
    %v3744 = vld [vmem:[%s3707 + $0x120] sm:$0xff]
    %v3745 = vld [vmem:[%s3707 + $0x128] sm:$0xff]
    %v3746 = vld [vmem:[%s3707 + $0x130] sm:$0xff]
    %v3747 = vld [vmem:[%s3707 + $0x138] sm:$0xff]
    %v3748 = vld [vmem:[%s3707 + $0x140] sm:$0xff]
    %v3749 = vld [vmem:[%s3707 + $0x148] sm:$0xff]
    %v3750 = vld [vmem:[%s3707 + $0x150] sm:$0xff]
    %v3751 = vld [vmem:[%s3707 + $0x158] sm:$0xff]
    %v3752 = vld [vmem:[%s3707 + $0x160] sm:$0xff]
    %v3753 = vld [vmem:[%s3707 + $0x168] sm:$0xff]
    %v3754 = vld [vmem:[%s3707 + $0x170] sm:$0xff]
    %v3755 = vld [vmem:[%s3707 + $0x178] sm:$0xff]
    %v3756 = vld [vmem:[%s3707 + $0x180] sm:$0xff]
    %v3757 = vld [vmem:[%s3707 + $0x188] sm:$0xff]
    %v3758 = vld [vmem:[%s3707 + $0x190] sm:$0xff]
    %v3759 = vld [vmem:[%s3707 + $0x198] sm:$0xff]
    %v3760 = vld [vmem:[%s3707 + $0x1a0] sm:$0xff]
    %v3761 = vld [vmem:[%s3707 + $0x1a8] sm:$0xff]
    %v3762 = vld [vmem:[%s3707 + $0x1b0] sm:$0xff]
    %v3763 = vld [vmem:[%s3707 + $0x1b8] sm:$0xff]
    %v3764 = vld [vmem:[%s3707 + $0x1c0] sm:$0xff]
    %v3765 = vld [vmem:[%s3707 + $0x1c8] sm:$0xff]
    %v3766 = vld [vmem:[%s3707 + $0x1d0] sm:$0xff]
    %v3767 = vld [vmem:[%s3707 + $0x1d8] sm:$0xff]
    %v3768 = vld [vmem:[%s3707 + $0x1e0] sm:$0xff]
    %v3769 = vld [vmem:[%s3707 + $0x1e8] sm:$0xff]
    %v3770 = vld [vmem:[%s3707 + $0x1f0] sm:$0xff]
    %v3771 = vld [vmem:[%s3707 + $0x1f8] sm:$0xff]
    %v3772 = vrot.slane %v610, 5
    %3774 = vmatprep.subr.bf16.mxu0 %v3709
    %3775 = vmatpush1.bf16.msra.mxu0 %v3708
    %3776 = vmatprep.subr.bf16.mxu0 %v3717
    %3777 = vmatpush1.bf16.msra.mxu0 %v3716
    %3778 = vmatprep.subr.bf16.mxu0 %v3725
    %3779 = vmatpush1.bf16.msra.mxu0 %v3724
    %3780 = vmatprep.subr.bf16.mxu0 %v3733
    %3781 = vmatpush1.bf16.msra.mxu0 %v3732
    %3782 = vmatprep.subr.bf16.mxu0 %v3741
    %3783 = vmatpush1.bf16.msra.mxu0 %v3740
    %3784 = vmatprep.subr.bf16.mxu0 %v3749
    %3785 = vmatpush1.bf16.msra.mxu0 %v3748
    %3786 = vmatprep.subr.bf16.mxu0 %v3757
    %3787 = vmatpush1.bf16.msra.mxu0 %v3756
    %3788 = vmatprep.subr.bf16.mxu0 %v3765
    %3789 = vmatpush1.bf16.msra.mxu0 %v3764
    %3790 = vmatprep.subr.bf16.mxu0 0
    %3791 = vmatpush1.bf16.msra.mxu0 0
    %3792 = vmatprep.subr.bf16.mxu0 0
    %3793 = vmatpush1.bf16.msra.mxu0 0
    %3794 = vmatprep.subr.bf16.mxu0 0
    %3795 = vmatpush1.bf16.msra.mxu0 0
    %3796 = vmatprep.subr.bf16.mxu0 0
    %3797 = vmatpush1.bf16.msra.mxu0 0
    %3798 = vmatprep.subr.bf16.mxu0 0
    %3799 = vmatpush1.bf16.msra.mxu0 0
    %3800 = vmatprep.subr.bf16.mxu0 0
    %3801 = vmatpush1.bf16.msra.mxu0 0
    %3802 = vmatprep.subr.bf16.mxu0 0
    %3803 = vmatpush1.bf16.msra.mxu0 0
    %3804 = vmatprep.subr.bf16.mxu0 0
    %3805 = vmatpush1.bf16.msra.mxu0 0
    %3806 = vmatprep.mubr.bf16.mxu0 0
    %3807 = vmatmul.mubr.bf16.gmra.mrb[0].mxu0 %v3772
    %v3808 = vpop.f32.mrb[0].mxu0
    %v3809 = vadd.f32 0.0, %v3808
    %v3810 = vpop.f32.mrb[0].mxu0
    %v3811 = vadd.f32 0.0, %v3810
    %v3812 = vpop.f32.mrb[0].mxu0
    %v3813 = vpop.f32.mrb[0].mxu0
    %3814 = vdwg.mxu0
    %3815 = vmatprep.subr.bf16.mxu0 %v3711
    %3816 = vmatpush1.bf16.msra.mxu0 %v3710
    %3817 = vmatprep.subr.bf16.mxu0 %v3719
    %3818 = vmatpush1.bf16.msra.mxu0 %v3718
    %3819 = vmatprep.subr.bf16.mxu0 %v3727
    %3820 = vmatpush1.bf16.msra.mxu0 %v3726
    %3821 = vmatprep.subr.bf16.mxu0 %v3735
    %3822 = vmatpush1.bf16.msra.mxu0 %v3734
    %3823 = vmatprep.subr.bf16.mxu0 %v3743
    %3824 = vmatpush1.bf16.msra.mxu0 %v3742
    %3825 = vmatprep.subr.bf16.mxu0 %v3751
    %3826 = vmatpush1.bf16.msra.mxu0 %v3750
    %3827 = vmatprep.subr.bf16.mxu0 %v3759
    %3828 = vmatpush1.bf16.msra.mxu0 %v3758
    %3829 = vmatprep.subr.bf16.mxu0 %v3767
    %3830 = vmatpush1.bf16.msra.mxu0 %v3766
    %3831 = vmatprep.subr.bf16.mxu0 0
    %3832 = vmatpush1.bf16.msra.mxu0 0
    %3833 = vmatprep.subr.bf16.mxu0 0
    %3834 = vmatpush1.bf16.msra.mxu0 0
    %3835 = vmatprep.subr.bf16.mxu0 0
    %3836 = vmatpush1.bf16.msra.mxu0 0
    %3837 = vmatprep.subr.bf16.mxu0 0
    %3838 = vmatpush1.bf16.msra.mxu0 0
    %3839 = vmatprep.subr.bf16.mxu0 0
    %3840 = vmatpush1.bf16.msra.mxu0 0
    %3841 = vmatprep.subr.bf16.mxu0 0
    %3842 = vmatpush1.bf16.msra.mxu0 0
    %3843 = vmatprep.subr.bf16.mxu0 0
    %3844 = vmatpush1.bf16.msra.mxu0 0
    %3845 = vmatprep.subr.bf16.mxu0 0
    %3846 = vmatpush1.bf16.msra.mxu0 0
    %3847 = vmatprep.mubr.bf16.mxu0 0
    %3848 = vmatmul.mubr.bf16.gmra.mrb[0].mxu0 %v3772
    %v3849 = vpop.f32.mrb[0].mxu0
    %v3850 = vadd.f32 0.0, %v3849
    %v3851 = vpop.f32.mrb[0].mxu0
    %v3852 = vadd.f32 0.0, %v3851
    %v3853 = vpop.f32.mrb[0].mxu0
    %v3854 = vpop.f32.mrb[0].mxu0
    %3855 = vdwg.mxu0
    %3856 = vmatprep.subr.bf16.mxu0 %v3713
    %3857 = vmatpush1.bf16.msra.mxu0 %v3712
    %3858 = vmatprep.subr.bf16.mxu0 %v3721
    %3859 = vmatpush1.bf16.msra.mxu0 %v3720
    %3860 = vmatprep.subr.bf16.mxu0 %v3729
    %3861 = vmatpush1.bf16.msra.mxu0 %v3728
    %3862 = vmatprep.subr.bf16.mxu0 %v3737
    %3863 = vmatpush1.bf16.msra.mxu0 %v3736
    %3864 = vmatprep.subr.bf16.mxu0 %v3745
    %3865 = vmatpush1.bf16.msra.mxu0 %v3744
    %3866 = vmatprep.subr.bf16.mxu0 %v3753
    %3867 = vmatpush1.bf16.msra.mxu0 %v3752
    %3868 = vmatprep.subr.bf16.mxu0 %v3761
    %3869 = vmatpush1.bf16.msra.mxu0 %v3760
    %3870 = vmatprep.subr.bf16.mxu0 %v3769
    %3871 = vmatpush1.bf16.msra.mxu0 %v3768
    %3872 = vmatprep.subr.bf16.mxu0 0
    %3873 = vmatpush1.bf16.msra.mxu0 0
    %3874 = vmatprep.subr.bf16.mxu0 0
    %3875 = vmatpush1.bf16.msra.mxu0 0
    %3876 = vmatprep.subr.bf16.mxu0 0
    %3877 = vmatpush1.bf16.msra.mxu0 0
    %3878 = vmatprep.subr.bf16.mxu0 0
    %3879 = vmatpush1.bf16.msra.mxu0 0
    %3880 = vmatprep.subr.bf16.mxu0 0
    %3881 = vmatpush1.bf16.msra.mxu0 0
    %3882 = vmatprep.subr.bf16.mxu0 0
    %3883 = vmatpush1.bf16.msra.mxu0 0
    %3884 = vmatprep.subr.bf16.mxu0 0
    %3885 = vmatpush1.bf16.msra.mxu0 0
    %3886 = vmatprep.subr.bf16.mxu0 0
    %3887 = vmatpush1.bf16.msra.mxu0 0
    %3888 = vmatprep.mubr.bf16.mxu0 0
    %3889 = vmatmul.mubr.bf16.gmra.mrb[0].mxu0 %v3772
    %v3890 = vpop.f32.mrb[0].mxu0
    %v3891 = vadd.f32 0.0, %v3890
    %v3892 = vpop.f32.mrb[0].mxu0
    %v3893 = vadd.f32 0.0, %v3892
    %v3894 = vpop.f32.mrb[0].mxu0
    %v3895 = vpop.f32.mrb[0].mxu0
    %3896 = vdwg.mxu0
    %3897 = vmatprep.subr.bf16.mxu0 %v3715
    %3898 = vmatpush1.bf16.msra.mxu0 %v3714
    %3899 = vmatprep.subr.bf16.mxu0 %v3723
    %3900 = vmatpush1.bf16.msra.mxu0 %v3722
    %3901 = vmatprep.subr.bf16.mxu0 %v3731
    %3902 = vmatpush1.bf16.msra.mxu0 %v3730
    %3903 = vmatprep.subr.bf16.mxu0 %v3739
    %3904 = vmatpush1.bf16.msra.mxu0 %v3738
    %3905 = vmatprep.subr.bf16.mxu0 %v3747
    %3906 = vmatpush1.bf16.msra.mxu0 %v3746
    %3907 = vmatprep.subr.bf16.mxu0 %v3755
    %3908 = vmatpush1.bf16.msra.mxu0 %v3754
    %3909 = vmatprep.subr.bf16.mxu0 %v3763
    %3910 = vmatpush1.bf16.msra.mxu0 %v3762
    %3911 = vmatprep.subr.bf16.mxu0 %v3771
    %3912 = vmatpush1.bf16.msra.mxu0 %v3770
    %3913 = vmatprep.subr.bf16.mxu0 0
    %3914 = vmatpush1.bf16.msra.mxu0 0
    %3915 = vmatprep.subr.bf16.mxu0 0
    %3916 = vmatpush1.bf16.msra.mxu0 0
    %3917 = vmatprep.subr.bf16.mxu0 0
    %3918 = vmatpush1.bf16.msra.mxu0 0
    %3919 = vmatprep.subr.bf16.mxu0 0
    %3920 = vmatpush1.bf16.msra.mxu0 0
    %3921 = vmatprep.subr.bf16.mxu0 0
    %3922 = vmatpush1.bf16.msra.mxu0 0
    %3923 = vmatprep.subr.bf16.mxu0 0
    %3924 = vmatpush1.bf16.msra.mxu0 0
    %3925 = vmatprep.subr.bf16.mxu0 0
    %3926 = vmatpush1.bf16.msra.mxu0 0
    %3927 = vmatprep.subr.bf16.mxu0 0
    %3928 = vmatpush1.bf16.msra.mxu0 0
    %3929 = vmatprep.mubr.bf16.mxu0 0
    %3930 = vmatmul.mubr.bf16.gmra.mrb[0].mxu0 %v3772
    %v3931 = vpop.f32.mrb[0].mxu0
    %v3932 = vadd.f32 0.0, %v3931
    %v3933 = vpop.f32.mrb[0].mxu0
    %v3934 = vadd.f32 0.0, %v3933
    %v3935 = vpop.f32.mrb[0].mxu0
    %v3936 = vpop.f32.mrb[0].mxu0
    %3937 = vdwg.mxu0
    %v3938 = vadd.f32 %v3699, %v3809
    %v3939 = vadd.f32 %v3700, %v3811
    %v3940 = vadd.f32 %v3701, %v3850
    %v3941 = vadd.f32 %v3702, %v3852
    %v3942 = vadd.f32 %v3703, %v3891
    %v3943 = vadd.f32 %v3704, %v3893
    %v3944 = vadd.f32 %v3705, %v3932
    %v3945 = vadd.f32 %v3706, %v3934
    %s3946 = scalar_lea.vmem [#allocation2], 7168
    %v3947 = vld [vmem:[%s3946] sm:$0xff]
    %v3948 = vld [vmem:[%s3946 + $0x8] sm:$0xff]
    %v3949 = vld [vmem:[%s3946 + $0x10] sm:$0xff]
    %v3950 = vld [vmem:[%s3946 + $0x18] sm:$0xff]
    %v3951 = vld [vmem:[%s3946 + $0x20] sm:$0xff]
    %v3952 = vld [vmem:[%s3946 + $0x28] sm:$0xff]
    %v3953 = vld [vmem:[%s3946 + $0x30] sm:$0xff]
    %v3954 = vld [vmem:[%s3946 + $0x38] sm:$0xff]
    %v3955 = vld [vmem:[%s3946 + $0x40] sm:$0xff]
    %v3956 = vld [vmem:[%s3946 + $0x48] sm:$0xff]
    %v3957 = vld [vmem:[%s3946 + $0x50] sm:$0xff]
    %v3958 = vld [vmem:[%s3946 + $0x58] sm:$0xff]
    %v3959 = vld [vmem:[%s3946 + $0x60] sm:$0xff]
    %v3960 = vld [vmem:[%s3946 + $0x68] sm:$0xff]
    %v3961 = vld [vmem:[%s3946 + $0x70] sm:$0xff]
    %v3962 = vld [vmem:[%s3946 + $0x78] sm:$0xff]
    %v3963 = vld [vmem:[%s3946 + $0x80] sm:$0xff]
    %v3964 = vld [vmem:[%s3946 + $0x88] sm:$0xff]
    %v3965 = vld [vmem:[%s3946 + $0x90] sm:$0xff]
    %v3966 = vld [vmem:[%s3946 + $0x98] sm:$0xff]
    %v3967 = vld [vmem:[%s3946 + $0xa0] sm:$0xff]
    %v3968 = vld [vmem:[%s3946 + $0xa8] sm:$0xff]
    %v3969 = vld [vmem:[%s3946 + $0xb0] sm:$0xff]
    %v3970 = vld [vmem:[%s3946 + $0xb8] sm:$0xff]
    %v3971 = vld [vmem:[%s3946 + $0xc0] sm:$0xff]
    %v3972 = vld [vmem:[%s3946 + $0xc8] sm:$0xff]
    %v3973 = vld [vmem:[%s3946 + $0xd0] sm:$0xff]
    %v3974 = vld [vmem:[%s3946 + $0xd8] sm:$0xff]
    %v3975 = vld [vmem:[%s3946 + $0xe0] sm:$0xff]
    %v3976 = vld [vmem:[%s3946 + $0xe8] sm:$0xff]
    %v3977 = vld [vmem:[%s3946 + $0xf0] sm:$0xff]
    %v3978 = vld [vmem:[%s3946 + $0xf8] sm:$0xff]
    %v3979 = vld [vmem:[%s3946 + $0x100] sm:$0xff]
    %v3980 = vld [vmem:[%s3946 + $0x108] sm:$0xff]
    %v3981 = vld [vmem:[%s3946 + $0x110] sm:$0xff]
    %v3982 = vld [vmem:[%s3946 + $0x118] sm:$0xff]
    %v3983 = vld [vmem:[%s3946 + $0x120] sm:$0xff]
    %v3984 = vld [vmem:[%s3946 + $0x128] sm:$0xff]
    %v3985 = vld [vmem:[%s3946 + $0x130] sm:$0xff]
    %v3986 = vld [vmem:[%s3946 + $0x138] sm:$0xff]
    %v3987 = vld [vmem:[%s3946 + $0x140] sm:$0xff]
    %v3988 = vld [vmem:[%s3946 + $0x148] sm:$0xff]
    %v3989 = vld [vmem:[%s3946 + $0x150] sm:$0xff]
    %v3990 = vld [vmem:[%s3946 + $0x158] sm:$0xff]
    %v3991 = vld [vmem:[%s3946 + $0x160] sm:$0xff]
    %v3992 = vld [vmem:[%s3946 + $0x168] sm:$0xff]
    %v3993 = vld [vmem:[%s3946 + $0x170] sm:$0xff]
    %v3994 = vld [vmem:[%s3946 + $0x178] sm:$0xff]
    %v3995 = vld [vmem:[%s3946 + $0x180] sm:$0xff]
    %v3996 = vld [vmem:[%s3946 + $0x188] sm:$0xff]
    %v3997 = vld [vmem:[%s3946 + $0x190] sm:$0xff]
    %v3998 = vld [vmem:[%s3946 + $0x198] sm:$0xff]
    %v3999 = vld [vmem:[%s3946 + $0x1a0] sm:$0xff]
    %v4000 = vld [vmem:[%s3946 + $0x1a8] sm:$0xff]
    %v4001 = vld [vmem:[%s3946 + $0x1b0] sm:$0xff]
    %v4002 = vld [vmem:[%s3946 + $0x1b8] sm:$0xff]
    %v4003 = vld [vmem:[%s3946 + $0x1c0] sm:$0xff]
    %v4004 = vld [vmem:[%s3946 + $0x1c8] sm:$0xff]
    %v4005 = vld [vmem:[%s3946 + $0x1d0] sm:$0xff]
    %v4006 = vld [vmem:[%s3946 + $0x1d8] sm:$0xff]
    %v4007 = vld [vmem:[%s3946 + $0x1e0] sm:$0xff]
    %v4008 = vld [vmem:[%s3946 + $0x1e8] sm:$0xff]
    %v4009 = vld [vmem:[%s3946 + $0x1f0] sm:$0xff]
    %v4010 = vld [vmem:[%s3946 + $0x1f8] sm:$0xff]
    %v4011 = vrot.slane %v610, 6
    %4013 = vmatprep.subr.bf16.mxu0 %v3948
    %4014 = vmatpush1.bf16.msra.mxu0 %v3947
    %4015 = vmatprep.subr.bf16.mxu0 %v3956
    %4016 = vmatpush1.bf16.msra.mxu0 %v3955
    %4017 = vmatprep.subr.bf16.mxu0 %v3964
    %4018 = vmatpush1.bf16.msra.mxu0 %v3963
    %4019 = vmatprep.subr.bf16.mxu0 %v3972
    %4020 = vmatpush1.bf16.msra.mxu0 %v3971
    %4021 = vmatprep.subr.bf16.mxu0 %v3980
    %4022 = vmatpush1.bf16.msra.mxu0 %v3979
    %4023 = vmatprep.subr.bf16.mxu0 %v3988
    %4024 = vmatpush1.bf16.msra.mxu0 %v3987
    %4025 = vmatprep.subr.bf16.mxu0 %v3996
    %4026 = vmatpush1.bf16.msra.mxu0 %v3995
    %4027 = vmatprep.subr.bf16.mxu0 %v4004
    %4028 = vmatpush1.bf16.msra.mxu0 %v4003
    %4029 = vmatprep.subr.bf16.mxu0 0
    %4030 = vmatpush1.bf16.msra.mxu0 0
    %4031 = vmatprep.subr.bf16.mxu0 0
    %4032 = vmatpush1.bf16.msra.mxu0 0
    %4033 = vmatprep.subr.bf16.mxu0 0
    %4034 = vmatpush1.bf16.msra.mxu0 0
    %4035 = vmatprep.subr.bf16.mxu0 0
    %4036 = vmatpush1.bf16.msra.mxu0 0
    %4037 = vmatprep.subr.bf16.mxu0 0
    %4038 = vmatpush1.bf16.msra.mxu0 0
    %4039 = vmatprep.subr.bf16.mxu0 0
    %4040 = vmatpush1.bf16.msra.mxu0 0
    %4041 = vmatprep.subr.bf16.mxu0 0
    %4042 = vmatpush1.bf16.msra.mxu0 0
    %4043 = vmatprep.subr.bf16.mxu0 0
    %4044 = vmatpush1.bf16.msra.mxu0 0
    %4045 = vmatprep.mubr.bf16.mxu0 0
    %4046 = vmatmul.mubr.bf16.gmra.mrb[0].mxu0 %v4011
    %v4047 = vpop.f32.mrb[0].mxu0
    %v4048 = vadd.f32 0.0, %v4047
    %v4049 = vpop.f32.mrb[0].mxu0
    %v4050 = vadd.f32 0.0, %v4049
    %v4051 = vpop.f32.mrb[0].mxu0
    %v4052 = vpop.f32.mrb[0].mxu0
    %4053 = vdwg.mxu0
    %4054 = vmatprep.subr.bf16.mxu0 %v3950
    %4055 = vmatpush1.bf16.msra.mxu0 %v3949
    %4056 = vmatprep.subr.bf16.mxu0 %v3958
    %4057 = vmatpush1.bf16.msra.mxu0 %v3957
    %4058 = vmatprep.subr.bf16.mxu0 %v3966
    %4059 = vmatpush1.bf16.msra.mxu0 %v3965
    %4060 = vmatprep.subr.bf16.mxu0 %v3974
    %4061 = vmatpush1.bf16.msra.mxu0 %v3973
    %4062 = vmatprep.subr.bf16.mxu0 %v3982
    %4063 = vmatpush1.bf16.msra.mxu0 %v3981
    %4064 = vmatprep.subr.bf16.mxu0 %v3990
    %4065 = vmatpush1.bf16.msra.mxu0 %v3989
    %4066 = vmatprep.subr.bf16.mxu0 %v3998
    %4067 = vmatpush1.bf16.msra.mxu0 %v3997
    %4068 = vmatprep.subr.bf16.mxu0 %v4006
    %4069 = vmatpush1.bf16.msra.mxu0 %v4005
    %4070 = vmatprep.subr.bf16.mxu0 0
    %4071 = vmatpush1.bf16.msra.mxu0 0
    %4072 = vmatprep.subr.bf16.mxu0 0
    %4073 = vmatpush1.bf16.msra.mxu0 0
    %4074 = vmatprep.subr.bf16.mxu0 0
    %4075 = vmatpush1.bf16.msra.mxu0 0
    %4076 = vmatprep.subr.bf16.mxu0 0
    %4077 = vmatpush1.bf16.msra.mxu0 0
    %4078 = vmatprep.subr.bf16.mxu0 0
    %4079 = vmatpush1.bf16.msra.mxu0 0
    %4080 = vmatprep.subr.bf16.mxu0 0
    %4081 = vmatpush1.bf16.msra.mxu0 0
    %4082 = vmatprep.subr.bf16.mxu0 0
    %4083 = vmatpush1.bf16.msra.mxu0 0
    %4084 = vmatprep.subr.bf16.mxu0 0
    %4085 = vmatpush1.bf16.msra.mxu0 0
    %4086 = vmatprep.mubr.bf16.mxu0 0
    %4087 = vmatmul.mubr.bf16.gmra.mrb[0].mxu0 %v4011
    %v4088 = vpop.f32.mrb[0].mxu0
    %v4089 = vadd.f32 0.0, %v4088
    %v4090 = vpop.f32.mrb[0].mxu0
    %v4091 = vadd.f32 0.0, %v4090
    %v4092 = vpop.f32.mrb[0].mxu0
    %v4093 = vpop.f32.mrb[0].mxu0
    %4094 = vdwg.mxu0
    %4095 = vmatprep.subr.bf16.mxu0 %v3952
    %4096 = vmatpush1.bf16.msra.mxu0 %v3951
    %4097 = vmatprep.subr.bf16.mxu0 %v3960
    %4098 = vmatpush1.bf16.msra.mxu0 %v3959
    %4099 = vmatprep.subr.bf16.mxu0 %v3968
    %4100 = vmatpush1.bf16.msra.mxu0 %v3967
    %4101 = vmatprep.subr.bf16.mxu0 %v3976
    %4102 = vmatpush1.bf16.msra.mxu0 %v3975
    %4103 = vmatprep.subr.bf16.mxu0 %v3984
    %4104 = vmatpush1.bf16.msra.mxu0 %v3983
    %4105 = vmatprep.subr.bf16.mxu0 %v3992
    %4106 = vmatpush1.bf16.msra.mxu0 %v3991
    %4107 = vmatprep.subr.bf16.mxu0 %v4000
    %4108 = vmatpush1.bf16.msra.mxu0 %v3999
    %4109 = vmatprep.subr.bf16.mxu0 %v4008
    %4110 = vmatpush1.bf16.msra.mxu0 %v4007
    %4111 = vmatprep.subr.bf16.mxu0 0
    %4112 = vmatpush1.bf16.msra.mxu0 0
    %4113 = vmatprep.subr.bf16.mxu0 0
    %4114 = vmatpush1.bf16.msra.mxu0 0
    %4115 = vmatprep.subr.bf16.mxu0 0
    %4116 = vmatpush1.bf16.msra.mxu0 0
    %4117 = vmatprep.subr.bf16.mxu0 0
    %4118 = vmatpush1.bf16.msra.mxu0 0
    %4119 = vmatprep.subr.bf16.mxu0 0
    %4120 = vmatpush1.bf16.msra.mxu0 0
    %4121 = vmatprep.subr.bf16.mxu0 0
    %4122 = vmatpush1.bf16.msra.mxu0 0
    %4123 = vmatprep.subr.bf16.mxu0 0
    %4124 = vmatpush1.bf16.msra.mxu0 0
    %4125 = vmatprep.subr.bf16.mxu0 0
    %4126 = vmatpush1.bf16.msra.mxu0 0
    %4127 = vmatprep.mubr.bf16.mxu0 0
    %4128 = vmatmul.mubr.bf16.gmra.mrb[0].mxu0 %v4011
    %v4129 = vpop.f32.mrb[0].mxu0
    %v4130 = vadd.f32 0.0, %v4129
    %v4131 = vpop.f32.mrb[0].mxu0
    %v4132 = vadd.f32 0.0, %v4131
    %v4133 = vpop.f32.mrb[0].mxu0
    %v4134 = vpop.f32.mrb[0].mxu0
    %4135 = vdwg.mxu0
    %4136 = vmatprep.subr.bf16.mxu0 %v3954
    %4137 = vmatpush1.bf16.msra.mxu0 %v3953
    %4138 = vmatprep.subr.bf16.mxu0 %v3962
    %4139 = vmatpush1.bf16.msra.mxu0 %v3961
    %4140 = vmatprep.subr.bf16.mxu0 %v3970
    %4141 = vmatpush1.bf16.msra.mxu0 %v3969
    %4142 = vmatprep.subr.bf16.mxu0 %v3978
    %4143 = vmatpush1.bf16.msra.mxu0 %v3977
    %4144 = vmatprep.subr.bf16.mxu0 %v3986
    %4145 = vmatpush1.bf16.msra.mxu0 %v3985
    %4146 = vmatprep.subr.bf16.mxu0 %v3994
    %4147 = vmatpush1.bf16.msra.mxu0 %v3993
    %4148 = vmatprep.subr.bf16.mxu0 %v4002
    %4149 = vmatpush1.bf16.msra.mxu0 %v4001
    %4150 = vmatprep.subr.bf16.mxu0 %v4010
    %4151 = vmatpush1.bf16.msra.mxu0 %v4009
    %4152 = vmatprep.subr.bf16.mxu0 0
    %4153 = vmatpush1.bf16.msra.mxu0 0
    %4154 = vmatprep.subr.bf16.mxu0 0
    %4155 = vmatpush1.bf16.msra.mxu0 0
    %4156 = vmatprep.subr.bf16.mxu0 0
    %4157 = vmatpush1.bf16.msra.mxu0 0
    %4158 = vmatprep.subr.bf16.mxu0 0
    %4159 = vmatpush1.bf16.msra.mxu0 0
    %4160 = vmatprep.subr.bf16.mxu0 0
    %4161 = vmatpush1.bf16.msra.mxu0 0
    %4162 = vmatprep.subr.bf16.mxu0 0
    %4163 = vmatpush1.bf16.msra.mxu0 0
    %4164 = vmatprep.subr.bf16.mxu0 0
    %4165 = vmatpush1.bf16.msra.mxu0 0
    %4166 = vmatprep.subr.bf16.mxu0 0
    %4167 = vmatpush1.bf16.msra.mxu0 0
    %4168 = vmatprep.mubr.bf16.mxu0 0
    %4169 = vmatmul.mubr.bf16.gmra.mrb[0].mxu0 %v4011
    %v4170 = vpop.f32.mrb[0].mxu0
    %v4171 = vadd.f32 0.0, %v4170
    %v4172 = vpop.f32.mrb[0].mxu0
    %v4173 = vadd.f32 0.0, %v4172
    %v4174 = vpop.f32.mrb[0].mxu0
    %v4175 = vpop.f32.mrb[0].mxu0
    %4176 = vdwg.mxu0
    %v4177 = vadd.f32 %v3938, %v4048
    %v4178 = vadd.f32 %v3939, %v4050
    %v4179 = vadd.f32 %v3940, %v4089
    %v4180 = vadd.f32 %v3941, %v4091
    %v4181 = vadd.f32 %v3942, %v4130
    %v4182 = vadd.f32 %v3943, %v4132
    %v4183 = vadd.f32 %v3944, %v4171
    %v4184 = vadd.f32 %v3945, %v4173
    %s4185 = scalar_lea.vmem [#allocation2], 7680
    %v4186 = vld [vmem:[%s4185] sm:$0xff]
    %v4187 = vld [vmem:[%s4185 + $0x8] sm:$0xff]
    %v4188 = vld [vmem:[%s4185 + $0x10] sm:$0xff]
    %v4189 = vld [vmem:[%s4185 + $0x18] sm:$0xff]
    %v4190 = vld [vmem:[%s4185 + $0x20] sm:$0xff]
    %v4191 = vld [vmem:[%s4185 + $0x28] sm:$0xff]
    %v4192 = vld [vmem:[%s4185 + $0x30] sm:$0xff]
    %v4193 = vld [vmem:[%s4185 + $0x38] sm:$0xff]
    %v4194 = vld [vmem:[%s4185 + $0x40] sm:$0xff]
    %v4195 = vld [vmem:[%s4185 + $0x48] sm:$0xff]
    %v4196 = vld [vmem:[%s4185 + $0x50] sm:$0xff]
    %v4197 = vld [vmem:[%s4185 + $0x58] sm:$0xff]
    %v4198 = vld [vmem:[%s4185 + $0x60] sm:$0xff]
    %v4199 = vld [vmem:[%s4185 + $0x68] sm:$0xff]
    %v4200 = vld [vmem:[%s4185 + $0x70] sm:$0xff]
    %v4201 = vld [vmem:[%s4185 + $0x78] sm:$0xff]
    %v4202 = vld [vmem:[%s4185 + $0x80] sm:$0xff]
    %v4203 = vld [vmem:[%s4185 + $0x88] sm:$0xff]
    %v4204 = vld [vmem:[%s4185 + $0x90] sm:$0xff]
    %v4205 = vld [vmem:[%s4185 + $0x98] sm:$0xff]
    %v4206 = vld [vmem:[%s4185 + $0xa0] sm:$0xff]
    %v4207 = vld [vmem:[%s4185 + $0xa8] sm:$0xff]
    %v4208 = vld [vmem:[%s4185 + $0xb0] sm:$0xff]
    %v4209 = vld [vmem:[%s4185 + $0xb8] sm:$0xff]
    %v4210 = vld [vmem:[%s4185 + $0xc0] sm:$0xff]
    %v4211 = vld [vmem:[%s4185 + $0xc8] sm:$0xff]
    %v4212 = vld [vmem:[%s4185 + $0xd0] sm:$0xff]
    %v4213 = vld [vmem:[%s4185 + $0xd8] sm:$0xff]
    %v4214 = vld [vmem:[%s4185 + $0xe0] sm:$0xff]
    %v4215 = vld [vmem:[%s4185 + $0xe8] sm:$0xff]
    %v4216 = vld [vmem:[%s4185 + $0xf0] sm:$0xff]
    %v4217 = vld [vmem:[%s4185 + $0xf8] sm:$0xff]
    %v4218 = vld [vmem:[%s4185 + $0x100] sm:$0xff]
    %v4219 = vld [vmem:[%s4185 + $0x108] sm:$0xff]
    %v4220 = vld [vmem:[%s4185 + $0x110] sm:$0xff]
    %v4221 = vld [vmem:[%s4185 + $0x118] sm:$0xff]
    %v4222 = vld [vmem:[%s4185 + $0x120] sm:$0xff]
    %v4223 = vld [vmem:[%s4185 + $0x128] sm:$0xff]
    %v4224 = vld [vmem:[%s4185 + $0x130] sm:$0xff]
    %v4225 = vld [vmem:[%s4185 + $0x138] sm:$0xff]
    %v4226 = vld [vmem:[%s4185 + $0x140] sm:$0xff]
    %v4227 = vld [vmem:[%s4185 + $0x148] sm:$0xff]
    %v4228 = vld [vmem:[%s4185 + $0x150] sm:$0xff]
    %v4229 = vld [vmem:[%s4185 + $0x158] sm:$0xff]
    %v4230 = vld [vmem:[%s4185 + $0x160] sm:$0xff]
    %v4231 = vld [vmem:[%s4185 + $0x168] sm:$0xff]
    %v4232 = vld [vmem:[%s4185 + $0x170] sm:$0xff]
    %v4233 = vld [vmem:[%s4185 + $0x178] sm:$0xff]
    %v4234 = vld [vmem:[%s4185 + $0x180] sm:$0xff]
    %v4235 = vld [vmem:[%s4185 + $0x188] sm:$0xff]
    %v4236 = vld [vmem:[%s4185 + $0x190] sm:$0xff]
    %v4237 = vld [vmem:[%s4185 + $0x198] sm:$0xff]
    %v4238 = vld [vmem:[%s4185 + $0x1a0] sm:$0xff]
    %v4239 = vld [vmem:[%s4185 + $0x1a8] sm:$0xff]
    %v4240 = vld [vmem:[%s4185 + $0x1b0] sm:$0xff]
    %v4241 = vld [vmem:[%s4185 + $0x1b8] sm:$0xff]
    %v4242 = vld [vmem:[%s4185 + $0x1c0] sm:$0xff]
    %v4243 = vld [vmem:[%s4185 + $0x1c8] sm:$0xff]
    %v4244 = vld [vmem:[%s4185 + $0x1d0] sm:$0xff]
    %v4245 = vld [vmem:[%s4185 + $0x1d8] sm:$0xff]
    %v4246 = vld [vmem:[%s4185 + $0x1e0] sm:$0xff]
    %v4247 = vld [vmem:[%s4185 + $0x1e8] sm:$0xff]
    %v4248 = vld [vmem:[%s4185 + $0x1f0] sm:$0xff]
    %v4249 = vld [vmem:[%s4185 + $0x1f8] sm:$0xff]
    %v4250 = vrot.slane %v610, 7
    %4252 = vmatprep.subr.bf16.mxu0 %v4187
    %4253 = vmatpush1.bf16.msra.mxu0 %v4186
    %4254 = vmatprep.subr.bf16.mxu0 %v4195
    %4255 = vmatpush1.bf16.msra.mxu0 %v4194
    %4256 = vmatprep.subr.bf16.mxu0 %v4203
    %4257 = vmatpush1.bf16.msra.mxu0 %v4202
    %4258 = vmatprep.subr.bf16.mxu0 %v4211
    %4259 = vmatpush1.bf16.msra.mxu0 %v4210
    %4260 = vmatprep.subr.bf16.mxu0 %v4219
    %4261 = vmatpush1.bf16.msra.mxu0 %v4218
    %4262 = vmatprep.subr.bf16.mxu0 %v4227
    %4263 = vmatpush1.bf16.msra.mxu0 %v4226
    %4264 = vmatprep.subr.bf16.mxu0 %v4235
    %4265 = vmatpush1.bf16.msra.mxu0 %v4234
    %4266 = vmatprep.subr.bf16.mxu0 %v4243
    %4267 = vmatpush1.bf16.msra.mxu0 %v4242
    %4268 = vmatprep.subr.bf16.mxu0 0
    %4269 = vmatpush1.bf16.msra.mxu0 0
    %4270 = vmatprep.subr.bf16.mxu0 0
    %4271 = vmatpush1.bf16.msra.mxu0 0
    %4272 = vmatprep.subr.bf16.mxu0 0
    %4273 = vmatpush1.bf16.msra.mxu0 0
    %4274 = vmatprep.subr.bf16.mxu0 0
    %4275 = vmatpush1.bf16.msra.mxu0 0
    %4276 = vmatprep.subr.bf16.mxu0 0
    %4277 = vmatpush1.bf16.msra.mxu0 0
    %4278 = vmatprep.subr.bf16.mxu0 0
    %4279 = vmatpush1.bf16.msra.mxu0 0
    %4280 = vmatprep.subr.bf16.mxu0 0
    %4281 = vmatpush1.bf16.msra.mxu0 0
    %4282 = vmatprep.subr.bf16.mxu0 0
    %4283 = vmatpush1.bf16.msra.mxu0 0
    %4284 = vmatprep.mubr.bf16.mxu0 0
    %4285 = vmatmul.mubr.bf16.gmra.mrb[0].mxu0 %v4250
    %v4286 = vpop.f32.mrb[0].mxu0
    %v4287 = vadd.f32 0.0, %v4286
    %v4288 = vpop.f32.mrb[0].mxu0
    %v4289 = vadd.f32 0.0, %v4288
    %v4290 = vpop.f32.mrb[0].mxu0
    %v4291 = vpop.f32.mrb[0].mxu0
    %4292 = vdwg.mxu0
    %4293 = vmatprep.subr.bf16.mxu0 %v4189
    %4294 = vmatpush1.bf16.msra.mxu0 %v4188
    %4295 = vmatprep.subr.bf16.mxu0 %v4197
    %4296 = vmatpush1.bf16.msra.mxu0 %v4196
    %4297 = vmatprep.subr.bf16.mxu0 %v4205
    %4298 = vmatpush1.bf16.msra.mxu0 %v4204
    %4299 = vmatprep.subr.bf16.mxu0 %v4213
    %4300 = vmatpush1.bf16.msra.mxu0 %v4212
    %4301 = vmatprep.subr.bf16.mxu0 %v4221
    %4302 = vmatpush1.bf16.msra.mxu0 %v4220
    %4303 = vmatprep.subr.bf16.mxu0 %v4229
    %4304 = vmatpush1.bf16.msra.mxu0 %v4228
    %4305 = vmatprep.subr.bf16.mxu0 %v4237
    %4306 = vmatpush1.bf16.msra.mxu0 %v4236
    %4307 = vmatprep.subr.bf16.mxu0 %v4245
    %4308 = vmatpush1.bf16.msra.mxu0 %v4244
    %4309 = vmatprep.subr.bf16.mxu0 0
    %4310 = vmatpush1.bf16.msra.mxu0 0
    %4311 = vmatprep.subr.bf16.mxu0 0
    %4312 = vmatpush1.bf16.msra.mxu0 0
    %4313 = vmatprep.subr.bf16.mxu0 0
    %4314 = vmatpush1.bf16.msra.mxu0 0
    %4315 = vmatprep.subr.bf16.mxu0 0
    %4316 = vmatpush1.bf16.msra.mxu0 0
    %4317 = vmatprep.subr.bf16.mxu0 0
    %4318 = vmatpush1.bf16.msra.mxu0 0
    %4319 = vmatprep.subr.bf16.mxu0 0
    %4320 = vmatpush1.bf16.msra.mxu0 0
    %4321 = vmatprep.subr.bf16.mxu0 0
    %4322 = vmatpush1.bf16.msra.mxu0 0
    %4323 = vmatprep.subr.bf16.mxu0 0
    %4324 = vmatpush1.bf16.msra.mxu0 0
    %4325 = vmatprep.mubr.bf16.mxu0 0
    %4326 = vmatmul.mubr.bf16.gmra.mrb[0].mxu0 %v4250
    %v4327 = vpop.f32.mrb[0].mxu0
    %v4328 = vadd.f32 0.0, %v4327
    %v4329 = vpop.f32.mrb[0].mxu0
    %v4330 = vadd.f32 0.0, %v4329
    %v4331 = vpop.f32.mrb[0].mxu0
    %v4332 = vpop.f32.mrb[0].mxu0
    %4333 = vdwg.mxu0
    %4334 = vmatprep.subr.bf16.mxu0 %v4191
    %4335 = vmatpush1.bf16.msra.mxu0 %v4190
    %4336 = vmatprep.subr.bf16.mxu0 %v4199
    %4337 = vmatpush1.bf16.msra.mxu0 %v4198
    %4338 = vmatprep.subr.bf16.mxu0 %v4207
    %4339 = vmatpush1.bf16.msra.mxu0 %v4206
    %4340 = vmatprep.subr.bf16.mxu0 %v4215
    %4341 = vmatpush1.bf16.msra.mxu0 %v4214
    %4342 = vmatprep.subr.bf16.mxu0 %v4223
    %4343 = vmatpush1.bf16.msra.mxu0 %v4222
    %4344 = vmatprep.subr.bf16.mxu0 %v4231
    %4345 = vmatpush1.bf16.msra.mxu0 %v4230
    %4346 = vmatprep.subr.bf16.mxu0 %v4239
    %4347 = vmatpush1.bf16.msra.mxu0 %v4238
    %4348 = vmatprep.subr.bf16.mxu0 %v4247
    %4349 = vmatpush1.bf16.msra.mxu0 %v4246
    %4350 = vmatprep.subr.bf16.mxu0 0
    %4351 = vmatpush1.bf16.msra.mxu0 0
    %4352 = vmatprep.subr.bf16.mxu0 0
    %4353 = vmatpush1.bf16.msra.mxu0 0
    %4354 = vmatprep.subr.bf16.mxu0 0
    %4355 = vmatpush1.bf16.msra.mxu0 0
    %4356 = vmatprep.subr.bf16.mxu0 0
    %4357 = vmatpush1.bf16.msra.mxu0 0
    %4358 = vmatprep.subr.bf16.mxu0 0
    %4359 = vmatpush1.bf16.msra.mxu0 0
    %4360 = vmatprep.subr.bf16.mxu0 0
    %4361 = vmatpush1.bf16.msra.mxu0 0
    %4362 = vmatprep.subr.bf16.mxu0 0
    %4363 = vmatpush1.bf16.msra.mxu0 0
    %4364 = vmatprep.subr.bf16.mxu0 0
    %4365 = vmatpush1.bf16.msra.mxu0 0
    %4366 = vmatprep.mubr.bf16.mxu0 0
    %4367 = vmatmul.mubr.bf16.gmra.mrb[0].mxu0 %v4250
    %v4368 = vpop.f32.mrb[0].mxu0
    %v4369 = vadd.f32 0.0, %v4368
    %v4370 = vpop.f32.mrb[0].mxu0
    %v4371 = vadd.f32 0.0, %v4370
    %v4372 = vpop.f32.mrb[0].mxu0
    %v4373 = vpop.f32.mrb[0].mxu0
    %4374 = vdwg.mxu0
    %4375 = vmatprep.subr.bf16.mxu0 %v4193
    %4376 = vmatpush1.bf16.msra.mxu0 %v4192
    %4377 = vmatprep.subr.bf16.mxu0 %v4201
    %4378 = vmatpush1.bf16.msra.mxu0 %v4200
    %4379 = vmatprep.subr.bf16.mxu0 %v4209
    %4380 = vmatpush1.bf16.msra.mxu0 %v4208
    %4381 = vmatprep.subr.bf16.mxu0 %v4217
    %4382 = vmatpush1.bf16.msra.mxu0 %v4216
    %4383 = vmatprep.subr.bf16.mxu0 %v4225
    %4384 = vmatpush1.bf16.msra.mxu0 %v4224
    %4385 = vmatprep.subr.bf16.mxu0 %v4233
    %4386 = vmatpush1.bf16.msra.mxu0 %v4232
    %4387 = vmatprep.subr.bf16.mxu0 %v4241
    %4388 = vmatpush1.bf16.msra.mxu0 %v4240
    %4389 = vmatprep.subr.bf16.mxu0 %v4249
    %4390 = vmatpush1.bf16.msra.mxu0 %v4248
    %4391 = vmatprep.subr.bf16.mxu0 0
    %4392 = vmatpush1.bf16.msra.mxu0 0
    %4393 = vmatprep.subr.bf16.mxu0 0
    %4394 = vmatpush1.bf16.msra.mxu0 0
    %4395 = vmatprep.subr.bf16.mxu0 0
    %4396 = vmatpush1.bf16.msra.mxu0 0
    %4397 = vmatprep.subr.bf16.mxu0 0
    %4398 = vmatpush1.bf16.msra.mxu0 0
    %4399 = vmatprep.subr.bf16.mxu0 0
    %4400 = vmatpush1.bf16.msra.mxu0 0
    %4401 = vmatprep.subr.bf16.mxu0 0
    %4402 = vmatpush1.bf16.msra.mxu0 0
    %4403 = vmatprep.subr.bf16.mxu0 0
    %4404 = vmatpush1.bf16.msra.mxu0 0
    %4405 = vmatprep.subr.bf16.mxu0 0
    %4406 = vmatpush1.bf16.msra.mxu0 0
    %4407 = vmatprep.mubr.bf16.mxu0 0
    %4408 = vmatmul.mubr.bf16.gmra.mrb[0].mxu0 %v4250
    %v4409 = vpop.f32.mrb[0].mxu0
    %v4410 = vadd.f32 0.0, %v4409
    %v4411 = vpop.f32.mrb[0].mxu0
    %v4412 = vadd.f32 0.0, %v4411
    %v4413 = vpop.f32.mrb[0].mxu0
    %v4414 = vpop.f32.mrb[0].mxu0
    %4415 = vdwg.mxu0
    %v4416 = vadd.f32 %v4177, %v4287
    %v4417 = vadd.f32 %v4178, %v4289
    %v4418 = vadd.f32 %v4179, %v4328
    %v4419 = vadd.f32 %v4180, %v4330
    %v4420 = vadd.f32 %v4181, %v4369
    %v4421 = vadd.f32 %v4182, %v4371
    %v4422 = vadd.f32 %v4183, %v4410
    %v4423 = vadd.f32 %v4184, %v4412
    %v4424 = vld [vmem:[#allocation11] sm:$0xff]
    %v4426 = vlaneseq
    %v4427 = vshrl.u32 %v4426, 7
    %v4428 = vsub.s32 0, %v4427
    %v4429 = vrot.slane %v4424, %v4428
    %v4430 = vlaneseq
    %v4431 = vshrl.u32 %v4430, 7
    %v4432 = vsub.s32 1, %v4431
    %v4433 = vrot.slane %v4424, %v4432
    %v4434 = vlaneseq
    %v4435 = vshrl.u32 %v4434, 7
    %v4436 = vsub.s32 2, %v4435
    %v4437 = vrot.slane %v4424, %v4436
    %v4438 = vlaneseq
    %v4439 = vshrl.u32 %v4438, 7
    %v4440 = vsub.s32 3, %v4439
    %v4441 = vrot.slane %v4424, %v4440
    %v4442 = vlaneseq
    %v4443 = vshrl.u32 %v4442, 7
    %v4444 = vsub.s32 4, %v4443
    %v4445 = vrot.slane %v4424, %v4444
    %v4446 = vlaneseq
    %v4447 = vshrl.u32 %v4446, 7
    %v4448 = vsub.s32 5, %v4447
    %v4449 = vrot.slane %v4424, %v4448
    %v4450 = vlaneseq
    %v4451 = vshrl.u32 %v4450, 7
    %v4452 = vsub.s32 6, %v4451
    %v4453 = vrot.slane %v4424, %v4452
    %v4454 = vlaneseq
    %v4455 = vshrl.u32 %v4454, 7
    %v4456 = vsub.s32 7, %v4455
    %v4457 = vrot.slane %v4424, %v4456
    %v4466 = vadd.f32 %v4416, %v4429
    %v4467 = vadd.f32 %v4417, %v4433
    %v4468 = vadd.f32 %v4418, %v4437
    %v4469 = vadd.f32 %v4419, %v4441
    %v4470 = vadd.f32 %v4420, %v4445
    %v4471 = vadd.f32 %v4421, %v4449
    %v4472 = vadd.f32 %v4422, %v4453
    %v4473 = vadd.f32 %v4423, %v4457
    %v4474 = vmax.f32 %v4466, 0.0
    %v4475 = vmax.f32 %v4467, 0.0
    %v4476 = vmax.f32 %v4468, 0.0
    %v4477 = vmax.f32 %v4469, 0.0
    %v4478 = vmax.f32 %v4470, 0.0
    %v4479 = vmax.f32 %v4471, 0.0
    %v4480 = vmax.f32 %v4472, 0.0
    %v4481 = vmax.f32 %v4473, 0.0
    %s4482 = smul.u32 4, 128
    %s4483 = smul.u32 %s4482, 1
    %s4484 = sshll.u32 %s4483, 4
    %4485 = dma.done %s233, %s4484
    %v4486 = vpack.c.bf16 %v4474, %v4474
    %v4487 = vpack.c.bf16 %v4475, %v4475
    %v4488 = vpack.c.bf16 %v4476, %v4476
    %v4489 = vpack.c.bf16 %v4477, %v4477
    %v4490 = vpack.c.bf16 %v4478, %v4478
    %v4491 = vpack.c.bf16 %v4479, %v4479
    %v4492 = vpack.c.bf16 %v4480, %v4480
    %v4493 = vpack.c.bf16 %v4481, %v4481
    %v4494 = vld [vmem:[#allocation3] sm:$0xff]
    %v4495 = vld [vmem:[#allocation3 + $0x8] sm:$0xff]
    %v4496 = vld [vmem:[#allocation3 + $0x10] sm:$0xff]
    %v4497 = vld [vmem:[#allocation3 + $0x18] sm:$0xff]
    %v4498 = vld [vmem:[#allocation3 + $0x20] sm:$0xff]
    %v4499 = vld [vmem:[#allocation3 + $0x28] sm:$0xff]
    %v4500 = vld [vmem:[#allocation3 + $0x30] sm:$0xff]
    %v4501 = vld [vmem:[#allocation3 + $0x38] sm:$0xff]
    %v4502 = vld [vmem:[#allocation3 + $0x40] sm:$0xff]
    %v4503 = vld [vmem:[#allocation3 + $0x48] sm:$0xff]
    %v4504 = vld [vmem:[#allocation3 + $0x50] sm:$0xff]
    %v4505 = vld [vmem:[#allocation3 + $0x58] sm:$0xff]
    %v4506 = vld [vmem:[#allocation3 + $0x60] sm:$0xff]
    %v4507 = vld [vmem:[#allocation3 + $0x68] sm:$0xff]
    %v4508 = vld [vmem:[#allocation3 + $0x70] sm:$0xff]
    %v4509 = vld [vmem:[#allocation3 + $0x78] sm:$0xff]
    %v4510 = vld [vmem:[#allocation3 + $0x80] sm:$0xff]
    %v4511 = vld [vmem:[#allocation3 + $0x88] sm:$0xff]
    %v4512 = vld [vmem:[#allocation3 + $0x90] sm:$0xff]
    %v4513 = vld [vmem:[#allocation3 + $0x98] sm:$0xff]
    %v4514 = vld [vmem:[#allocation3 + $0xa0] sm:$0xff]
    %v4515 = vld [vmem:[#allocation3 + $0xa8] sm:$0xff]
    %v4516 = vld [vmem:[#allocation3 + $0xb0] sm:$0xff]
    %v4517 = vld [vmem:[#allocation3 + $0xb8] sm:$0xff]
    %v4518 = vld [vmem:[#allocation3 + $0xc0] sm:$0xff]
    %v4519 = vld [vmem:[#allocation3 + $0xc8] sm:$0xff]
    %v4520 = vld [vmem:[#allocation3 + $0xd0] sm:$0xff]
    %v4521 = vld [vmem:[#allocation3 + $0xd8] sm:$0xff]
    %v4522 = vld [vmem:[#allocation3 + $0xe0] sm:$0xff]
    %v4523 = vld [vmem:[#allocation3 + $0xe8] sm:$0xff]
    %v4524 = vld [vmem:[#allocation3 + $0xf0] sm:$0xff]
    %v4525 = vld [vmem:[#allocation3 + $0xf8] sm:$0xff]
    %v4526 = vld [vmem:[#allocation3 + $0x100] sm:$0xff]
    %v4527 = vld [vmem:[#allocation3 + $0x108] sm:$0xff]
    %v4528 = vld [vmem:[#allocation3 + $0x110] sm:$0xff]
    %v4529 = vld [vmem:[#allocation3 + $0x118] sm:$0xff]
    %v4530 = vld [vmem:[#allocation3 + $0x120] sm:$0xff]
    %v4531 = vld [vmem:[#allocation3 + $0x128] sm:$0xff]
    %v4532 = vld [vmem:[#allocation3 + $0x130] sm:$0xff]
    %v4533 = vld [vmem:[#allocation3 + $0x138] sm:$0xff]
    %v4534 = vld [vmem:[#allocation3 + $0x140] sm:$0xff]
    %v4535 = vld [vmem:[#allocation3 + $0x148] sm:$0xff]
    %v4536 = vld [vmem:[#allocation3 + $0x150] sm:$0xff]
    %v4537 = vld [vmem:[#allocation3 + $0x158] sm:$0xff]
    %v4538 = vld [vmem:[#allocation3 + $0x160] sm:$0xff]
    %v4539 = vld [vmem:[#allocation3 + $0x168] sm:$0xff]
    %v4540 = vld [vmem:[#allocation3 + $0x170] sm:$0xff]
    %v4541 = vld [vmem:[#allocation3 + $0x178] sm:$0xff]
    %v4542 = vld [vmem:[#allocation3 + $0x180] sm:$0xff]
    %v4543 = vld [vmem:[#allocation3 + $0x188] sm:$0xff]
    %v4544 = vld [vmem:[#allocation3 + $0x190] sm:$0xff]
    %v4545 = vld [vmem:[#allocation3 + $0x198] sm:$0xff]
    %v4546 = vld [vmem:[#allocation3 + $0x1a0] sm:$0xff]
    %v4547 = vld [vmem:[#allocation3 + $0x1a8] sm:$0xff]
    %v4548 = vld [vmem:[#allocation3 + $0x1b0] sm:$0xff]
    %v4549 = vld [vmem:[#allocation3 + $0x1b8] sm:$0xff]
    %v4550 = vld [vmem:[#allocation3 + $0x1c0] sm:$0xff]
    %v4551 = vld [vmem:[#allocation3 + $0x1c8] sm:$0xff]
    %v4552 = vld [vmem:[#allocation3 + $0x1d0] sm:$0xff]
    %v4553 = vld [vmem:[#allocation3 + $0x1d8] sm:$0xff]
    %v4554 = vld [vmem:[#allocation3 + $0x1e0] sm:$0xff]
    %v4555 = vld [vmem:[#allocation3 + $0x1e8] sm:$0xff]
    %v4556 = vld [vmem:[#allocation3 + $0x1f0] sm:$0xff]
    %v4557 = vld [vmem:[#allocation3 + $0x1f8] sm:$0xff]
    %v4558 = vld [vmem:[#allocation13] sm:$0x1]
    %v4560 = vlaneseq
    %v4561 = vshrl.u32 %v4560, 7
    %v4562 = vsub.s32 0, %v4561
    %v4563 = vrot.slane %v4558, %v4562
    %4565 = vmatprep.subr.bf16.mxu0 0
    %4566 = vmatpush1.bf16.msra.mxu0 %v4494
    %4567 = vmatprep.subr.bf16.mxu0 0
    %4568 = vmatpush1.bf16.msra.mxu0 %v4495
    %4569 = vmatprep.subr.bf16.mxu0 0
    %4570 = vmatpush1.bf16.msra.mxu0 %v4496
    %4571 = vmatprep.subr.bf16.mxu0 0
    %4572 = vmatpush1.bf16.msra.mxu0 %v4497
    %4573 = vmatprep.subr.bf16.mxu0 0
    %4574 = vmatpush1.bf16.msra.mxu0 %v4498
    %4575 = vmatprep.subr.bf16.mxu0 0
    %4576 = vmatpush1.bf16.msra.mxu0 %v4499
    %4577 = vmatprep.subr.bf16.mxu0 0
    %4578 = vmatpush1.bf16.msra.mxu0 %v4500
    %4579 = vmatprep.subr.bf16.mxu0 0
    %4580 = vmatpush1.bf16.msra.mxu0 %v4501
    %4581 = vmatprep.subr.bf16.mxu0 0
    %4582 = vmatpush1.bf16.msra.mxu0 %v4502
    %4583 = vmatprep.subr.bf16.mxu0 0
    %4584 = vmatpush1.bf16.msra.mxu0 %v4503
    %4585 = vmatprep.subr.bf16.mxu0 0
    %4586 = vmatpush1.bf16.msra.mxu0 %v4504
    %4587 = vmatprep.subr.bf16.mxu0 0
    %4588 = vmatpush1.bf16.msra.mxu0 %v4505
    %4589 = vmatprep.subr.bf16.mxu0 0
    %4590 = vmatpush1.bf16.msra.mxu0 %v4506
    %4591 = vmatprep.subr.bf16.mxu0 0
    %4592 = vmatpush1.bf16.msra.mxu0 %v4507
    %4593 = vmatprep.subr.bf16.mxu0 0
    %4594 = vmatpush1.bf16.msra.mxu0 %v4508
    %4595 = vmatprep.subr.bf16.mxu0 0
    %4596 = vmatpush1.bf16.msra.mxu0 %v4509
    %4597 = vmatprep.mubr.bf16.mxu0 %v4487
    %4598 = vmatmul.mubr.bf16.gmra.mrb[0].mxu0 %v4486
    %v4599 = vpop.f32.mrb[0].mxu0
    %v4600 = vadd.f32 %v4563, %v4599
    %v4601 = vpop.f32.mrb[0].mxu0
    %v4602 = vpop.f32.mrb[0].mxu0
    %v4603 = vpop.f32.mrb[0].mxu0
    %4604 = vdwg.mxu0
    %4605 = vmatprep.subr.bf16.mxu0 0
    %4606 = vmatpush1.bf16.msra.mxu0 %v4510
    %4607 = vmatprep.subr.bf16.mxu0 0
    %4608 = vmatpush1.bf16.msra.mxu0 %v4511
    %4609 = vmatprep.subr.bf16.mxu0 0
    %4610 = vmatpush1.bf16.msra.mxu0 %v4512
    %4611 = vmatprep.subr.bf16.mxu0 0
    %4612 = vmatpush1.bf16.msra.mxu0 %v4513
    %4613 = vmatprep.subr.bf16.mxu0 0
    %4614 = vmatpush1.bf16.msra.mxu0 %v4514
    %4615 = vmatprep.subr.bf16.mxu0 0
    %4616 = vmatpush1.bf16.msra.mxu0 %v4515
    %4617 = vmatprep.subr.bf16.mxu0 0
    %4618 = vmatpush1.bf16.msra.mxu0 %v4516
    %4619 = vmatprep.subr.bf16.mxu0 0
    %4620 = vmatpush1.bf16.msra.mxu0 %v4517
    %4621 = vmatprep.subr.bf16.mxu0 0
    %4622 = vmatpush1.bf16.msra.mxu0 %v4518
    %4623 = vmatprep.subr.bf16.mxu0 0
    %4624 = vmatpush1.bf16.msra.mxu0 %v4519
    %4625 = vmatprep.subr.bf16.mxu0 0
    %4626 = vmatpush1.bf16.msra.mxu0 %v4520
    %4627 = vmatprep.subr.bf16.mxu0 0
    %4628 = vmatpush1.bf16.msra.mxu0 %v4521
    %4629 = vmatprep.subr.bf16.mxu0 0
    %4630 = vmatpush1.bf16.msra.mxu0 %v4522
    %4631 = vmatprep.subr.bf16.mxu0 0
    %4632 = vmatpush1.bf16.msra.mxu0 %v4523
    %4633 = vmatprep.subr.bf16.mxu0 0
    %4634 = vmatpush1.bf16.msra.mxu0 %v4524
    %4635 = vmatprep.subr.bf16.mxu0 0
    %4636 = vmatpush1.bf16.msra.mxu0 %v4525
    %4637 = vmatprep.mubr.bf16.mxu0 %v4489
    %4638 = vmatmul.mubr.bf16.gmra.mrb[0].mxu0 %v4488
    %v4639 = vpop.f32.mrb[0].mxu0
    %v4640 = vadd.f32 %v4600, %v4639
    %v4641 = vpop.f32.mrb[0].mxu0
    %v4642 = vpop.f32.mrb[0].mxu0
    %v4643 = vpop.f32.mrb[0].mxu0
    %4644 = vdwg.mxu0
    %4645 = vmatprep.subr.bf16.mxu0 0
    %4646 = vmatpush1.bf16.msra.mxu0 %v4526
    %4647 = vmatprep.subr.bf16.mxu0 0
    %4648 = vmatpush1.bf16.msra.mxu0 %v4527
    %4649 = vmatprep.subr.bf16.mxu0 0
    %4650 = vmatpush1.bf16.msra.mxu0 %v4528
    %4651 = vmatprep.subr.bf16.mxu0 0
    %4652 = vmatpush1.bf16.msra.mxu0 %v4529
    %4653 = vmatprep.subr.bf16.mxu0 0
    %4654 = vmatpush1.bf16.msra.mxu0 %v4530
    %4655 = vmatprep.subr.bf16.mxu0 0
    %4656 = vmatpush1.bf16.msra.mxu0 %v4531
    %4657 = vmatprep.subr.bf16.mxu0 0
    %4658 = vmatpush1.bf16.msra.mxu0 %v4532
    %4659 = vmatprep.subr.bf16.mxu0 0
    %4660 = vmatpush1.bf16.msra.mxu0 %v4533
    %4661 = vmatprep.subr.bf16.mxu0 0
    %4662 = vmatpush1.bf16.msra.mxu0 %v4534
    %4663 = vmatprep.subr.bf16.mxu0 0
    %4664 = vmatpush1.bf16.msra.mxu0 %v4535
    %4665 = vmatprep.subr.bf16.mxu0 0
    %4666 = vmatpush1.bf16.msra.mxu0 %v4536
    %4667 = vmatprep.subr.bf16.mxu0 0
    %4668 = vmatpush1.bf16.msra.mxu0 %v4537
    %4669 = vmatprep.subr.bf16.mxu0 0
    %4670 = vmatpush1.bf16.msra.mxu0 %v4538
    %4671 = vmatprep.subr.bf16.mxu0 0
    %4672 = vmatpush1.bf16.msra.mxu0 %v4539
    %4673 = vmatprep.subr.bf16.mxu0 0
    %4674 = vmatpush1.bf16.msra.mxu0 %v4540
    %4675 = vmatprep.subr.bf16.mxu0 0
    %4676 = vmatpush1.bf16.msra.mxu0 %v4541
    %4677 = vmatprep.mubr.bf16.mxu0 %v4491
    %4678 = vmatmul.mubr.bf16.gmra.mrb[0].mxu0 %v4490
    %v4679 = vpop.f32.mrb[0].mxu0
    %v4680 = vadd.f32 %v4640, %v4679
    %v4681 = vpop.f32.mrb[0].mxu0
    %v4682 = vpop.f32.mrb[0].mxu0
    %v4683 = vpop.f32.mrb[0].mxu0
    %4684 = vdwg.mxu0
    %4685 = vmatprep.subr.bf16.mxu0 0
    %4686 = vmatpush1.bf16.msra.mxu0 %v4542
    %4687 = vmatprep.subr.bf16.mxu0 0
    %4688 = vmatpush1.bf16.msra.mxu0 %v4543
    %4689 = vmatprep.subr.bf16.mxu0 0
    %4690 = vmatpush1.bf16.msra.mxu0 %v4544
    %4691 = vmatprep.subr.bf16.mxu0 0
    %4692 = vmatpush1.bf16.msra.mxu0 %v4545
    %4693 = vmatprep.subr.bf16.mxu0 0
    %4694 = vmatpush1.bf16.msra.mxu0 %v4546
    %4695 = vmatprep.subr.bf16.mxu0 0
    %4696 = vmatpush1.bf16.msra.mxu0 %v4547
    %4697 = vmatprep.subr.bf16.mxu0 0
    %4698 = vmatpush1.bf16.msra.mxu0 %v4548
    %4699 = vmatprep.subr.bf16.mxu0 0
    %4700 = vmatpush1.bf16.msra.mxu0 %v4549
    %4701 = vmatprep.subr.bf16.mxu0 0
    %4702 = vmatpush1.bf16.msra.mxu0 %v4550
    %4703 = vmatprep.subr.bf16.mxu0 0
    %4704 = vmatpush1.bf16.msra.mxu0 %v4551
    %4705 = vmatprep.subr.bf16.mxu0 0
    %4706 = vmatpush1.bf16.msra.mxu0 %v4552
    %4707 = vmatprep.subr.bf16.mxu0 0
    %4708 = vmatpush1.bf16.msra.mxu0 %v4553
    %4709 = vmatprep.subr.bf16.mxu0 0
    %4710 = vmatpush1.bf16.msra.mxu0 %v4554
    %4711 = vmatprep.subr.bf16.mxu0 0
    %4712 = vmatpush1.bf16.msra.mxu0 %v4555
    %4713 = vmatprep.subr.bf16.mxu0 0
    %4714 = vmatpush1.bf16.msra.mxu0 %v4556
    %4715 = vmatprep.subr.bf16.mxu0 0
    %4716 = vmatpush1.bf16.msra.mxu0 %v4557
    %4717 = vmatprep.mubr.bf16.mxu0 %v4493
    %4718 = vmatmul.mubr.bf16.gmra.mrb[0].mxu0 %v4492
    %v4719 = vpop.f32.mrb[0].mxu0
    %v4720 = vadd.f32 %v4680, %v4719
    %v4721 = vpop.f32.mrb[0].mxu0
    %v4722 = vpop.f32.mrb[0].mxu0
    %v4723 = vpop.f32.mrb[0].mxu0
    %4724 = vdwg.mxu0
    %4725 = vst [vmem:[#allocation14] sm:$0x3] %v4720
    // Predicated region
    $region50: #{_lambda_.1} parent=1 // pred_check
      _
    $region51: #{_lambda_.1} parent=1 // pred_check_branch
      %4727 = sbr.rel (0) target = $region53
    $region52: #{_lambda_.1} parent=1 // pred_region
      %s4729 = ssub.s32 32, 32
      %4730 = vsyncadd [#allocation7], %s4729
      %s4732 = sshll.u32 [#allocation14], 4
      %s4733 = int_to_ptr.vmem [resolvable:$true] %s4732
      %4735 = dma.vmem_to_hbm [thread:$0]  %s4733, 32, %s8, [#allocation7]
    $region53: #{_lambda_.1} parent=1 // pred_fallthru
      _
    // Predicated region
    $region54: #{_lambda_.1} parent=1 // pred_check
      _
    $region55: #{_lambda_.1} parent=1 // pred_check_branch
      %4737 = sbr.rel (0) target = $region57
    $region56: #{_lambda_.1} parent=1 // pred_region
      %4738 = dma.done [#allocation7], 32
    $region57: #{_lambda_.1} parent=1 // pred_fallthru
      _
    %4739 = vsyncpa [#allocation6], 1
    %4740 = vsyncpa [#allocation9], 1
    %4741 = vsyncpa [#allocation12], 1
    %4742 = vsyncpa [#allocation7], 1
  %4743 = vsyncmov [#allocation4]
  %s4744 = vpop.sfrf %4743
  %p4745 = scmp.eq.s32.totalorder %s4744, 0
  %p4746 = pneg %p4745
  %4748 = shalt.err (%p4746)
  %s4749 = scalar_lea.sflag [#allocation4], 1
  %4750 = vsyncmov %s4749
  %s4751 = vpop.sfrf %4750
  %p4752 = scmp.eq.s32.totalorder %s4751, 0
  %p4753 = pneg %p4752
  %4755 = shalt.err (%p4753)
  %s4756 = scalar_lea.sflag [#allocation4], 2
  %4757 = vsyncmov %s4756
  %s4758 = vpop.sfrf %4757
  %p4759 = scmp.eq.s32.totalorder %s4758, 0
  %p4760 = pneg %p4759
  %4762 = shalt.err (%p4760)
  %s4763 = scalar_lea.sflag [#allocation4], 3
  %4764 = vsyncmov %s4763
  %s4765 = vpop.sfrf %4764
  %p4766 = scmp.eq.s32.totalorder %s4765, 0
  %p4767 = pneg %p4766
  %4769 = shalt.err (%p4767)
  %s4770 = scalar_lea.sflag [#allocation4], 4
  %4771 = vsyncmov %s4770
  %s4772 = vpop.sfrf %4771
  %p4773 = scmp.eq.s32.totalorder %s4772, 0
  %p4774 = pneg %p4773
  %4776 = shalt.err (%p4774)

</llo_original>
